<compile_context>
chip_gen: v7x
topology: tpu7x:2x2x1
jax: 0.10.0
libtpu: 0.0.40
codegen_flags: <defaults>
</compile_context>

<pallas_src>
import functools

import jax
import jax.numpy as jnp
from jax.experimental import pallas as pl
from jax.experimental.pallas import tpu as pltpu


def _round_up(x, m):
    return (x + m - 1) // m * m


def _make_edge_mlp_kernel(n_layers, dim_hidden, has_u):
    """Kernel factory.

    Refs (in order): edge_attr, src, dest, [batch, u_proj,] w0, b0, w1, b1, ..., out
      w0 here is only the first 3*D rows of the torch first-layer weight
      (transposed); the u-segment is folded into u_proj by the wrapper.
    """
    D = dim_hidden

    def kernel(*refs):
        ea_ref, src_ref, dest_ref = refs[0], refs[1], refs[2]
        pos = 3
        if has_u:
            batch_ref, uproj_ref = refs[3], refs[4]
            pos = 5
        o_ref = refs[-1]
        wb = refs[pos:-1]

        w0_ref, b0_ref = wb[0], wb[1]

        ea = ea_ref[...].astype(jnp.float32)
        sf = src_ref[...].astype(jnp.float32)
        df = dest_ref[...].astype(jnp.float32)

        # First Linear layer, split over the concatenation segments so the
        # (E, 3D+G) concat never exists in HBM or VMEM.
        h = jnp.dot(ea, w0_ref[0:D, :], preferred_element_type=jnp.float32)
        h = h + jnp.dot(sf, w0_ref[D:2 * D, :], preferred_element_type=jnp.float32)
        h = h + jnp.dot(df, w0_ref[2 * D:3 * D, :], preferred_element_type=jnp.float32)

        if has_u:
            # Gather the pre-projected per-graph contribution (u @ W0_u) via a
            # one-hot matmul: onehot (tm, n_graphs) @ u_proj (n_graphs, D).
            bidx = batch_ref[...]                                  # (tm, 1) int32
            ng = uproj_ref.shape[0]
            iota = jax.lax.broadcasted_iota(jnp.int32, (bidx.shape[0], ng), 1)
            onehot = (iota == bidx).astype(jnp.float32)            # (tm, ng_pad)
            h = h + jnp.dot(onehot, uproj_ref[...],
                            preferred_element_type=jnp.float32)

        h = h + b0_ref[...]
        if n_layers > 1:
            h = h * jax.nn.sigmoid(h)   # SiLU

        for li in range(1, n_layers):
            w_ref, b_ref = wb[2 * li], wb[2 * li + 1]
            h = jnp.dot(h, w_ref[...], preferred_element_type=jnp.float32) + b_ref[...]
            if li != n_layers - 1:
                h = h * jax.nn.sigmoid(h)

        o_ref[...] = h.astype(o_ref.dtype)

    return kernel


@functools.partial(jax.jit, static_argnames=("tile_m",))
def edge_model_pallas(src, dest, edge_attr, u, batch, weights, biases, *, tile_m=512):
    """Fused EdgeModel forward.

    src/dest/edge_attr: (E, D) float32
    u:                  (n_graphs, G) float32 or None
    batch:              (E,) int32 (graph id per edge) or None (if u is None)
    weights:            list of (in_k, out_k) float32 arrays (torch W transposed)
    biases:             list of (1, out_k) float32 arrays
    """
    E, D = src.shape
    n_layers = len(weights)
    d_out = weights[-1].shape[1]
    has_u = u is not None

    # Row tile: largest sublane-aligned tile not exceeding the edge count.
    tm = min(tile_m, _round_up(E, 8))
    E_pad = _round_up(E, tm)

    def pad_rows(a):
        if E_pad == E:
            return a
        return jnp.pad(a, ((0, E_pad - E), (0, 0)))

    operands = [pad_rows(edge_attr), pad_rows(src), pad_rows(dest)]
    in_specs = [pl.BlockSpec((tm, D), lambda i: (i, 0)) for _ in range(3)]

    w0 = weights[0]
    if has_u:
        n_graphs, _ = u.shape
        ng_pad = _round_up(n_graphs, 8)            # sublane-align the tiny gather table
        # Fold the global-feature segment of W0 into a per-graph projection
        # (tiny XLA matmul), then gather it per edge row inside the kernel.
        u_proj = jnp.dot(u.astype(jnp.float32), w0[3 * D:, :])     # (n_graphs, D)
        u_proj = jnp.pad(u_proj, ((0, ng_pad - n_graphs), (0, 0)))
        b2d = pad_rows(batch.astype(jnp.int32).reshape(E, 1))      # padded rows -> graph 0
        operands += [b2d, u_proj]
        in_specs += [
            pl.BlockSpec((tm, 1), lambda i: (i, 0)),          # per-row graph ids
            pl.BlockSpec((ng_pad, D), lambda i: (0, 0)),      # u_proj: VMEM-resident
        ]

    # First-layer weight: only the 3*D edge-feature rows go to the kernel.
    w0_edges = w0[:3 * D, :]
    kernel_weights = [w0_edges] + list(weights[1:])

    # Weights/biases: constant index_map -> fetched once, kept resident.
    for w, b in zip(kernel_weights, biases):
        operands += [w, b]
        in_specs += [
            pl.BlockSpec(w.shape, lambda i: (0, 0)),
            pl.BlockSpec(b.shape, lambda i: (0, 0)),
        ]

    out_spec = pl.BlockSpec((tm, d_out), lambda i: (i, 0))

    out = pl.pallas_call(
        _make_edge_mlp_kernel(n_layers=n_layers, dim_hidden=D, has_u=has_u),
        out_shape=jax.ShapeDtypeStruct((E_pad, d_out), jnp.float32),
        grid_spec=pltpu.PrefetchScalarGridSpec(
            num_scalar_prefetch=0,
            grid=(E_pad // tm,),
            in_specs=in_specs,
            out_specs=out_spec,
        ),
        compiler_params=pltpu.CompilerParams(
            dimension_semantics=("parallel",),
            vmem_limit_bytes=32 * 1024 * 1024,
        ),
    )(*operands)
    return out[:E]


def edge_model_forward(src, dest, edge_attr, u, batch, weights, biases):
    """Full EdgeModel.forward (concat + gather fused into the kernel)."""
    return edge_model_pallas(src, dest, edge_attr, u, batch, weights, biases)


def init_edge_model_params(key, n_hidden, dim_hidden, dim_g):
    """Deterministic synthetic init matching the torch module's shapes."""
    layer_vec = [3 * dim_hidden + dim_g] + n_hidden * [dim_hidden] + [dim_hidden]
    weights, biases = [], []
    for k in range(len(layer_vec) - 1):
        key, kw, kb = jax.random.split(key, 3)
        fan_in, fan_out = layer_vec[k], layer_vec[k + 1]
        bound = 1.0 / (fan_in ** 0.5)
        # stored as (in, out): equivalent to torch W.T
        w = jax.random.uniform(kw, (fan_in, fan_out), jnp.float32, -bound, bound)
        b = jax.random.uniform(kb, (1, fan_out), jnp.float32, -bound, bound)
        weights.append(w)
        biases.append(b)
    return weights, biases


def _reference_forward(src, dest, edge_attr, u, batch, weights, biases):
    """Plain-JAX reference for a correctness sanity check."""
    if u is not None:
        h = jnp.concatenate([edge_attr, src, dest, u[batch]], axis=1)
    else:
        h = jnp.concatenate([edge_attr, src, dest], axis=1)
    n_layers = len(weights)
    for li, (w, b) in enumerate(zip(weights, biases)):
        h = h @ w + b
        if li != n_layers - 1:
            h = h * jax.nn.sigmoid(h)
    return h


if __name__ == "__main__":
    # Small but representative shapes (E deliberately not a multiple of the
    # row tile to exercise the padding path).
    n_hidden = 2          # number of hidden Linear layers in the MLP head
    dim_hidden = 32       # D
    dim_g = 8             # dims['g']
    n_edges = 1000        # E
    n_graphs = 3          # batch size for the global feature u

    key = jax.random.PRNGKey(0)
    key, k_src, k_dst, k_ea, k_u = jax.random.split(key, 5)

    src = jax.random.normal(k_src, (n_edges, dim_hidden), jnp.float32)
    dest = jax.random.normal(k_dst, (n_edges, dim_hidden), jnp.float32)
    edge_attr = jax.random.normal(k_ea, (n_edges, dim_hidden), jnp.float32)
    u = jax.random.normal(k_u, (n_graphs, dim_g), jnp.float32)
    # contiguous edge -> graph assignment
    batch = ((jnp.arange(n_edges) * n_graphs) // n_edges).astype(jnp.int32)

    weights, biases = init_edge_model_params(key, n_hidden, dim_hidden, dim_g)

    out = edge_model_forward(src, dest, edge_attr, u, batch, weights, biases)
    out = jax.block_until_ready(out)

    ref = _reference_forward(src, dest, edge_attr, u, batch, weights, biases)
    assert out.shape == (n_edges, dim_hidden)
    assert jnp.allclose(out, ref, atol=1e-3, rtol=1e-3), "mismatch vs reference"

    print("KERNEL_OK")
</pallas_src>

<mosaic_0001>
module attributes {stable_mosaic.version = 11 : i64} {
  func.func @kernel(%arg0: i32, %arg1: memref<512x32xf32, #tpu.memory_space<vmem>>, %arg2: memref<512x32xf32, #tpu.memory_space<vmem>>, %arg3: memref<512x32xf32, #tpu.memory_space<vmem>>, %arg4: memref<512x1xi32, #tpu.memory_space<vmem>>, %arg5: memref<8x32xf32, #tpu.memory_space<vmem>>, %arg6: memref<96x32xf32, #tpu.memory_space<vmem>>, %arg7: memref<1x32xf32, #tpu.memory_space<vmem>>, %arg8: memref<32x32xf32, #tpu.memory_space<vmem>>, %arg9: memref<1x32xf32, #tpu.memory_space<vmem>>, %arg10: memref<32x32xf32, #tpu.memory_space<vmem>>, %arg11: memref<1x32xf32, #tpu.memory_space<vmem>>, %arg12: memref<512x32xf32, #tpu.memory_space<vmem>>) attributes {dimension_semantics = [#tpu.dimension_semantics<parallel>], iteration_bounds = array<i64: 2>, scalar_prefetch = 0 : i64, scratch_operands = 0 : i64, tpu.core_type = #tpu.core_type<tc>, window_params = [{transform_indices = @transform_0, window_bounds = array<i64: 512, 32>}, {transform_indices = @transform_1, window_bounds = array<i64: 512, 32>}, {transform_indices = @transform_2, window_bounds = array<i64: 512, 32>}, {transform_indices = @transform_3, window_bounds = array<i64: 512, 1>}, {pipeline_mode = #tpu.pipeline_mode<synchronous>, transform_indices = @transform_4, window_bounds = array<i64: 8, 32>}, {pipeline_mode = #tpu.pipeline_mode<synchronous>, transform_indices = @transform_5, window_bounds = array<i64: 96, 32>}, {pipeline_mode = #tpu.pipeline_mode<synchronous>, transform_indices = @transform_6, window_bounds = array<i64: 1, 32>}, {pipeline_mode = #tpu.pipeline_mode<synchronous>, transform_indices = @transform_7, window_bounds = array<i64: 32, 32>}, {pipeline_mode = #tpu.pipeline_mode<synchronous>, transform_indices = @transform_8, window_bounds = array<i64: 1, 32>}, {pipeline_mode = #tpu.pipeline_mode<synchronous>, transform_indices = @transform_9, window_bounds = array<i64: 32, 32>}, {pipeline_mode = #tpu.pipeline_mode<synchronous>, transform_indices = @transform_10, window_bounds = array<i64: 1, 32>}, {transform_indices = @transform_11, window_bounds = array<i64: 512, 32>}]} {
    %c0 = arith.constant 0 : index
    %c0_0 = arith.constant 0 : index
    %0 = vector.load %arg1[%c0, %c0_0] : memref<512x32xf32, #tpu.memory_space<vmem>>, vector<512x32xf32>
    %c0_1 = arith.constant 0 : index
    %c0_2 = arith.constant 0 : index
    %1 = vector.load %arg2[%c0_1, %c0_2] : memref<512x32xf32, #tpu.memory_space<vmem>>, vector<512x32xf32>
    %c0_3 = arith.constant 0 : index
    %c0_4 = arith.constant 0 : index
    %2 = vector.load %arg3[%c0_3, %c0_4] : memref<512x32xf32, #tpu.memory_space<vmem>>, vector<512x32xf32>
    %c0_5 = arith.constant 0 : index
    %c0_6 = arith.constant 0 : index
    %3 = vector.load %arg6[%c0_5, %c0_6] : memref<96x32xf32, #tpu.memory_space<vmem>>, vector<32x32xf32>
    %cst = arith.constant dense<0.000000e+00> : vector<512x32xf32>
    %4 = tpu.matmul %0, %3, %cst {dimension_numbers = #tpu.dot_dimension_numbers<[1], [0], [0], [1], [0, 0, 1, 1], [], []>} : vector<512x32xf32>, vector<32x32xf32>, vector<512x32xf32> -> vector<512x32xf32>
    %c32 = arith.constant 32 : index
    %c0_7 = arith.constant 0 : index
    %5 = vector.load %arg6[%c32, %c0_7] : memref<96x32xf32, #tpu.memory_space<vmem>>, vector<32x32xf32>
    %cst_8 = arith.constant dense<0.000000e+00> : vector<512x32xf32>
    %6 = tpu.matmul %1, %5, %cst_8 {dimension_numbers = #tpu.dot_dimension_numbers<[1], [0], [0], [1], [0, 0, 1, 1], [], []>} : vector<512x32xf32>, vector<32x32xf32>, vector<512x32xf32> -> vector<512x32xf32>
    %7 = arith.addf %4, %6 : vector<512x32xf32>
    %c64 = arith.constant 64 : index
    %c0_9 = arith.constant 0 : index
    %8 = vector.load %arg6[%c64, %c0_9] : memref<96x32xf32, #tpu.memory_space<vmem>>, vector<32x32xf32>
    %cst_10 = arith.constant dense<0.000000e+00> : vector<512x32xf32>
    %9 = tpu.matmul %2, %8, %cst_10 {dimension_numbers = #tpu.dot_dimension_numbers<[1], [0], [0], [1], [0, 0, 1, 1], [], []>} : vector<512x32xf32>, vector<32x32xf32>, vector<512x32xf32> -> vector<512x32xf32>
    %10 = arith.addf %7, %9 : vector<512x32xf32>
    %c0_11 = arith.constant 0 : index
    %c0_12 = arith.constant 0 : index
    %11 = vector.load %arg4[%c0_11, %c0_12] : memref<512x1xi32, #tpu.memory_space<vmem>>, vector<512x1xi32>
    %12 = tpu.iota {dimensions = array<i32: 1>} : vector<512x8xi32>
    %13 = vector.broadcast %11 : vector<512x1xi32> to vector<512x8xi32>
    %14 = arith.cmpi eq, %12, %13 : vector<512x8xi32>
    %15 = arith.extui %14 : vector<512x8xi1> to vector<512x8xi32>
    %16 = arith.sitofp %15 : vector<512x8xi32> to vector<512x8xf32>
    %c0_13 = arith.constant 0 : index
    %c0_14 = arith.constant 0 : index
    %17 = vector.load %arg5[%c0_13, %c0_14] : memref<8x32xf32, #tpu.memory_space<vmem>>, vector<8x32xf32>
    %cst_15 = arith.constant dense<0.000000e+00> : vector<512x32xf32>
    %18 = tpu.matmul %16, %17, %cst_15 {dimension_numbers = #tpu.dot_dimension_numbers<[1], [0], [0], [1], [0, 0, 1, 1], [], []>} : vector<512x8xf32>, vector<8x32xf32>, vector<512x32xf32> -> vector<512x32xf32>
    %19 = arith.addf %10, %18 : vector<512x32xf32>
    %c0_16 = arith.constant 0 : index
    %c0_17 = arith.constant 0 : index
    %20 = vector.load %arg7[%c0_16, %c0_17] : memref<1x32xf32, #tpu.memory_space<vmem>>, vector<1x32xf32>
    %21 = vector.broadcast %20 : vector<1x32xf32> to vector<512x32xf32>
    %22 = arith.addf %19, %21 : vector<512x32xf32>
    %23 = arith.negf %22 : vector<512x32xf32>
    %24 = math.exp %23 : vector<512x32xf32>
    %cst_18 = arith.constant 1.000000e+00 : f32
    %25 = vector.broadcast %cst_18 : f32 to vector<512x32xf32>
    %26 = arith.addf %25, %24 : vector<512x32xf32>
    %27 = arith.divf %25, %26 : vector<512x32xf32>
    %28 = arith.mulf %22, %27 : vector<512x32xf32>
    %c0_19 = arith.constant 0 : index
    %c0_20 = arith.constant 0 : index
    %29 = vector.load %arg8[%c0_19, %c0_20] : memref<32x32xf32, #tpu.memory_space<vmem>>, vector<32x32xf32>
    %cst_21 = arith.constant dense<0.000000e+00> : vector<512x32xf32>
    %30 = tpu.matmul %28, %29, %cst_21 {dimension_numbers = #tpu.dot_dimension_numbers<[1], [0], [0], [1], [0, 0, 1, 1], [], []>} : vector<512x32xf32>, vector<32x32xf32>, vector<512x32xf32> -> vector<512x32xf32>
    %c0_22 = arith.constant 0 : index
    %c0_23 = arith.constant 0 : index
    %31 = vector.load %arg9[%c0_22, %c0_23] : memref<1x32xf32, #tpu.memory_space<vmem>>, vector<1x32xf32>
    %32 = vector.broadcast %31 : vector<1x32xf32> to vector<512x32xf32>
    %33 = arith.addf %30, %32 : vector<512x32xf32>
    %34 = arith.negf %33 : vector<512x32xf32>
    %35 = math.exp %34 : vector<512x32xf32>
    %cst_24 = arith.constant 1.000000e+00 : f32
    %36 = vector.broadcast %cst_24 : f32 to vector<512x32xf32>
    %37 = arith.addf %36, %35 : vector<512x32xf32>
    %38 = arith.divf %36, %37 : vector<512x32xf32>
    %39 = arith.mulf %33, %38 : vector<512x32xf32>
    %c0_25 = arith.constant 0 : index
    %c0_26 = arith.constant 0 : index
    %40 = vector.load %arg10[%c0_25, %c0_26] : memref<32x32xf32, #tpu.memory_space<vmem>>, vector<32x32xf32>
    %cst_27 = arith.constant dense<0.000000e+00> : vector<512x32xf32>
    %41 = tpu.matmul %39, %40, %cst_27 {dimension_numbers = #tpu.dot_dimension_numbers<[1], [0], [0], [1], [0, 0, 1, 1], [], []>} : vector<512x32xf32>, vector<32x32xf32>, vector<512x32xf32> -> vector<512x32xf32>
    %c0_28 = arith.constant 0 : index
    %c0_29 = arith.constant 0 : index
    %42 = vector.load %arg11[%c0_28, %c0_29] : memref<1x32xf32, #tpu.memory_space<vmem>>, vector<1x32xf32>
    %43 = vector.broadcast %42 : vector<1x32xf32> to vector<512x32xf32>
    %44 = arith.addf %41, %43 : vector<512x32xf32>
    %c0_30 = arith.constant 0 : index
    %c0_31 = arith.constant 0 : index
    %45 = vector.load %arg12[%c0_30, %c0_31] : memref<512x32xf32, #tpu.memory_space<vmem>>, vector<512x32xf32>
    tpu.vector_store %arg12[%c0_30, %c0_31], %44 {strides = array<i32>} : memref<512x32xf32, #tpu.memory_space<vmem>>, vector<512x32xf32>,
    return
  }
  func.func @transform_0(%arg0: i32) -> (i32, i32) {
    %c0_i32 = arith.constant 0 : i32
    %c0_i32_0 = arith.constant 0 : i32
    return %arg0, %c0_i32 : i32, i32
  }
  func.func @transform_1(%arg0: i32) -> (i32, i32) {
    %c0_i32 = arith.constant 0 : i32
    %c0_i32_0 = arith.constant 0 : i32
    return %arg0, %c0_i32 : i32, i32
  }
  func.func @transform_2(%arg0: i32) -> (i32, i32) {
    %c0_i32 = arith.constant 0 : i32
    %c0_i32_0 = arith.constant 0 : i32
    return %arg0, %c0_i32 : i32, i32
  }
  func.func @transform_3(%arg0: i32) -> (i32, i32) {
    %c0_i32 = arith.constant 0 : i32
    %c0_i32_0 = arith.constant 0 : i32
    return %arg0, %c0_i32 : i32, i32
  }
  func.func @transform_4(%arg0: i32) -> (i32, i32) {
    %c0_i32 = arith.constant 0 : i32
    %c0_i32_0 = arith.constant 0 : i32
    %c0_i32_1 = arith.constant 0 : i32
    return %c0_i32, %c0_i32_0 : i32, i32
  }
  func.func @transform_5(%arg0: i32) -> (i32, i32) {
    %c0_i32 = arith.constant 0 : i32
    %c0_i32_0 = arith.constant 0 : i32
    %c0_i32_1 = arith.constant 0 : i32
    return %c0_i32, %c0_i32_0 : i32, i32
  }
  func.func @transform_6(%arg0: i32) -> (i32, i32) {
    %c0_i32 = arith.constant 0 : i32
    %c0_i32_0 = arith.constant 0 : i32
    %c0_i32_1 = arith.constant 0 : i32
    return %c0_i32, %c0_i32_0 : i32, i32
  }
  func.func @transform_7(%arg0: i32) -> (i32, i32) {
    %c0_i32 = arith.constant 0 : i32
    %c0_i32_0 = arith.constant 0 : i32
    %c0_i32_1 = arith.constant 0 : i32
    return %c0_i32, %c0_i32_0 : i32, i32
  }
  func.func @transform_8(%arg0: i32) -> (i32, i32) {
    %c0_i32 = arith.constant 0 : i32
    %c0_i32_0 = arith.constant 0 : i32
    %c0_i32_1 = arith.constant 0 : i32
    return %c0_i32, %c0_i32_0 : i32, i32
  }
  func.func @transform_9(%arg0: i32) -> (i32, i32) {
    %c0_i32 = arith.constant 0 : i32
    %c0_i32_0 = arith.constant 0 : i32
    %c0_i32_1 = arith.constant 0 : i32
    return %c0_i32, %c0_i32_0 : i32, i32
  }
  func.func @transform_10(%arg0: i32) -> (i32, i32) {
    %c0_i32 = arith.constant 0 : i32
    %c0_i32_0 = arith.constant 0 : i32
    %c0_i32_1 = arith.constant 0 : i32
    return %c0_i32, %c0_i32_0 : i32, i32
  }
  func.func @transform_11(%arg0: i32) -> (i32, i32) {
    %c0_i32 = arith.constant 0 : i32
    %c0_i32_0 = arith.constant 0 : i32
    return %arg0, %c0_i32 : i32, i32
  }
}

</mosaic_0001>

<llo_original>
// kernel: edge_model_pallas.1
$region0: #{edge_model_pallas.1}
  #allocation0 [shape = 'u32[]', space=smem, size = 0x4, offset = 0x4, fixed_abs, tag = 'smem constant byte address 0x4 - core index']
  #allocation1 [shape = 'u32[144,128]{1,0:T(1,128)}', space=vmem, size = 0x12000, scoped, tag = 'internal scratch']
  %s0 = inlined_call_operand.vmem [shape: f32[1024,32], index: 0, kind: input, shape index: {}]
  %s1 = inlined_call_operand.vmem [shape: f32[1024,32], index: 1, kind: input, shape index: {}]
  %s2 = inlined_call_operand.vmem [shape: f32[1024,32], index: 2, kind: input, shape index: {}]
  %s3 = inlined_call_operand.vmem [shape: s32[1024,1], index: 3, kind: input, shape index: {}]
  %s4 = inlined_call_operand.vmem [shape: f32[8,32], index: 4, kind: input, shape index: {}]
  %s5 = inlined_call_operand.vmem [shape: f32[96,32], index: 5, kind: input, shape index: {}]
  %s6 = inlined_call_operand.vmem [shape: f32[1,32], index: 6, kind: input, shape index: {}]
  %s7 = inlined_call_operand.vmem [shape: f32[32,32], index: 7, kind: input, shape index: {}]
  %s8 = inlined_call_operand.vmem [shape: f32[1,32], index: 8, kind: input, shape index: {}]
  %s9 = inlined_call_operand.vmem [shape: f32[32,32], index: 9, kind: input, shape index: {}]
  %s10 = inlined_call_operand.vmem [shape: f32[1,32], index: 10, kind: input, shape index: {}]
  %s11 = inlined_call_operand.vmem [shape: f32[1024,32], index: 11, kind: output, shape index: {}]
  %s12 = sld [smem:[#allocation0]]
  $region77: #{edge_model_pallas.1} parent=0
    _
  %s14 = ssub.s32 1, %s12
  %s15 = scalar_select 0, %s14, %s12
  loop: start=0, step=1, limit=4
  $region2: #{edge_model_pallas.1} parent=0 // loop_pre_header
    _
  $region3: #{edge_model_pallas.1} parent=0 // loop_header
    %s17 = sphi 0, %s21
    %p18 = scmp.ge.s32.totalorder %s17, 4
    %s27 = sphi 0, %s29
    %s30 = sphi 0, %s27
    %s31 = sphi 0, %s30
    %s47 = sphi 0, %s31
    %s53 = sphi 0, %s55
    %s56 = sphi 0, %s53
    %s57 = sphi 0, %s56
    %s73 = sphi 0, %s57
    %s79 = sphi 0, %s81
    %s82 = sphi 0, %s79
    %s83 = sphi 0, %s82
    %s99 = sphi 0, %s83
    %s105 = sphi 0, %s107
    %s108 = sphi 0, %s105
    %s109 = sphi 0, %s108
    %s125 = sphi 0, %s109
    %s129 = sphi 0, %s129
    %s131 = sphi 0, %s129
    %s132 = sphi 0, %s131
    %s146 = sphi 0, %s132
    %s150 = sphi 0, %s150
    %s152 = sphi 0, %s150
    %s153 = sphi 0, %s152
    %s167 = sphi 0, %s153
    %s171 = sphi 0, %s171
    %s173 = sphi 0, %s171
    %s174 = sphi 0, %s173
    %s188 = sphi 0, %s174
    %s192 = sphi 0, %s192
    %s194 = sphi 0, %s192
    %s195 = sphi 0, %s194
    %s209 = sphi 0, %s195
    %s213 = sphi 0, %s213
    %s215 = sphi 0, %s213
    %s216 = sphi 0, %s215
    %s230 = sphi 0, %s216
    %s234 = sphi 0, %s234
    %s236 = sphi 0, %s234
    %s237 = sphi 0, %s236
    %s251 = sphi 0, %s237
    %s255 = sphi 0, %s255
    %s257 = sphi 0, %s255
    %s258 = sphi 0, %s257
    %s272 = sphi 0, %s258
    %s278 = sphi 0, %s280
    %s281 = sphi 0, %s278
    %s282 = sphi 0, %s281
    %s298 = sphi 0, %s282
  $region4: #{edge_model_pallas.1} parent=0 // loop_header_branch
    %20 = sbr.rel (%p18) target = $region8
  $region5: #{edge_model_pallas.1} parent=0 // loop_body
    %s22 = ssub.s32 %s17, 1
    %s23 = ssub.s32 %s17, 2
    %s24 = sadd.s32 %s17, 1
    %s25 = ssub.s32 %s17, %s24
    %p26 = scmp.eq.s32.totalorder %s25, 0
    %s28 = sadd.s32 %s27, 1
    %s29 = scalar_select %p26, %s27, %s28
    %p32 = pneg %p26
    %p33 = scmp.eq.s32.totalorder %s17, 1
    %p34 = por %p32, %p33
    %p35 = scmp.ne.s32.totalorder %s27, %s30
    %p36 = scmp.eq.s32.totalorder %s17, 0
    %p37 = por %p35, %p36
    %p38 = scmp.ne.s32.totalorder %s27, %s30
    %p39 = scmp.eq.s32.totalorder %s22, 1
    %p40 = por %p38, %p39
    %p41 = scmp.ne.s32.totalorder %s30, %s31
    %p42 = scmp.eq.s32.totalorder %s22, 0
    %p43 = por %p41, %p42
    %p44 = scmp.ne.s32.totalorder %s30, %s31
    %p45 = scmp.eq.s32.totalorder %s23, 1
    %p46 = por %p44, %p45
    %p48 = scmp.ne.s32.totalorder %s31, %s47
    %p49 = scmp.eq.s32.totalorder %s23, 0
    %p50 = por %p48, %p49
    %s51 = ssub.s32 %s17, %s24
    %p52 = scmp.eq.s32.totalorder %s51, 0
    %s54 = sadd.s32 %s53, 1
    %s55 = scalar_select %p52, %s53, %s54
    %p58 = pneg %p52
    %p59 = scmp.eq.s32.totalorder %s17, 1
    %p60 = por %p58, %p59
    %p61 = scmp.ne.s32.totalorder %s53, %s56
    %p62 = scmp.eq.s32.totalorder %s17, 0
    %p63 = por %p61, %p62
    %p64 = scmp.ne.s32.totalorder %s53, %s56
    %p65 = scmp.eq.s32.totalorder %s22, 1
    %p66 = por %p64, %p65
    %p67 = scmp.ne.s32.totalorder %s56, %s57
    %p68 = scmp.eq.s32.totalorder %s22, 0
    %p69 = por %p67, %p68
    %p70 = scmp.ne.s32.totalorder %s56, %s57
    %p71 = scmp.eq.s32.totalorder %s23, 1
    %p72 = por %p70, %p71
    %p74 = scmp.ne.s32.totalorder %s57, %s73
    %p75 = scmp.eq.s32.totalorder %s23, 0
    %p76 = por %p74, %p75
    %s77 = ssub.s32 %s17, %s24
    %p78 = scmp.eq.s32.totalorder %s77, 0
    %s80 = sadd.s32 %s79, 1
    %s81 = scalar_select %p78, %s79, %s80
    %p84 = pneg %p78
    %p85 = scmp.eq.s32.totalorder %s17, 1
    %p86 = por %p84, %p85
    %p87 = scmp.ne.s32.totalorder %s79, %s82
    %p88 = scmp.eq.s32.totalorder %s17, 0
    %p89 = por %p87, %p88
    %p90 = scmp.ne.s32.totalorder %s79, %s82
    %p91 = scmp.eq.s32.totalorder %s22, 1
    %p92 = por %p90, %p91
    %p93 = scmp.ne.s32.totalorder %s82, %s83
    %p94 = scmp.eq.s32.totalorder %s22, 0
    %p95 = por %p93, %p94
    %p96 = scmp.ne.s32.totalorder %s82, %s83
    %p97 = scmp.eq.s32.totalorder %s23, 1
    %p98 = por %p96, %p97
    %p100 = scmp.ne.s32.totalorder %s83, %s99
    %p101 = scmp.eq.s32.totalorder %s23, 0
    %p102 = por %p100, %p101
    %s103 = ssub.s32 %s17, %s24
    %p104 = scmp.eq.s32.totalorder %s103, 0
    %s106 = sadd.s32 %s105, 1
    %s107 = scalar_select %p104, %s105, %s106
    %p110 = pneg %p104
    %p111 = scmp.eq.s32.totalorder %s17, 1
    %p112 = por %p110, %p111
    %p113 = scmp.ne.s32.totalorder %s105, %s108
    %p114 = scmp.eq.s32.totalorder %s17, 0
    %p115 = por %p113, %p114
    %p116 = scmp.ne.s32.totalorder %s105, %s108
    %p117 = scmp.eq.s32.totalorder %s22, 1
    %p118 = por %p116, %p117
    %p119 = scmp.ne.s32.totalorder %s108, %s109
    %p120 = scmp.eq.s32.totalorder %s22, 0
    %p121 = por %p119, %p120
    %p122 = scmp.ne.s32.totalorder %s108, %s109
    %p123 = scmp.eq.s32.totalorder %s23, 1
    %p124 = por %p122, %p123
    %p126 = scmp.ne.s32.totalorder %s109, %s125
    %p127 = scmp.eq.s32.totalorder %s23, 0
    %p128 = por %p126, %p127
    %s130 = sadd.s32 %s129, 1
    %p133 = scmp.eq.s32.totalorder %s17, 1
    %p134 = scmp.ne.s32.totalorder %s129, %s131
    %p135 = scmp.eq.s32.totalorder %s17, 0
    %p136 = por %p134, %p135
    %p137 = scmp.ne.s32.totalorder %s129, %s131
    %p138 = scmp.eq.s32.totalorder %s22, 1
    %p139 = por %p137, %p138
    %p140 = scmp.ne.s32.totalorder %s131, %s132
    %p141 = scmp.eq.s32.totalorder %s22, 0
    %p142 = por %p140, %p141
    %p143 = scmp.ne.s32.totalorder %s131, %s132
    %p144 = scmp.eq.s32.totalorder %s23, 1
    %p145 = por %p143, %p144
    %p147 = scmp.ne.s32.totalorder %s132, %s146
    %p148 = scmp.eq.s32.totalorder %s23, 0
    %p149 = por %p147, %p148
    %s151 = sadd.s32 %s150, 1
    %p154 = scmp.eq.s32.totalorder %s17, 1
    %p155 = scmp.ne.s32.totalorder %s150, %s152
    %p156 = scmp.eq.s32.totalorder %s17, 0
    %p157 = por %p155, %p156
    %p158 = scmp.ne.s32.totalorder %s150, %s152
    %p159 = scmp.eq.s32.totalorder %s22, 1
    %p160 = por %p158, %p159
    %p161 = scmp.ne.s32.totalorder %s152, %s153
    %p162 = scmp.eq.s32.totalorder %s22, 0
    %p163 = por %p161, %p162
    %p164 = scmp.ne.s32.totalorder %s152, %s153
    %p165 = scmp.eq.s32.totalorder %s23, 1
    %p166 = por %p164, %p165
    %p168 = scmp.ne.s32.totalorder %s153, %s167
    %p169 = scmp.eq.s32.totalorder %s23, 0
    %p170 = por %p168, %p169
    %s172 = sadd.s32 %s171, 1
    %p175 = scmp.eq.s32.totalorder %s17, 1
    %p176 = scmp.ne.s32.totalorder %s171, %s173
    %p177 = scmp.eq.s32.totalorder %s17, 0
    %p178 = por %p176, %p177
    %p179 = scmp.ne.s32.totalorder %s171, %s173
    %p180 = scmp.eq.s32.totalorder %s22, 1
    %p181 = por %p179, %p180
    %p182 = scmp.ne.s32.totalorder %s173, %s174
    %p183 = scmp.eq.s32.totalorder %s22, 0
    %p184 = por %p182, %p183
    %p185 = scmp.ne.s32.totalorder %s173, %s174
    %p186 = scmp.eq.s32.totalorder %s23, 1
    %p187 = por %p185, %p186
    %p189 = scmp.ne.s32.totalorder %s174, %s188
    %p190 = scmp.eq.s32.totalorder %s23, 0
    %p191 = por %p189, %p190
    %s193 = sadd.s32 %s192, 1
    %p196 = scmp.eq.s32.totalorder %s17, 1
    %p197 = scmp.ne.s32.totalorder %s192, %s194
    %p198 = scmp.eq.s32.totalorder %s17, 0
    %p199 = por %p197, %p198
    %p200 = scmp.ne.s32.totalorder %s192, %s194
    %p201 = scmp.eq.s32.totalorder %s22, 1
    %p202 = por %p200, %p201
    %p203 = scmp.ne.s32.totalorder %s194, %s195
    %p204 = scmp.eq.s32.totalorder %s22, 0
    %p205 = por %p203, %p204
    %p206 = scmp.ne.s32.totalorder %s194, %s195
    %p207 = scmp.eq.s32.totalorder %s23, 1
    %p208 = por %p206, %p207
    %p210 = scmp.ne.s32.totalorder %s195, %s209
    %p211 = scmp.eq.s32.totalorder %s23, 0
    %p212 = por %p210, %p211
    %s214 = sadd.s32 %s213, 1
    %p217 = scmp.eq.s32.totalorder %s17, 1
    %p218 = scmp.ne.s32.totalorder %s213, %s215
    %p219 = scmp.eq.s32.totalorder %s17, 0
    %p220 = por %p218, %p219
    %p221 = scmp.ne.s32.totalorder %s213, %s215
    %p222 = scmp.eq.s32.totalorder %s22, 1
    %p223 = por %p221, %p222
    %p224 = scmp.ne.s32.totalorder %s215, %s216
    %p225 = scmp.eq.s32.totalorder %s22, 0
    %p226 = por %p224, %p225
    %p227 = scmp.ne.s32.totalorder %s215, %s216
    %p228 = scmp.eq.s32.totalorder %s23, 1
    %p229 = por %p227, %p228
    %p231 = scmp.ne.s32.totalorder %s216, %s230
    %p232 = scmp.eq.s32.totalorder %s23, 0
    %p233 = por %p231, %p232
    %s235 = sadd.s32 %s234, 1
    %p238 = scmp.eq.s32.totalorder %s17, 1
    %p239 = scmp.ne.s32.totalorder %s234, %s236
    %p240 = scmp.eq.s32.totalorder %s17, 0
    %p241 = por %p239, %p240
    %p242 = scmp.ne.s32.totalorder %s234, %s236
    %p243 = scmp.eq.s32.totalorder %s22, 1
    %p244 = por %p242, %p243
    %p245 = scmp.ne.s32.totalorder %s236, %s237
    %p246 = scmp.eq.s32.totalorder %s22, 0
    %p247 = por %p245, %p246
    %p248 = scmp.ne.s32.totalorder %s236, %s237
    %p249 = scmp.eq.s32.totalorder %s23, 1
    %p250 = por %p248, %p249
    %p252 = scmp.ne.s32.totalorder %s237, %s251
    %p253 = scmp.eq.s32.totalorder %s23, 0
    %p254 = por %p252, %p253
    %s256 = sadd.s32 %s255, 1
    %p259 = scmp.eq.s32.totalorder %s17, 1
    %p260 = scmp.ne.s32.totalorder %s255, %s257
    %p261 = scmp.eq.s32.totalorder %s17, 0
    %p262 = por %p260, %p261
    %p263 = scmp.ne.s32.totalorder %s255, %s257
    %p264 = scmp.eq.s32.totalorder %s22, 1
    %p265 = por %p263, %p264
    %p266 = scmp.ne.s32.totalorder %s257, %s258
    %p267 = scmp.eq.s32.totalorder %s22, 0
    %p268 = por %p266, %p267
    %p269 = scmp.ne.s32.totalorder %s257, %s258
    %p270 = scmp.eq.s32.totalorder %s23, 1
    %p271 = por %p269, %p270
    %p273 = scmp.ne.s32.totalorder %s258, %s272
    %p274 = scmp.eq.s32.totalorder %s23, 0
    %p275 = por %p273, %p274
    %s276 = ssub.s32 %s17, %s24
    %p277 = scmp.eq.s32.totalorder %s276, 0
    %s279 = sadd.s32 %s278, 1
    %s280 = scalar_select %p277, %s278, %s279
    %p283 = pneg %p277
    %p284 = scmp.eq.s32.totalorder %s17, 1
    %p285 = por %p283, %p284
    %p286 = scmp.ne.s32.totalorder %s278, %s281
    %p287 = scmp.eq.s32.totalorder %s17, 0
    %p288 = por %p286, %p287
    %p289 = scmp.ne.s32.totalorder %s278, %s281
    %p290 = scmp.eq.s32.totalorder %s22, 1
    %p291 = por %p289, %p290
    %p292 = scmp.ne.s32.totalorder %s281, %s282
    %p293 = scmp.eq.s32.totalorder %s22, 0
    %p294 = por %p292, %p293
    %p295 = scmp.ne.s32.totalorder %s281, %s282
    %p296 = scmp.eq.s32.totalorder %s23, 1
    %p297 = por %p295, %p296
    %p299 = scmp.ne.s32.totalorder %s282, %s298
    %p300 = scmp.eq.s32.totalorder %s23, 0
    %p301 = por %p299, %p300
    %p302 = scmp.le.s32.totalorder 1, %s17
    %p303 = scmp.lt.s32.totalorder %s17, 3
    %p304 = pnand %p302, %p303
    %p305 = pneg %p304
    // Predicated region
    $region9: #{edge_model_pallas.1} parent=5 // pred_check
      _
    $region10: #{edge_model_pallas.1} parent=5 // pred_check_branch
      %307 = sbr.rel (%p304) target = $region12
    $region11: #{edge_model_pallas.1} parent=5 // pred_region
      %s308 = ssub.s32 %s17, 1
      // Predicated region
      $region13: #{edge_model_pallas.1} parent=11 // pred_check
        %p309 = pneg %p142
      $region14: #{edge_model_pallas.1} parent=11 // pred_check_branch
        %311 = sbr.rel (%p309) target = $region16
      $region15: #{edge_model_pallas.1} parent=11 // pred_region
        _
      $region16: #{edge_model_pallas.1} parent=11 // pred_fallthru
        _
      // Predicated region
      $region17: #{edge_model_pallas.1} parent=11 // pred_check
        %p312 = pneg %p163
      $region18: #{edge_model_pallas.1} parent=11 // pred_check_branch
        %314 = sbr.rel (%p312) target = $region20
      $region19: #{edge_model_pallas.1} parent=11 // pred_region
        _
      $region20: #{edge_model_pallas.1} parent=11 // pred_fallthru
        _
      // Predicated region
      $region21: #{edge_model_pallas.1} parent=11 // pred_check
        %p315 = pneg %p184
      $region22: #{edge_model_pallas.1} parent=11 // pred_check_branch
        %317 = sbr.rel (%p315) target = $region24
      $region23: #{edge_model_pallas.1} parent=11 // pred_region
        _
      $region24: #{edge_model_pallas.1} parent=11 // pred_fallthru
        _
      // Predicated region
      $region25: #{edge_model_pallas.1} parent=11 // pred_check
        %p318 = pneg %p205
      $region26: #{edge_model_pallas.1} parent=11 // pred_check_branch
        %320 = sbr.rel (%p318) target = $region28
      $region27: #{edge_model_pallas.1} parent=11 // pred_region
        _
      $region28: #{edge_model_pallas.1} parent=11 // pred_fallthru
        _
      // Predicated region
      $region29: #{edge_model_pallas.1} parent=11 // pred_check
        %p321 = pneg %p226
      $region30: #{edge_model_pallas.1} parent=11 // pred_check_branch
        %323 = sbr.rel (%p321) target = $region32
      $region31: #{edge_model_pallas.1} parent=11 // pred_region
        _
      $region32: #{edge_model_pallas.1} parent=11 // pred_fallthru
        _
      // Predicated region
      $region33: #{edge_model_pallas.1} parent=11 // pred_check
        %p324 = pneg %p247
      $region34: #{edge_model_pallas.1} parent=11 // pred_check_branch
        %326 = sbr.rel (%p324) target = $region36
      $region35: #{edge_model_pallas.1} parent=11 // pred_region
        _
      $region36: #{edge_model_pallas.1} parent=11 // pred_fallthru
        _
      // Predicated region
      $region37: #{edge_model_pallas.1} parent=11 // pred_check
        %p327 = pneg %p268
      $region38: #{edge_model_pallas.1} parent=11 // pred_check_branch
        %329 = sbr.rel (%p327) target = $region40
      $region39: #{edge_model_pallas.1} parent=11 // pred_region
        _
      $region40: #{edge_model_pallas.1} parent=11 // pred_fallthru
        _
    $region12: #{edge_model_pallas.1} parent=5 // pred_fallthru
      _
    %p330 = scmp.lt.s32.totalorder %s17, 2
    // Predicated region
    $region41: #{edge_model_pallas.1} parent=5 // pred_check
      %p331 = pneg %p330
    $region42: #{edge_model_pallas.1} parent=5 // pred_check_branch
      %333 = sbr.rel (%p331) target = $region44
    $region43: #{edge_model_pallas.1} parent=5 // pred_region
      // Predicated region
      $region45: #{edge_model_pallas.1} parent=43 // pred_check
        %p334 = pneg %p37
      $region46: #{edge_model_pallas.1} parent=43 // pred_check_branch
        %336 = sbr.rel (%p334) target = $region48
      $region47: #{edge_model_pallas.1} parent=43 // pred_region
        %s337 = smul.u32 64, %s17
        %p338 = scmp.lt.s32.totalorder %s337, 127
        %s339 = scalar_select %p338, %s337, 127
        %s340 = smul.addr %s339, 8
        %s341 = scalar_lea.vmem %s0, %s340
        %s342 = smul.u32 64, %s17
      $region48: #{edge_model_pallas.1} parent=43 // pred_fallthru
        _
      // Predicated region
      $region49: #{edge_model_pallas.1} parent=43 // pred_check
        %p343 = pneg %p63
      $region50: #{edge_model_pallas.1} parent=43 // pred_check_branch
        %345 = sbr.rel (%p343) target = $region52
      $region51: #{edge_model_pallas.1} parent=43 // pred_region
        %s346 = smul.u32 64, %s17
        %p347 = scmp.lt.s32.totalorder %s346, 127
        %s348 = scalar_select %p347, %s346, 127
        %s349 = smul.addr %s348, 8
        %s350 = scalar_lea.vmem %s1, %s349
        %s351 = smul.u32 64, %s17
      $region52: #{edge_model_pallas.1} parent=43 // pred_fallthru
        _
      // Predicated region
      $region53: #{edge_model_pallas.1} parent=43 // pred_check
        %p352 = pneg %p89
      $region54: #{edge_model_pallas.1} parent=43 // pred_check_branch
        %354 = sbr.rel (%p352) target = $region56
      $region55: #{edge_model_pallas.1} parent=43 // pred_region
        %s355 = smul.u32 64, %s17
        %p356 = scmp.lt.s32.totalorder %s355, 127
        %s357 = scalar_select %p356, %s355, 127
        %s358 = smul.addr %s357, 8
        %s359 = scalar_lea.vmem %s2, %s358
        %s360 = smul.u32 64, %s17
      $region56: #{edge_model_pallas.1} parent=43 // pred_fallthru
        _
      // Predicated region
      $region57: #{edge_model_pallas.1} parent=43 // pred_check
        %p361 = pneg %p115
      $region58: #{edge_model_pallas.1} parent=43 // pred_check_branch
        %363 = sbr.rel (%p361) target = $region60
      $region59: #{edge_model_pallas.1} parent=43 // pred_region
        %s364 = smul.u32 64, %s17
        %p365 = scmp.lt.s32.totalorder %s364, 127
        %s366 = scalar_select %p365, %s364, 127
        %s367 = smul.addr %s366, 8
        %s368 = scalar_lea.vmem %s3, %s367
        %s369 = smul.u32 64, %s17
      $region60: #{edge_model_pallas.1} parent=43 // pred_fallthru
        _
    $region44: #{edge_model_pallas.1} parent=5 // pred_fallthru
      _
    %p370 = scmp.le.s32.totalorder 1, %s17
    %p371 = scmp.lt.s32.totalorder %s17, 3
    %p372 = pnand %p370, %p371
    %p373 = pneg %p372
    // Predicated region
    $region61: #{edge_model_pallas.1} parent=5 // pred_check
      _
    $region62: #{edge_model_pallas.1} parent=5 // pred_check_branch
      %375 = sbr.rel (%p372) target = $region64
    $region63: #{edge_model_pallas.1} parent=5 // pred_region
      %s376 = ssub.s32 %s17, 1
      %s377 = smul.u32 64, %s22
      %p378 = scmp.lt.s32.totalorder %s377, 127
      %s379 = scalar_select %p378, %s377, 127
      %s380 = smul.addr %s379, 8
      %s381 = scalar_lea.vmem %s0, %s380
      %p382 = pneg %p43
      %p383 = pneg %p40
      %s384 = smul.u32 64, %s22
      %p385 = scmp.lt.s32.totalorder %s384, 127
      %s386 = scalar_select %p385, %s384, 127
      %s387 = smul.addr %s386, 8
      %s388 = scalar_lea.vmem %s1, %s387
      %p389 = pneg %p69
      %p390 = pneg %p66
      %s391 = smul.u32 64, %s22
      %p392 = scmp.lt.s32.totalorder %s391, 127
      %s393 = scalar_select %p392, %s391, 127
      %s394 = smul.addr %s393, 8
      %s395 = scalar_lea.vmem %s2, %s394
      %p396 = pneg %p95
      %p397 = pneg %p92
      %s398 = smul.u32 64, %s22
      %p399 = scmp.lt.s32.totalorder %s398, 127
      %s400 = scalar_select %p399, %s398, 127
      %s401 = smul.addr %s400, 8
      %s402 = scalar_lea.vmem %s3, %s401
      %p403 = pneg %p121
      %p404 = pneg %p118
      %p405 = pneg %p142
      %p406 = pneg %p139
      %p407 = pneg %p163
      %p408 = pneg %p160
      %p409 = pneg %p184
      %p410 = pneg %p181
      %p411 = pneg %p205
      %p412 = pneg %p202
      %p413 = pneg %p226
      %p414 = pneg %p223
      %p415 = pneg %p247
      %p416 = pneg %p244
      %p417 = pneg %p268
      %p418 = pneg %p265
      %p419 = pneg %p294
      %p420 = pneg %p291
      %s421 = smul.u32 64, %s22
      %p422 = scmp.lt.s32.totalorder %s421, 127
      %s423 = scalar_select %p422, %s421, 127
      %s424 = smul.addr %s423, 8
      %s425 = scalar_lea.vmem %s11, %s424
      %s426 = smul.u32 64, %s22
      %p427 = scmp.lt.s32.totalorder %s426, 127
      %s428 = scalar_select %p427, %s426, 127
      %s429 = smul.addr %s428, 8
      %s430 = scalar_lea.vmem %s0, %s429
      %s431 = smul.u32 64, %s22
      %s432 = smul.u32 64, %s22
      %p433 = scmp.lt.s32.totalorder %s432, 127
      %s434 = scalar_select %p433, %s432, 127
      %s435 = smul.addr %s434, 8
      %s436 = scalar_lea.vmem %s1, %s435
      %s437 = smul.u32 64, %s22
      %s438 = smul.u32 64, %s22
      %p439 = scmp.lt.s32.totalorder %s438, 127
      %s440 = scalar_select %p439, %s438, 127
      %s441 = smul.addr %s440, 8
      %s442 = scalar_lea.vmem %s2, %s441
      %s443 = smul.u32 64, %s22
      %s444 = smul.u32 64, %s22
      %p445 = scmp.lt.s32.totalorder %s444, 127
      %s446 = scalar_select %p445, %s444, 127
      %s447 = smul.addr %s446, 8
      %s448 = scalar_lea.vmem %s3, %s447
      %s449 = smul.u32 64, %s22
      %s450 = smul.u32 64, %s22
      %p451 = scmp.lt.s32.totalorder %s450, 127
      %s452 = scalar_select %p451, %s450, 127
      %s453 = smul.addr %s452, 8
      %s454 = scalar_lea.vmem %s11, %s453
      %s455 = smul.u32 64, %s22
      %v456 = vld [vmem:[%s430] sm:$0xff]
      %v457 = vld [vmem:[%s430 + $0x8] sm:$0xff]
      %v458 = vld [vmem:[%s430 + $0x10] sm:$0xff]
      %v459 = vld [vmem:[%s430 + $0x18] sm:$0xff]
      %v460 = vld [vmem:[%s430 + $0x20] sm:$0xff]
      %v461 = vld [vmem:[%s430 + $0x28] sm:$0xff]
      %v462 = vld [vmem:[%s430 + $0x30] sm:$0xff]
      %v463 = vld [vmem:[%s430 + $0x38] sm:$0xff]
      %v464 = vld [vmem:[%s430 + $0x40] sm:$0xff]
      %v465 = vld [vmem:[%s430 + $0x48] sm:$0xff]
      %v466 = vld [vmem:[%s430 + $0x50] sm:$0xff]
      %v467 = vld [vmem:[%s430 + $0x58] sm:$0xff]
      %v468 = vld [vmem:[%s430 + $0x60] sm:$0xff]
      %v469 = vld [vmem:[%s430 + $0x68] sm:$0xff]
      %v470 = vld [vmem:[%s430 + $0x70] sm:$0xff]
      %v471 = vld [vmem:[%s430 + $0x78] sm:$0xff]
      %v472 = vld [vmem:[%s430 + $0x80] sm:$0xff]
      %v473 = vld [vmem:[%s430 + $0x88] sm:$0xff]
      %v474 = vld [vmem:[%s430 + $0x90] sm:$0xff]
      %v475 = vld [vmem:[%s430 + $0x98] sm:$0xff]
      %v476 = vld [vmem:[%s430 + $0xa0] sm:$0xff]
      %v477 = vld [vmem:[%s430 + $0xa8] sm:$0xff]
      %v478 = vld [vmem:[%s430 + $0xb0] sm:$0xff]
      %v479 = vld [vmem:[%s430 + $0xb8] sm:$0xff]
      %v480 = vld [vmem:[%s430 + $0xc0] sm:$0xff]
      %v481 = vld [vmem:[%s430 + $0xc8] sm:$0xff]
      %v482 = vld [vmem:[%s430 + $0xd0] sm:$0xff]
      %v483 = vld [vmem:[%s430 + $0xd8] sm:$0xff]
      %v484 = vld [vmem:[%s430 + $0xe0] sm:$0xff]
      %v485 = vld [vmem:[%s430 + $0xe8] sm:$0xff]
      %v486 = vld [vmem:[%s430 + $0xf0] sm:$0xff]
      %v487 = vld [vmem:[%s430 + $0xf8] sm:$0xff]
      %v488 = vld [vmem:[%s430 + $0x100] sm:$0xff]
      %v489 = vld [vmem:[%s430 + $0x108] sm:$0xff]
      %v490 = vld [vmem:[%s430 + $0x110] sm:$0xff]
      %v491 = vld [vmem:[%s430 + $0x118] sm:$0xff]
      %v492 = vld [vmem:[%s430 + $0x120] sm:$0xff]
      %v493 = vld [vmem:[%s430 + $0x128] sm:$0xff]
      %v494 = vld [vmem:[%s430 + $0x130] sm:$0xff]
      %v495 = vld [vmem:[%s430 + $0x138] sm:$0xff]
      %v496 = vld [vmem:[%s430 + $0x140] sm:$0xff]
      %v497 = vld [vmem:[%s430 + $0x148] sm:$0xff]
      %v498 = vld [vmem:[%s430 + $0x150] sm:$0xff]
      %v499 = vld [vmem:[%s430 + $0x158] sm:$0xff]
      %v500 = vld [vmem:[%s430 + $0x160] sm:$0xff]
      %v501 = vld [vmem:[%s430 + $0x168] sm:$0xff]
      %v502 = vld [vmem:[%s430 + $0x170] sm:$0xff]
      %v503 = vld [vmem:[%s430 + $0x178] sm:$0xff]
      %v504 = vld [vmem:[%s430 + $0x180] sm:$0xff]
      %v505 = vld [vmem:[%s430 + $0x188] sm:$0xff]
      %v506 = vld [vmem:[%s430 + $0x190] sm:$0xff]
      %v507 = vld [vmem:[%s430 + $0x198] sm:$0xff]
      %v508 = vld [vmem:[%s430 + $0x1a0] sm:$0xff]
      %v509 = vld [vmem:[%s430 + $0x1a8] sm:$0xff]
      %v510 = vld [vmem:[%s430 + $0x1b0] sm:$0xff]
      %v511 = vld [vmem:[%s430 + $0x1b8] sm:$0xff]
      %v512 = vld [vmem:[%s430 + $0x1c0] sm:$0xff]
      %v513 = vld [vmem:[%s430 + $0x1c8] sm:$0xff]
      %v514 = vld [vmem:[%s430 + $0x1d0] sm:$0xff]
      %v515 = vld [vmem:[%s430 + $0x1d8] sm:$0xff]
      %v516 = vld [vmem:[%s430 + $0x1e0] sm:$0xff]
      %v517 = vld [vmem:[%s430 + $0x1e8] sm:$0xff]
      %v518 = vld [vmem:[%s430 + $0x1f0] sm:$0xff]
      %v519 = vld [vmem:[%s430 + $0x1f8] sm:$0xff]
      %v520 = vld [vmem:[%s436] sm:$0xff]
      %v521 = vld [vmem:[%s436 + $0x8] sm:$0xff]
      %v522 = vld [vmem:[%s436 + $0x10] sm:$0xff]
      %v523 = vld [vmem:[%s436 + $0x18] sm:$0xff]
      %v524 = vld [vmem:[%s436 + $0x20] sm:$0xff]
      %v525 = vld [vmem:[%s436 + $0x28] sm:$0xff]
      %v526 = vld [vmem:[%s436 + $0x30] sm:$0xff]
      %v527 = vld [vmem:[%s436 + $0x38] sm:$0xff]
      %v528 = vld [vmem:[%s436 + $0x40] sm:$0xff]
      %v529 = vld [vmem:[%s436 + $0x48] sm:$0xff]
      %v530 = vld [vmem:[%s436 + $0x50] sm:$0xff]
      %v531 = vld [vmem:[%s436 + $0x58] sm:$0xff]
      %v532 = vld [vmem:[%s436 + $0x60] sm:$0xff]
      %v533 = vld [vmem:[%s436 + $0x68] sm:$0xff]
      %v534 = vld [vmem:[%s436 + $0x70] sm:$0xff]
      %v535 = vld [vmem:[%s436 + $0x78] sm:$0xff]
      %v536 = vld [vmem:[%s436 + $0x80] sm:$0xff]
      %v537 = vld [vmem:[%s436 + $0x88] sm:$0xff]
      %v538 = vld [vmem:[%s436 + $0x90] sm:$0xff]
      %v539 = vld [vmem:[%s436 + $0x98] sm:$0xff]
      %v540 = vld [vmem:[%s436 + $0xa0] sm:$0xff]
      %v541 = vld [vmem:[%s436 + $0xa8] sm:$0xff]
      %v542 = vld [vmem:[%s436 + $0xb0] sm:$0xff]
      %v543 = vld [vmem:[%s436 + $0xb8] sm:$0xff]
      %v544 = vld [vmem:[%s436 + $0xc0] sm:$0xff]
      %v545 = vld [vmem:[%s436 + $0xc8] sm:$0xff]
      %v546 = vld [vmem:[%s436 + $0xd0] sm:$0xff]
      %v547 = vld [vmem:[%s436 + $0xd8] sm:$0xff]
      %v548 = vld [vmem:[%s436 + $0xe0] sm:$0xff]
      %v549 = vld [vmem:[%s436 + $0xe8] sm:$0xff]
      %v550 = vld [vmem:[%s436 + $0xf0] sm:$0xff]
      %v551 = vld [vmem:[%s436 + $0xf8] sm:$0xff]
      %v552 = vld [vmem:[%s436 + $0x100] sm:$0xff]
      %v553 = vld [vmem:[%s436 + $0x108] sm:$0xff]
      %v554 = vld [vmem:[%s436 + $0x110] sm:$0xff]
      %v555 = vld [vmem:[%s436 + $0x118] sm:$0xff]
      %v556 = vld [vmem:[%s436 + $0x120] sm:$0xff]
      %v557 = vld [vmem:[%s436 + $0x128] sm:$0xff]
      %v558 = vld [vmem:[%s436 + $0x130] sm:$0xff]
      %v559 = vld [vmem:[%s436 + $0x138] sm:$0xff]
      %v560 = vld [vmem:[%s436 + $0x140] sm:$0xff]
      %v561 = vld [vmem:[%s436 + $0x148] sm:$0xff]
      %v562 = vld [vmem:[%s436 + $0x150] sm:$0xff]
      %v563 = vld [vmem:[%s436 + $0x158] sm:$0xff]
      %v564 = vld [vmem:[%s436 + $0x160] sm:$0xff]
      %v565 = vld [vmem:[%s436 + $0x168] sm:$0xff]
      %v566 = vld [vmem:[%s436 + $0x170] sm:$0xff]
      %v567 = vld [vmem:[%s436 + $0x178] sm:$0xff]
      %v568 = vld [vmem:[%s436 + $0x180] sm:$0xff]
      %v569 = vld [vmem:[%s436 + $0x188] sm:$0xff]
      %v570 = vld [vmem:[%s436 + $0x190] sm:$0xff]
      %v571 = vld [vmem:[%s436 + $0x198] sm:$0xff]
      %v572 = vld [vmem:[%s436 + $0x1a0] sm:$0xff]
      %v573 = vld [vmem:[%s436 + $0x1a8] sm:$0xff]
      %v574 = vld [vmem:[%s436 + $0x1b0] sm:$0xff]
      %v575 = vld [vmem:[%s436 + $0x1b8] sm:$0xff]
      %v576 = vld [vmem:[%s436 + $0x1c0] sm:$0xff]
      %v577 = vld [vmem:[%s436 + $0x1c8] sm:$0xff]
      %v578 = vld [vmem:[%s436 + $0x1d0] sm:$0xff]
      %v579 = vld [vmem:[%s436 + $0x1d8] sm:$0xff]
      %v580 = vld [vmem:[%s436 + $0x1e0] sm:$0xff]
      %v581 = vld [vmem:[%s436 + $0x1e8] sm:$0xff]
      %v582 = vld [vmem:[%s436 + $0x1f0] sm:$0xff]
      %v583 = vld [vmem:[%s436 + $0x1f8] sm:$0xff]
      %v584 = vld [vmem:[%s442] sm:$0xff]
      %v585 = vld [vmem:[%s442 + $0x8] sm:$0xff]
      %v586 = vld [vmem:[%s442 + $0x10] sm:$0xff]
      %v587 = vld [vmem:[%s442 + $0x18] sm:$0xff]
      %v588 = vld [vmem:[%s442 + $0x20] sm:$0xff]
      %v589 = vld [vmem:[%s442 + $0x28] sm:$0xff]
      %v590 = vld [vmem:[%s442 + $0x30] sm:$0xff]
      %v591 = vld [vmem:[%s442 + $0x38] sm:$0xff]
      %v592 = vld [vmem:[%s442 + $0x40] sm:$0xff]
      %v593 = vld [vmem:[%s442 + $0x48] sm:$0xff]
      %v594 = vld [vmem:[%s442 + $0x50] sm:$0xff]
      %v595 = vld [vmem:[%s442 + $0x58] sm:$0xff]
      %v596 = vld [vmem:[%s442 + $0x60] sm:$0xff]
      %v597 = vld [vmem:[%s442 + $0x68] sm:$0xff]
      %v598 = vld [vmem:[%s442 + $0x70] sm:$0xff]
      %v599 = vld [vmem:[%s442 + $0x78] sm:$0xff]
      %v600 = vld [vmem:[%s442 + $0x80] sm:$0xff]
      %v601 = vld [vmem:[%s442 + $0x88] sm:$0xff]
      %v602 = vld [vmem:[%s442 + $0x90] sm:$0xff]
      %v603 = vld [vmem:[%s442 + $0x98] sm:$0xff]
      %v604 = vld [vmem:[%s442 + $0xa0] sm:$0xff]
      %v605 = vld [vmem:[%s442 + $0xa8] sm:$0xff]
      %v606 = vld [vmem:[%s442 + $0xb0] sm:$0xff]
      %v607 = vld [vmem:[%s442 + $0xb8] sm:$0xff]
      %v608 = vld [vmem:[%s442 + $0xc0] sm:$0xff]
      %v609 = vld [vmem:[%s442 + $0xc8] sm:$0xff]
      %v610 = vld [vmem:[%s442 + $0xd0] sm:$0xff]
      %v611 = vld [vmem:[%s442 + $0xd8] sm:$0xff]
      %v612 = vld [vmem:[%s442 + $0xe0] sm:$0xff]
      %v613 = vld [vmem:[%s442 + $0xe8] sm:$0xff]
      %v614 = vld [vmem:[%s442 + $0xf0] sm:$0xff]
      %v615 = vld [vmem:[%s442 + $0xf8] sm:$0xff]
      %v616 = vld [vmem:[%s442 + $0x100] sm:$0xff]
      %v617 = vld [vmem:[%s442 + $0x108] sm:$0xff]
      %v618 = vld [vmem:[%s442 + $0x110] sm:$0xff]
      %v619 = vld [vmem:[%s442 + $0x118] sm:$0xff]
      %v620 = vld [vmem:[%s442 + $0x120] sm:$0xff]
      %v621 = vld [vmem:[%s442 + $0x128] sm:$0xff]
      %v622 = vld [vmem:[%s442 + $0x130] sm:$0xff]
      %v623 = vld [vmem:[%s442 + $0x138] sm:$0xff]
      %v624 = vld [vmem:[%s442 + $0x140] sm:$0xff]
      %v625 = vld [vmem:[%s442 + $0x148] sm:$0xff]
      %v626 = vld [vmem:[%s442 + $0x150] sm:$0xff]
      %v627 = vld [vmem:[%s442 + $0x158] sm:$0xff]
      %v628 = vld [vmem:[%s442 + $0x160] sm:$0xff]
      %v629 = vld [vmem:[%s442 + $0x168] sm:$0xff]
      %v630 = vld [vmem:[%s442 + $0x170] sm:$0xff]
      %v631 = vld [vmem:[%s442 + $0x178] sm:$0xff]
      %v632 = vld [vmem:[%s442 + $0x180] sm:$0xff]
      %v633 = vld [vmem:[%s442 + $0x188] sm:$0xff]
      %v634 = vld [vmem:[%s442 + $0x190] sm:$0xff]
      %v635 = vld [vmem:[%s442 + $0x198] sm:$0xff]
      %v636 = vld [vmem:[%s442 + $0x1a0] sm:$0xff]
      %v637 = vld [vmem:[%s442 + $0x1a8] sm:$0xff]
      %v638 = vld [vmem:[%s442 + $0x1b0] sm:$0xff]
      %v639 = vld [vmem:[%s442 + $0x1b8] sm:$0xff]
      %v640 = vld [vmem:[%s442 + $0x1c0] sm:$0xff]
      %v641 = vld [vmem:[%s442 + $0x1c8] sm:$0xff]
      %v642 = vld [vmem:[%s442 + $0x1d0] sm:$0xff]
      %v643 = vld [vmem:[%s442 + $0x1d8] sm:$0xff]
      %v644 = vld [vmem:[%s442 + $0x1e0] sm:$0xff]
      %v645 = vld [vmem:[%s442 + $0x1e8] sm:$0xff]
      %v646 = vld [vmem:[%s442 + $0x1f0] sm:$0xff]
      %v647 = vld [vmem:[%s442 + $0x1f8] sm:$0xff]
      %v648 = vld [vmem:[%s5] sm:$0xff]
      %v649 = vld [vmem:[%s5 + $0x8] sm:$0xff]
      %v650 = vld [vmem:[%s5 + $0x10] sm:$0xff]
      %v651 = vld [vmem:[%s5 + $0x18] sm:$0xff]
      %v652 = vld [vmem:[%s5 + $0x20] sm:$0xff]
      %v653 = vld [vmem:[%s5 + $0x28] sm:$0xff]
      %v654 = vld [vmem:[%s5 + $0x30] sm:$0xff]
      %v655 = vld [vmem:[%s5 + $0x38] sm:$0xff]
      %vm656 = vcmask 261120
      %v658 = vsel %vm656, %v520, 0
      %v661 = vsel %vm656, %v521, 0
      %v664 = vsel %vm656, %v522, 0
      %v667 = vsel %vm656, %v523, 0
      %v670 = vsel %vm656, %v524, 0
      %v673 = vsel %vm656, %v525, 0
      %v676 = vsel %vm656, %v526, 0
      %v679 = vsel %vm656, %v527, 0
      %v682 = vsel %vm656, %v528, 0
      %v685 = vsel %vm656, %v529, 0
      %v688 = vsel %vm656, %v530, 0
      %v691 = vsel %vm656, %v531, 0
      %v694 = vsel %vm656, %v532, 0
      %v697 = vsel %vm656, %v533, 0
      %v700 = vsel %vm656, %v534, 0
      %v703 = vsel %vm656, %v535, 0
      %v706 = vsel %vm656, %v536, 0
      %v709 = vsel %vm656, %v537, 0
      %v712 = vsel %vm656, %v538, 0
      %v715 = vsel %vm656, %v539, 0
      %v718 = vsel %vm656, %v540, 0
      %v721 = vsel %vm656, %v541, 0
      %v724 = vsel %vm656, %v542, 0
      %v727 = vsel %vm656, %v543, 0
      %v730 = vsel %vm656, %v544, 0
      %v733 = vsel %vm656, %v545, 0
      %v736 = vsel %vm656, %v546, 0
      %v739 = vsel %vm656, %v547, 0
      %v742 = vsel %vm656, %v548, 0
      %v745 = vsel %vm656, %v549, 0
      %v748 = vsel %vm656, %v550, 0
      %v751 = vsel %vm656, %v551, 0
      %v754 = vsel %vm656, %v552, 0
      %v757 = vsel %vm656, %v553, 0
      %v760 = vsel %vm656, %v554, 0
      %v763 = vsel %vm656, %v555, 0
      %v766 = vsel %vm656, %v556, 0
      %v769 = vsel %vm656, %v557, 0
      %v772 = vsel %vm656, %v558, 0
      %v775 = vsel %vm656, %v559, 0
      %v778 = vsel %vm656, %v560, 0
      %v781 = vsel %vm656, %v561, 0
      %v784 = vsel %vm656, %v562, 0
      %v787 = vsel %vm656, %v563, 0
      %v790 = vsel %vm656, %v564, 0
      %v793 = vsel %vm656, %v565, 0
      %v796 = vsel %vm656, %v566, 0
      %v799 = vsel %vm656, %v567, 0
      %v802 = vsel %vm656, %v568, 0
      %v805 = vsel %vm656, %v569, 0
      %v808 = vsel %vm656, %v570, 0
      %v811 = vsel %vm656, %v571, 0
      %v814 = vsel %vm656, %v572, 0
      %v817 = vsel %vm656, %v573, 0
      %v820 = vsel %vm656, %v574, 0
      %v823 = vsel %vm656, %v575, 0
      %v826 = vsel %vm656, %v576, 0
      %v829 = vsel %vm656, %v577, 0
      %v832 = vsel %vm656, %v578, 0
      %v835 = vsel %vm656, %v579, 0
      %v838 = vsel %vm656, %v580, 0
      %v841 = vsel %vm656, %v581, 0
      %v844 = vsel %vm656, %v582, 0
      %v847 = vsel %vm656, %v583, 0
      %849 = vmatprep.subr.mxu0 0.0
      %850 = vmatpush1.msra.mxu0 %v652
      %851 = vmatprep.subr.mxu0 0.0
      %852 = vmatpush1.msra.mxu0 %v653
      %853 = vmatprep.subr.mxu0 0.0
      %854 = vmatpush1.msra.mxu0 %v654
      %855 = vmatprep.subr.mxu0 0.0
      %856 = vmatpush1.msra.mxu0 %v655
      %857 = vmatprep.subr.mxu0 0.0
      %858 = vmatpush1.msra.mxu0 0.0
      %859 = vmatprep.subr.mxu0 0.0
      %860 = vmatpush1.msra.mxu0 0.0
      %861 = vmatprep.subr.mxu0 0.0
      %862 = vmatpush1.msra.mxu0 0.0
      %863 = vmatprep.subr.mxu0 0.0
      %864 = vmatpush1.msra.mxu0 0.0
      %865 = vmatprep.subr.mxu0 0.0
      %866 = vmatpush1.msra.mxu0 0.0
      %867 = vmatprep.subr.mxu0 0.0
      %868 = vmatpush1.msra.mxu0 0.0
      %869 = vmatprep.subr.mxu0 0.0
      %870 = vmatpush1.msra.mxu0 0.0
      %871 = vmatprep.subr.mxu0 0.0
      %872 = vmatpush1.msra.mxu0 0.0
      %873 = vmatprep.subr.mxu0 0.0
      %874 = vmatpush1.msra.mxu0 0.0
      %875 = vmatprep.subr.mxu0 0.0
      %876 = vmatpush1.msra.mxu0 0.0
      %877 = vmatprep.subr.mxu0 0.0
      %878 = vmatpush1.msra.mxu0 0.0
      %879 = vmatprep.subr.mxu0 0.0
      %880 = vmatpush1.msra.mxu0 0.0
      %881 = vmatprep.subr.mxu0 0.0
      %882 = vmatpush1.msra.mxu0 0.0
      %883 = vmatprep.subr.mxu0 0.0
      %884 = vmatpush1.msra.mxu0 0.0
      %885 = vmatprep.subr.mxu0 0.0
      %886 = vmatpush1.msra.mxu0 0.0
      %887 = vmatprep.subr.mxu0 0.0
      %888 = vmatpush1.msra.mxu0 0.0
      %889 = vmatprep.subr.mxu0 0.0
      %890 = vmatpush1.msra.mxu0 0.0
      %891 = vmatprep.subr.mxu0 0.0
      %892 = vmatpush1.msra.mxu0 0.0
      %893 = vmatprep.subr.mxu0 0.0
      %894 = vmatpush1.msra.mxu0 0.0
      %895 = vmatprep.subr.mxu0 0.0
      %896 = vmatpush1.msra.mxu0 0.0
      %897 = vmatprep.subr.mxu0 0.0
      %898 = vmatpush1.msra.mxu0 0.0
      %899 = vmatprep.subr.mxu0 0.0
      %900 = vmatpush1.msra.mxu0 0.0
      %901 = vmatprep.subr.mxu0 0.0
      %902 = vmatpush1.msra.mxu0 0.0
      %903 = vmatprep.subr.mxu0 0.0
      %904 = vmatpush1.msra.mxu0 0.0
      %905 = vmatprep.subr.mxu0 0.0
      %906 = vmatpush1.msra.mxu0 0.0
      %907 = vmatprep.subr.mxu0 0.0
      %908 = vmatpush1.msra.mxu0 0.0
      %909 = vmatprep.subr.mxu0 0.0
      %910 = vmatpush1.msra.mxu0 0.0
      %911 = vmatprep.subr.mxu0 0.0
      %912 = vmatpush1.msra.mxu0 0.0
      %913 = vmatprep.mubr.f32.mxu0 0.0
      %914 = vmatmul.mubr.f32.gmra.mrb[0].mxu0 %v658
      %v915 = vpop.f32.mrb[0].mxu0
      %v916 = vadd.f32 0.0, %v915
      %v917 = vpop.f32.mrb[0].mxu0
      %918 = vmatprep.mubr.f32.mxu0 0.0
      %919 = vmatmul.mubr.f32.gmra.mrb[0].mxu0 %v661
      %v920 = vpop.f32.mrb[0].mxu0
      %v921 = vadd.f32 0.0, %v920
      %v922 = vpop.f32.mrb[0].mxu0
      %923 = vmatprep.mubr.f32.mxu0 0.0
      %924 = vmatmul.mubr.f32.gmra.mrb[0].mxu0 %v664
      %v925 = vpop.f32.mrb[0].mxu0
      %v926 = vadd.f32 0.0, %v925
      %v927 = vpop.f32.mrb[0].mxu0
      %928 = vmatprep.mubr.f32.mxu0 0.0
      %929 = vmatmul.mubr.f32.gmra.mrb[0].mxu0 %v667
      %v930 = vpop.f32.mrb[0].mxu0
      %v931 = vadd.f32 0.0, %v930
      %v932 = vpop.f32.mrb[0].mxu0
      %933 = vmatprep.mubr.f32.mxu0 0.0
      %934 = vmatmul.mubr.f32.gmra.mrb[0].mxu0 %v670
      %v935 = vpop.f32.mrb[0].mxu0
      %v936 = vadd.f32 0.0, %v935
      %v937 = vpop.f32.mrb[0].mxu0
      %938 = vmatprep.mubr.f32.mxu0 0.0
      %939 = vmatmul.mubr.f32.gmra.mrb[0].mxu0 %v673
      %v940 = vpop.f32.mrb[0].mxu0
      %v941 = vadd.f32 0.0, %v940
      %v942 = vpop.f32.mrb[0].mxu0
      %943 = vmatprep.mubr.f32.mxu0 0.0
      %944 = vmatmul.mubr.f32.gmra.mrb[0].mxu0 %v676
      %v945 = vpop.f32.mrb[0].mxu0
      %v946 = vadd.f32 0.0, %v945
      %v947 = vpop.f32.mrb[0].mxu0
      %948 = vmatprep.mubr.f32.mxu0 0.0
      %949 = vmatmul.mubr.f32.gmra.mrb[0].mxu0 %v679
      %v950 = vpop.f32.mrb[0].mxu0
      %v951 = vadd.f32 0.0, %v950
      %v952 = vpop.f32.mrb[0].mxu0
      %953 = vmatprep.mubr.f32.mxu0 0.0
      %954 = vmatmul.mubr.f32.gmra.mrb[0].mxu0 %v682
      %v955 = vpop.f32.mrb[0].mxu0
      %v956 = vadd.f32 0.0, %v955
      %v957 = vpop.f32.mrb[0].mxu0
      %958 = vmatprep.mubr.f32.mxu0 0.0
      %959 = vmatmul.mubr.f32.gmra.mrb[0].mxu0 %v685
      %v960 = vpop.f32.mrb[0].mxu0
      %v961 = vadd.f32 0.0, %v960
      %v962 = vpop.f32.mrb[0].mxu0
      %963 = vmatprep.mubr.f32.mxu0 0.0
      %964 = vmatmul.mubr.f32.gmra.mrb[0].mxu0 %v688
      %v965 = vpop.f32.mrb[0].mxu0
      %v966 = vadd.f32 0.0, %v965
      %v967 = vpop.f32.mrb[0].mxu0
      %968 = vmatprep.mubr.f32.mxu0 0.0
      %969 = vmatmul.mubr.f32.gmra.mrb[0].mxu0 %v691
      %v970 = vpop.f32.mrb[0].mxu0
      %v971 = vadd.f32 0.0, %v970
      %v972 = vpop.f32.mrb[0].mxu0
      %973 = vmatprep.mubr.f32.mxu0 0.0
      %974 = vmatmul.mubr.f32.gmra.mrb[0].mxu0 %v694
      %v975 = vpop.f32.mrb[0].mxu0
      %v976 = vadd.f32 0.0, %v975
      %v977 = vpop.f32.mrb[0].mxu0
      %978 = vmatprep.mubr.f32.mxu0 0.0
      %979 = vmatmul.mubr.f32.gmra.mrb[0].mxu0 %v697
      %v980 = vpop.f32.mrb[0].mxu0
      %v981 = vadd.f32 0.0, %v980
      %v982 = vpop.f32.mrb[0].mxu0
      %983 = vmatprep.mubr.f32.mxu0 0.0
      %984 = vmatmul.mubr.f32.gmra.mrb[0].mxu0 %v700
      %v985 = vpop.f32.mrb[0].mxu0
      %v986 = vadd.f32 0.0, %v985
      %v987 = vpop.f32.mrb[0].mxu0
      %988 = vmatprep.mubr.f32.mxu0 0.0
      %989 = vmatmul.mubr.f32.gmra.mrb[0].mxu0 %v703
      %v990 = vpop.f32.mrb[0].mxu0
      %v991 = vadd.f32 0.0, %v990
      %v992 = vpop.f32.mrb[0].mxu0
      %993 = vmatprep.mubr.f32.mxu0 0.0
      %994 = vmatmul.mubr.f32.gmra.mrb[0].mxu0 %v706
      %v995 = vpop.f32.mrb[0].mxu0
      %v996 = vadd.f32 0.0, %v995
      %v997 = vpop.f32.mrb[0].mxu0
      %998 = vmatprep.mubr.f32.mxu0 0.0
      %999 = vmatmul.mubr.f32.gmra.mrb[0].mxu0 %v709
      %v1000 = vpop.f32.mrb[0].mxu0
      %v1001 = vadd.f32 0.0, %v1000
      %v1002 = vpop.f32.mrb[0].mxu0
      %1003 = vmatprep.mubr.f32.mxu0 0.0
      %1004 = vmatmul.mubr.f32.gmra.mrb[0].mxu0 %v712
      %v1005 = vpop.f32.mrb[0].mxu0
      %v1006 = vadd.f32 0.0, %v1005
      %v1007 = vpop.f32.mrb[0].mxu0
      %1008 = vmatprep.mubr.f32.mxu0 0.0
      %1009 = vmatmul.mubr.f32.gmra.mrb[0].mxu0 %v715
      %v1010 = vpop.f32.mrb[0].mxu0
      %v1011 = vadd.f32 0.0, %v1010
      %v1012 = vpop.f32.mrb[0].mxu0
      %1013 = vmatprep.mubr.f32.mxu0 0.0
      %1014 = vmatmul.mubr.f32.gmra.mrb[0].mxu0 %v718
      %v1015 = vpop.f32.mrb[0].mxu0
      %v1016 = vadd.f32 0.0, %v1015
      %v1017 = vpop.f32.mrb[0].mxu0
      %1018 = vmatprep.mubr.f32.mxu0 0.0
      %1019 = vmatmul.mubr.f32.gmra.mrb[0].mxu0 %v721
      %v1020 = vpop.f32.mrb[0].mxu0
      %v1021 = vadd.f32 0.0, %v1020
      %v1022 = vpop.f32.mrb[0].mxu0
      %1023 = vmatprep.mubr.f32.mxu0 0.0
      %1024 = vmatmul.mubr.f32.gmra.mrb[0].mxu0 %v724
      %v1025 = vpop.f32.mrb[0].mxu0
      %v1026 = vadd.f32 0.0, %v1025
      %v1027 = vpop.f32.mrb[0].mxu0
      %1028 = vmatprep.mubr.f32.mxu0 0.0
      %1029 = vmatmul.mubr.f32.gmra.mrb[0].mxu0 %v727
      %v1030 = vpop.f32.mrb[0].mxu0
      %v1031 = vadd.f32 0.0, %v1030
      %v1032 = vpop.f32.mrb[0].mxu0
      %1033 = vmatprep.mubr.f32.mxu0 0.0
      %1034 = vmatmul.mubr.f32.gmra.mrb[0].mxu0 %v730
      %v1035 = vpop.f32.mrb[0].mxu0
      %v1036 = vadd.f32 0.0, %v1035
      %v1037 = vpop.f32.mrb[0].mxu0
      %1038 = vmatprep.mubr.f32.mxu0 0.0
      %1039 = vmatmul.mubr.f32.gmra.mrb[0].mxu0 %v733
      %v1040 = vpop.f32.mrb[0].mxu0
      %v1041 = vadd.f32 0.0, %v1040
      %v1042 = vpop.f32.mrb[0].mxu0
      %1043 = vmatprep.mubr.f32.mxu0 0.0
      %1044 = vmatmul.mubr.f32.gmra.mrb[0].mxu0 %v736
      %v1045 = vpop.f32.mrb[0].mxu0
      %v1046 = vadd.f32 0.0, %v1045
      %v1047 = vpop.f32.mrb[0].mxu0
      %1048 = vmatprep.mubr.f32.mxu0 0.0
      %1049 = vmatmul.mubr.f32.gmra.mrb[0].mxu0 %v739
      %v1050 = vpop.f32.mrb[0].mxu0
      %v1051 = vadd.f32 0.0, %v1050
      %v1052 = vpop.f32.mrb[0].mxu0
      %1053 = vmatprep.mubr.f32.mxu0 0.0
      %1054 = vmatmul.mubr.f32.gmra.mrb[0].mxu0 %v742
      %v1055 = vpop.f32.mrb[0].mxu0
      %v1056 = vadd.f32 0.0, %v1055
      %v1057 = vpop.f32.mrb[0].mxu0
      %1058 = vmatprep.mubr.f32.mxu0 0.0
      %1059 = vmatmul.mubr.f32.gmra.mrb[0].mxu0 %v745
      %v1060 = vpop.f32.mrb[0].mxu0
      %v1061 = vadd.f32 0.0, %v1060
      %v1062 = vpop.f32.mrb[0].mxu0
      %1063 = vmatprep.mubr.f32.mxu0 0.0
      %1064 = vmatmul.mubr.f32.gmra.mrb[0].mxu0 %v748
      %v1065 = vpop.f32.mrb[0].mxu0
      %v1066 = vadd.f32 0.0, %v1065
      %v1067 = vpop.f32.mrb[0].mxu0
      %1068 = vmatprep.mubr.f32.mxu0 0.0
      %1069 = vmatmul.mubr.f32.gmra.mrb[0].mxu0 %v751
      %v1070 = vpop.f32.mrb[0].mxu0
      %v1071 = vadd.f32 0.0, %v1070
      %v1072 = vpop.f32.mrb[0].mxu0
      %1073 = vmatprep.mubr.f32.mxu0 0.0
      %1074 = vmatmul.mubr.f32.gmra.mrb[0].mxu0 %v754
      %v1075 = vpop.f32.mrb[0].mxu0
      %v1076 = vadd.f32 0.0, %v1075
      %v1077 = vpop.f32.mrb[0].mxu0
      %1078 = vmatprep.mubr.f32.mxu0 0.0
      %1079 = vmatmul.mubr.f32.gmra.mrb[0].mxu0 %v757
      %v1080 = vpop.f32.mrb[0].mxu0
      %v1081 = vadd.f32 0.0, %v1080
      %v1082 = vpop.f32.mrb[0].mxu0
      %1083 = vmatprep.mubr.f32.mxu0 0.0
      %1084 = vmatmul.mubr.f32.gmra.mrb[0].mxu0 %v760
      %v1085 = vpop.f32.mrb[0].mxu0
      %v1086 = vadd.f32 0.0, %v1085
      %v1087 = vpop.f32.mrb[0].mxu0
      %1088 = vmatprep.mubr.f32.mxu0 0.0
      %1089 = vmatmul.mubr.f32.gmra.mrb[0].mxu0 %v763
      %v1090 = vpop.f32.mrb[0].mxu0
      %v1091 = vadd.f32 0.0, %v1090
      %v1092 = vpop.f32.mrb[0].mxu0
      %1093 = vmatprep.mubr.f32.mxu0 0.0
      %1094 = vmatmul.mubr.f32.gmra.mrb[0].mxu0 %v766
      %v1095 = vpop.f32.mrb[0].mxu0
      %v1096 = vadd.f32 0.0, %v1095
      %v1097 = vpop.f32.mrb[0].mxu0
      %1098 = vmatprep.mubr.f32.mxu0 0.0
      %1099 = vmatmul.mubr.f32.gmra.mrb[0].mxu0 %v769
      %v1100 = vpop.f32.mrb[0].mxu0
      %v1101 = vadd.f32 0.0, %v1100
      %v1102 = vpop.f32.mrb[0].mxu0
      %1103 = vmatprep.mubr.f32.mxu0 0.0
      %1104 = vmatmul.mubr.f32.gmra.mrb[0].mxu0 %v772
      %v1105 = vpop.f32.mrb[0].mxu0
      %v1106 = vadd.f32 0.0, %v1105
      %v1107 = vpop.f32.mrb[0].mxu0
      %1108 = vmatprep.mubr.f32.mxu0 0.0
      %1109 = vmatmul.mubr.f32.gmra.mrb[0].mxu0 %v775
      %v1110 = vpop.f32.mrb[0].mxu0
      %v1111 = vadd.f32 0.0, %v1110
      %v1112 = vpop.f32.mrb[0].mxu0
      %1113 = vmatprep.mubr.f32.mxu0 0.0
      %1114 = vmatmul.mubr.f32.gmra.mrb[0].mxu0 %v778
      %v1115 = vpop.f32.mrb[0].mxu0
      %v1116 = vadd.f32 0.0, %v1115
      %v1117 = vpop.f32.mrb[0].mxu0
      %1118 = vmatprep.mubr.f32.mxu0 0.0
      %1119 = vmatmul.mubr.f32.gmra.mrb[0].mxu0 %v781
      %v1120 = vpop.f32.mrb[0].mxu0
      %v1121 = vadd.f32 0.0, %v1120
      %v1122 = vpop.f32.mrb[0].mxu0
      %1123 = vmatprep.mubr.f32.mxu0 0.0
      %1124 = vmatmul.mubr.f32.gmra.mrb[0].mxu0 %v784
      %v1125 = vpop.f32.mrb[0].mxu0
      %v1126 = vadd.f32 0.0, %v1125
      %v1127 = vpop.f32.mrb[0].mxu0
      %1128 = vmatprep.mubr.f32.mxu0 0.0
      %1129 = vmatmul.mubr.f32.gmra.mrb[0].mxu0 %v787
      %v1130 = vpop.f32.mrb[0].mxu0
      %v1131 = vadd.f32 0.0, %v1130
      %v1132 = vpop.f32.mrb[0].mxu0
      %1133 = vmatprep.mubr.f32.mxu0 0.0
      %1134 = vmatmul.mubr.f32.gmra.mrb[0].mxu0 %v790
      %v1135 = vpop.f32.mrb[0].mxu0
      %v1136 = vadd.f32 0.0, %v1135
      %v1137 = vpop.f32.mrb[0].mxu0
      %1138 = vmatprep.mubr.f32.mxu0 0.0
      %1139 = vmatmul.mubr.f32.gmra.mrb[0].mxu0 %v793
      %v1140 = vpop.f32.mrb[0].mxu0
      %v1141 = vadd.f32 0.0, %v1140
      %v1142 = vpop.f32.mrb[0].mxu0
      %1143 = vmatprep.mubr.f32.mxu0 0.0
      %1144 = vmatmul.mubr.f32.gmra.mrb[0].mxu0 %v796
      %v1145 = vpop.f32.mrb[0].mxu0
      %v1146 = vadd.f32 0.0, %v1145
      %v1147 = vpop.f32.mrb[0].mxu0
      %1148 = vmatprep.mubr.f32.mxu0 0.0
      %1149 = vmatmul.mubr.f32.gmra.mrb[0].mxu0 %v799
      %v1150 = vpop.f32.mrb[0].mxu0
      %v1151 = vadd.f32 0.0, %v1150
      %v1152 = vpop.f32.mrb[0].mxu0
      %1153 = vmatprep.mubr.f32.mxu0 0.0
      %1154 = vmatmul.mubr.f32.gmra.mrb[0].mxu0 %v802
      %v1155 = vpop.f32.mrb[0].mxu0
      %v1156 = vadd.f32 0.0, %v1155
      %v1157 = vpop.f32.mrb[0].mxu0
      %1158 = vmatprep.mubr.f32.mxu0 0.0
      %1159 = vmatmul.mubr.f32.gmra.mrb[0].mxu0 %v805
      %v1160 = vpop.f32.mrb[0].mxu0
      %v1161 = vadd.f32 0.0, %v1160
      %v1162 = vpop.f32.mrb[0].mxu0
      %1163 = vmatprep.mubr.f32.mxu0 0.0
      %1164 = vmatmul.mubr.f32.gmra.mrb[0].mxu0 %v808
      %v1165 = vpop.f32.mrb[0].mxu0
      %v1166 = vadd.f32 0.0, %v1165
      %v1167 = vpop.f32.mrb[0].mxu0
      %1168 = vmatprep.mubr.f32.mxu0 0.0
      %1169 = vmatmul.mubr.f32.gmra.mrb[0].mxu0 %v811
      %v1170 = vpop.f32.mrb[0].mxu0
      %v1171 = vadd.f32 0.0, %v1170
      %v1172 = vpop.f32.mrb[0].mxu0
      %1173 = vmatprep.mubr.f32.mxu0 0.0
      %1174 = vmatmul.mubr.f32.gmra.mrb[0].mxu0 %v814
      %v1175 = vpop.f32.mrb[0].mxu0
      %v1176 = vadd.f32 0.0, %v1175
      %v1177 = vpop.f32.mrb[0].mxu0
      %1178 = vmatprep.mubr.f32.mxu0 0.0
      %1179 = vmatmul.mubr.f32.gmra.mrb[0].mxu0 %v817
      %v1180 = vpop.f32.mrb[0].mxu0
      %v1181 = vadd.f32 0.0, %v1180
      %v1182 = vpop.f32.mrb[0].mxu0
      %1183 = vmatprep.mubr.f32.mxu0 0.0
      %1184 = vmatmul.mubr.f32.gmra.mrb[0].mxu0 %v820
      %v1185 = vpop.f32.mrb[0].mxu0
      %v1186 = vadd.f32 0.0, %v1185
      %v1187 = vpop.f32.mrb[0].mxu0
      %1188 = vmatprep.mubr.f32.mxu0 0.0
      %1189 = vmatmul.mubr.f32.gmra.mrb[0].mxu0 %v823
      %v1190 = vpop.f32.mrb[0].mxu0
      %v1191 = vadd.f32 0.0, %v1190
      %v1192 = vpop.f32.mrb[0].mxu0
      %1193 = vmatprep.mubr.f32.mxu0 0.0
      %1194 = vmatmul.mubr.f32.gmra.mrb[0].mxu0 %v826
      %v1195 = vpop.f32.mrb[0].mxu0
      %v1196 = vadd.f32 0.0, %v1195
      %v1197 = vpop.f32.mrb[0].mxu0
      %1198 = vmatprep.mubr.f32.mxu0 0.0
      %1199 = vmatmul.mubr.f32.gmra.mrb[0].mxu0 %v829
      %v1200 = vpop.f32.mrb[0].mxu0
      %v1201 = vadd.f32 0.0, %v1200
      %v1202 = vpop.f32.mrb[0].mxu0
      %1203 = vmatprep.mubr.f32.mxu0 0.0
      %1204 = vmatmul.mubr.f32.gmra.mrb[0].mxu0 %v832
      %v1205 = vpop.f32.mrb[0].mxu0
      %v1206 = vadd.f32 0.0, %v1205
      %v1207 = vpop.f32.mrb[0].mxu0
      %1208 = vmatprep.mubr.f32.mxu0 0.0
      %1209 = vmatmul.mubr.f32.gmra.mrb[0].mxu0 %v835
      %v1210 = vpop.f32.mrb[0].mxu0
      %v1211 = vadd.f32 0.0, %v1210
      %v1212 = vpop.f32.mrb[0].mxu0
      %1213 = vmatprep.mubr.f32.mxu0 0.0
      %1214 = vmatmul.mubr.f32.gmra.mrb[0].mxu0 %v838
      %v1215 = vpop.f32.mrb[0].mxu0
      %v1216 = vadd.f32 0.0, %v1215
      %v1217 = vpop.f32.mrb[0].mxu0
      %1218 = vmatprep.mubr.f32.mxu0 0.0
      %1219 = vmatmul.mubr.f32.gmra.mrb[0].mxu0 %v841
      %v1220 = vpop.f32.mrb[0].mxu0
      %v1221 = vadd.f32 0.0, %v1220
      %v1222 = vpop.f32.mrb[0].mxu0
      %1223 = vmatprep.mubr.f32.mxu0 0.0
      %1224 = vmatmul.mubr.f32.gmra.mrb[0].mxu0 %v844
      %v1225 = vpop.f32.mrb[0].mxu0
      %v1226 = vadd.f32 0.0, %v1225
      %v1227 = vpop.f32.mrb[0].mxu0
      %1228 = vmatprep.mubr.f32.mxu0 0.0
      %1229 = vmatmul.mubr.f32.gmra.mrb[0].mxu0 %v847
      %v1230 = vpop.f32.mrb[0].mxu0
      %v1231 = vadd.f32 0.0, %v1230
      %v1232 = vpop.f32.mrb[0].mxu0
      %1233 = vdwg.mxu0
      %v1235 = vsel %vm656, %v456, 0
      %v1238 = vsel %vm656, %v457, 0
      %v1241 = vsel %vm656, %v458, 0
      %v1244 = vsel %vm656, %v459, 0
      %v1247 = vsel %vm656, %v460, 0
      %v1250 = vsel %vm656, %v461, 0
      %v1253 = vsel %vm656, %v462, 0
      %v1256 = vsel %vm656, %v463, 0
      %v1259 = vsel %vm656, %v464, 0
      %v1262 = vsel %vm656, %v465, 0
      %v1265 = vsel %vm656, %v466, 0
      %v1268 = vsel %vm656, %v467, 0
      %v1271 = vsel %vm656, %v468, 0
      %v1274 = vsel %vm656, %v469, 0
      %v1277 = vsel %vm656, %v470, 0
      %v1280 = vsel %vm656, %v471, 0
      %v1283 = vsel %vm656, %v472, 0
      %v1286 = vsel %vm656, %v473, 0
      %v1289 = vsel %vm656, %v474, 0
      %v1292 = vsel %vm656, %v475, 0
      %v1295 = vsel %vm656, %v476, 0
      %v1298 = vsel %vm656, %v477, 0
      %v1301 = vsel %vm656, %v478, 0
      %v1304 = vsel %vm656, %v479, 0
      %v1307 = vsel %vm656, %v480, 0
      %v1310 = vsel %vm656, %v481, 0
      %v1313 = vsel %vm656, %v482, 0
      %v1316 = vsel %vm656, %v483, 0
      %v1319 = vsel %vm656, %v484, 0
      %v1322 = vsel %vm656, %v485, 0
      %v1325 = vsel %vm656, %v486, 0
      %v1328 = vsel %vm656, %v487, 0
      %v1331 = vsel %vm656, %v488, 0
      %v1334 = vsel %vm656, %v489, 0
      %v1337 = vsel %vm656, %v490, 0
      %v1340 = vsel %vm656, %v491, 0
      %v1343 = vsel %vm656, %v492, 0
      %v1346 = vsel %vm656, %v493, 0
      %v1349 = vsel %vm656, %v494, 0
      %v1352 = vsel %vm656, %v495, 0
      %v1355 = vsel %vm656, %v496, 0
      %v1358 = vsel %vm656, %v497, 0
      %v1361 = vsel %vm656, %v498, 0
      %v1364 = vsel %vm656, %v499, 0
      %v1367 = vsel %vm656, %v500, 0
      %v1370 = vsel %vm656, %v501, 0
      %v1373 = vsel %vm656, %v502, 0
      %v1376 = vsel %vm656, %v503, 0
      %v1379 = vsel %vm656, %v504, 0
      %v1382 = vsel %vm656, %v505, 0
      %v1385 = vsel %vm656, %v506, 0
      %v1388 = vsel %vm656, %v507, 0
      %v1391 = vsel %vm656, %v508, 0
      %v1394 = vsel %vm656, %v509, 0
      %v1397 = vsel %vm656, %v510, 0
      %v1400 = vsel %vm656, %v511, 0
      %v1403 = vsel %vm656, %v512, 0
      %v1406 = vsel %vm656, %v513, 0
      %v1409 = vsel %vm656, %v514, 0
      %v1412 = vsel %vm656, %v515, 0
      %v1415 = vsel %vm656, %v516, 0
      %v1418 = vsel %vm656, %v517, 0
      %v1421 = vsel %vm656, %v518, 0
      %v1424 = vsel %vm656, %v519, 0
      %1426 = vmatprep.subr.mxu0 0.0
      %1427 = vmatpush1.msra.mxu0 %v648
      %1428 = vmatprep.subr.mxu0 0.0
      %1429 = vmatpush1.msra.mxu0 %v649
      %1430 = vmatprep.subr.mxu0 0.0
      %1431 = vmatpush1.msra.mxu0 %v650
      %1432 = vmatprep.subr.mxu0 0.0
      %1433 = vmatpush1.msra.mxu0 %v651
      %1434 = vmatprep.subr.mxu0 0.0
      %1435 = vmatpush1.msra.mxu0 0.0
      %1436 = vmatprep.subr.mxu0 0.0
      %1437 = vmatpush1.msra.mxu0 0.0
      %1438 = vmatprep.subr.mxu0 0.0
      %1439 = vmatpush1.msra.mxu0 0.0
      %1440 = vmatprep.subr.mxu0 0.0
      %1441 = vmatpush1.msra.mxu0 0.0
      %1442 = vmatprep.subr.mxu0 0.0
      %1443 = vmatpush1.msra.mxu0 0.0
      %1444 = vmatprep.subr.mxu0 0.0
      %1445 = vmatpush1.msra.mxu0 0.0
      %1446 = vmatprep.subr.mxu0 0.0
      %1447 = vmatpush1.msra.mxu0 0.0
      %1448 = vmatprep.subr.mxu0 0.0
      %1449 = vmatpush1.msra.mxu0 0.0
      %1450 = vmatprep.subr.mxu0 0.0
      %1451 = vmatpush1.msra.mxu0 0.0
      %1452 = vmatprep.subr.mxu0 0.0
      %1453 = vmatpush1.msra.mxu0 0.0
      %1454 = vmatprep.subr.mxu0 0.0
      %1455 = vmatpush1.msra.mxu0 0.0
      %1456 = vmatprep.subr.mxu0 0.0
      %1457 = vmatpush1.msra.mxu0 0.0
      %1458 = vmatprep.subr.mxu0 0.0
      %1459 = vmatpush1.msra.mxu0 0.0
      %1460 = vmatprep.subr.mxu0 0.0
      %1461 = vmatpush1.msra.mxu0 0.0
      %1462 = vmatprep.subr.mxu0 0.0
      %1463 = vmatpush1.msra.mxu0 0.0
      %1464 = vmatprep.subr.mxu0 0.0
      %1465 = vmatpush1.msra.mxu0 0.0
      %1466 = vmatprep.subr.mxu0 0.0
      %1467 = vmatpush1.msra.mxu0 0.0
      %1468 = vmatprep.subr.mxu0 0.0
      %1469 = vmatpush1.msra.mxu0 0.0
      %1470 = vmatprep.subr.mxu0 0.0
      %1471 = vmatpush1.msra.mxu0 0.0
      %1472 = vmatprep.subr.mxu0 0.0
      %1473 = vmatpush1.msra.mxu0 0.0
      %1474 = vmatprep.subr.mxu0 0.0
      %1475 = vmatpush1.msra.mxu0 0.0
      %1476 = vmatprep.subr.mxu0 0.0
      %1477 = vmatpush1.msra.mxu0 0.0
      %1478 = vmatprep.subr.mxu0 0.0
      %1479 = vmatpush1.msra.mxu0 0.0
      %1480 = vmatprep.subr.mxu0 0.0
      %1481 = vmatpush1.msra.mxu0 0.0
      %1482 = vmatprep.subr.mxu0 0.0
      %1483 = vmatpush1.msra.mxu0 0.0
      %1484 = vmatprep.subr.mxu0 0.0
      %1485 = vmatpush1.msra.mxu0 0.0
      %1486 = vmatprep.subr.mxu0 0.0
      %1487 = vmatpush1.msra.mxu0 0.0
      %1488 = vmatprep.subr.mxu0 0.0
      %1489 = vmatpush1.msra.mxu0 0.0
      %1490 = vmatprep.mubr.f32.mxu0 0.0
      %1491 = vmatmul.mubr.f32.gmra.mrb[0].mxu0 %v1235
      %v1492 = vpop.f32.mrb[0].mxu0
      %v1493 = vadd.f32 %v916, %v1492
      %v1494 = vpop.f32.mrb[0].mxu0
      %1495 = vmatprep.mubr.f32.mxu0 0.0
      %1496 = vmatmul.mubr.f32.gmra.mrb[0].mxu0 %v1238
      %v1497 = vpop.f32.mrb[0].mxu0
      %v1498 = vadd.f32 %v921, %v1497
      %v1499 = vpop.f32.mrb[0].mxu0
      %1500 = vmatprep.mubr.f32.mxu0 0.0
      %1501 = vmatmul.mubr.f32.gmra.mrb[0].mxu0 %v1241
      %v1502 = vpop.f32.mrb[0].mxu0
      %v1503 = vadd.f32 %v926, %v1502
      %v1504 = vpop.f32.mrb[0].mxu0
      %1505 = vmatprep.mubr.f32.mxu0 0.0
      %1506 = vmatmul.mubr.f32.gmra.mrb[0].mxu0 %v1244
      %v1507 = vpop.f32.mrb[0].mxu0
      %v1508 = vadd.f32 %v931, %v1507
      %v1509 = vpop.f32.mrb[0].mxu0
      %1510 = vmatprep.mubr.f32.mxu0 0.0
      %1511 = vmatmul.mubr.f32.gmra.mrb[0].mxu0 %v1247
      %v1512 = vpop.f32.mrb[0].mxu0
      %v1513 = vadd.f32 %v936, %v1512
      %v1514 = vpop.f32.mrb[0].mxu0
      %1515 = vmatprep.mubr.f32.mxu0 0.0
      %1516 = vmatmul.mubr.f32.gmra.mrb[0].mxu0 %v1250
      %v1517 = vpop.f32.mrb[0].mxu0
      %v1518 = vadd.f32 %v941, %v1517
      %v1519 = vpop.f32.mrb[0].mxu0
      %1520 = vmatprep.mubr.f32.mxu0 0.0
      %1521 = vmatmul.mubr.f32.gmra.mrb[0].mxu0 %v1253
      %v1522 = vpop.f32.mrb[0].mxu0
      %v1523 = vadd.f32 %v946, %v1522
      %v1524 = vpop.f32.mrb[0].mxu0
      %1525 = vmatprep.mubr.f32.mxu0 0.0
      %1526 = vmatmul.mubr.f32.gmra.mrb[0].mxu0 %v1256
      %v1527 = vpop.f32.mrb[0].mxu0
      %v1528 = vadd.f32 %v951, %v1527
      %v1529 = vpop.f32.mrb[0].mxu0
      %1530 = vmatprep.mubr.f32.mxu0 0.0
      %1531 = vmatmul.mubr.f32.gmra.mrb[0].mxu0 %v1259
      %v1532 = vpop.f32.mrb[0].mxu0
      %v1533 = vadd.f32 %v956, %v1532
      %v1534 = vpop.f32.mrb[0].mxu0
      %1535 = vmatprep.mubr.f32.mxu0 0.0
      %1536 = vmatmul.mubr.f32.gmra.mrb[0].mxu0 %v1262
      %v1537 = vpop.f32.mrb[0].mxu0
      %v1538 = vadd.f32 %v961, %v1537
      %v1539 = vpop.f32.mrb[0].mxu0
      %1540 = vmatprep.mubr.f32.mxu0 0.0
      %1541 = vmatmul.mubr.f32.gmra.mrb[0].mxu0 %v1265
      %v1542 = vpop.f32.mrb[0].mxu0
      %v1543 = vadd.f32 %v966, %v1542
      %v1544 = vpop.f32.mrb[0].mxu0
      %1545 = vmatprep.mubr.f32.mxu0 0.0
      %1546 = vmatmul.mubr.f32.gmra.mrb[0].mxu0 %v1268
      %v1547 = vpop.f32.mrb[0].mxu0
      %v1548 = vadd.f32 %v971, %v1547
      %v1549 = vpop.f32.mrb[0].mxu0
      %1550 = vmatprep.mubr.f32.mxu0 0.0
      %1551 = vmatmul.mubr.f32.gmra.mrb[0].mxu0 %v1271
      %v1552 = vpop.f32.mrb[0].mxu0
      %v1553 = vadd.f32 %v976, %v1552
      %v1554 = vpop.f32.mrb[0].mxu0
      %1555 = vmatprep.mubr.f32.mxu0 0.0
      %1556 = vmatmul.mubr.f32.gmra.mrb[0].mxu0 %v1274
      %v1557 = vpop.f32.mrb[0].mxu0
      %v1558 = vadd.f32 %v981, %v1557
      %v1559 = vpop.f32.mrb[0].mxu0
      %1560 = vmatprep.mubr.f32.mxu0 0.0
      %1561 = vmatmul.mubr.f32.gmra.mrb[0].mxu0 %v1277
      %v1562 = vpop.f32.mrb[0].mxu0
      %v1563 = vadd.f32 %v986, %v1562
      %v1564 = vpop.f32.mrb[0].mxu0
      %1565 = vmatprep.mubr.f32.mxu0 0.0
      %1566 = vmatmul.mubr.f32.gmra.mrb[0].mxu0 %v1280
      %v1567 = vpop.f32.mrb[0].mxu0
      %v1568 = vadd.f32 %v991, %v1567
      %v1569 = vpop.f32.mrb[0].mxu0
      %1570 = vmatprep.mubr.f32.mxu0 0.0
      %1571 = vmatmul.mubr.f32.gmra.mrb[0].mxu0 %v1283
      %v1572 = vpop.f32.mrb[0].mxu0
      %v1573 = vadd.f32 %v996, %v1572
      %v1574 = vpop.f32.mrb[0].mxu0
      %1575 = vmatprep.mubr.f32.mxu0 0.0
      %1576 = vmatmul.mubr.f32.gmra.mrb[0].mxu0 %v1286
      %v1577 = vpop.f32.mrb[0].mxu0
      %v1578 = vadd.f32 %v1001, %v1577
      %v1579 = vpop.f32.mrb[0].mxu0
      %1580 = vmatprep.mubr.f32.mxu0 0.0
      %1581 = vmatmul.mubr.f32.gmra.mrb[0].mxu0 %v1289
      %v1582 = vpop.f32.mrb[0].mxu0
      %v1583 = vadd.f32 %v1006, %v1582
      %v1584 = vpop.f32.mrb[0].mxu0
      %1585 = vmatprep.mubr.f32.mxu0 0.0
      %1586 = vmatmul.mubr.f32.gmra.mrb[0].mxu0 %v1292
      %v1587 = vpop.f32.mrb[0].mxu0
      %v1588 = vadd.f32 %v1011, %v1587
      %v1589 = vpop.f32.mrb[0].mxu0
      %1590 = vmatprep.mubr.f32.mxu0 0.0
      %1591 = vmatmul.mubr.f32.gmra.mrb[0].mxu0 %v1295
      %v1592 = vpop.f32.mrb[0].mxu0
      %v1593 = vadd.f32 %v1016, %v1592
      %v1594 = vpop.f32.mrb[0].mxu0
      %1595 = vmatprep.mubr.f32.mxu0 0.0
      %1596 = vmatmul.mubr.f32.gmra.mrb[0].mxu0 %v1298
      %v1597 = vpop.f32.mrb[0].mxu0
      %v1598 = vadd.f32 %v1021, %v1597
      %v1599 = vpop.f32.mrb[0].mxu0
      %1600 = vmatprep.mubr.f32.mxu0 0.0
      %1601 = vmatmul.mubr.f32.gmra.mrb[0].mxu0 %v1301
      %v1602 = vpop.f32.mrb[0].mxu0
      %v1603 = vadd.f32 %v1026, %v1602
      %v1604 = vpop.f32.mrb[0].mxu0
      %1605 = vmatprep.mubr.f32.mxu0 0.0
      %1606 = vmatmul.mubr.f32.gmra.mrb[0].mxu0 %v1304
      %v1607 = vpop.f32.mrb[0].mxu0
      %v1608 = vadd.f32 %v1031, %v1607
      %v1609 = vpop.f32.mrb[0].mxu0
      %1610 = vmatprep.mubr.f32.mxu0 0.0
      %1611 = vmatmul.mubr.f32.gmra.mrb[0].mxu0 %v1307
      %v1612 = vpop.f32.mrb[0].mxu0
      %v1613 = vadd.f32 %v1036, %v1612
      %v1614 = vpop.f32.mrb[0].mxu0
      %1615 = vmatprep.mubr.f32.mxu0 0.0
      %1616 = vmatmul.mubr.f32.gmra.mrb[0].mxu0 %v1310
      %v1617 = vpop.f32.mrb[0].mxu0
      %v1618 = vadd.f32 %v1041, %v1617
      %v1619 = vpop.f32.mrb[0].mxu0
      %1620 = vmatprep.mubr.f32.mxu0 0.0
      %1621 = vmatmul.mubr.f32.gmra.mrb[0].mxu0 %v1313
      %v1622 = vpop.f32.mrb[0].mxu0
      %v1623 = vadd.f32 %v1046, %v1622
      %v1624 = vpop.f32.mrb[0].mxu0
      %1625 = vmatprep.mubr.f32.mxu0 0.0
      %1626 = vmatmul.mubr.f32.gmra.mrb[0].mxu0 %v1316
      %v1627 = vpop.f32.mrb[0].mxu0
      %v1628 = vadd.f32 %v1051, %v1627
      %v1629 = vpop.f32.mrb[0].mxu0
      %1630 = vmatprep.mubr.f32.mxu0 0.0
      %1631 = vmatmul.mubr.f32.gmra.mrb[0].mxu0 %v1319
      %v1632 = vpop.f32.mrb[0].mxu0
      %v1633 = vadd.f32 %v1056, %v1632
      %v1634 = vpop.f32.mrb[0].mxu0
      %1635 = vmatprep.mubr.f32.mxu0 0.0
      %1636 = vmatmul.mubr.f32.gmra.mrb[0].mxu0 %v1322
      %v1637 = vpop.f32.mrb[0].mxu0
      %v1638 = vadd.f32 %v1061, %v1637
      %v1639 = vpop.f32.mrb[0].mxu0
      %1640 = vmatprep.mubr.f32.mxu0 0.0
      %1641 = vmatmul.mubr.f32.gmra.mrb[0].mxu0 %v1325
      %v1642 = vpop.f32.mrb[0].mxu0
      %v1643 = vadd.f32 %v1066, %v1642
      %v1644 = vpop.f32.mrb[0].mxu0
      %1645 = vmatprep.mubr.f32.mxu0 0.0
      %1646 = vmatmul.mubr.f32.gmra.mrb[0].mxu0 %v1328
      %v1647 = vpop.f32.mrb[0].mxu0
      %v1648 = vadd.f32 %v1071, %v1647
      %v1649 = vpop.f32.mrb[0].mxu0
      %1650 = vmatprep.mubr.f32.mxu0 0.0
      %1651 = vmatmul.mubr.f32.gmra.mrb[0].mxu0 %v1331
      %v1652 = vpop.f32.mrb[0].mxu0
      %v1653 = vadd.f32 %v1076, %v1652
      %v1654 = vpop.f32.mrb[0].mxu0
      %1655 = vmatprep.mubr.f32.mxu0 0.0
      %1656 = vmatmul.mubr.f32.gmra.mrb[0].mxu0 %v1334
      %v1657 = vpop.f32.mrb[0].mxu0
      %v1658 = vadd.f32 %v1081, %v1657
      %v1659 = vpop.f32.mrb[0].mxu0
      %1660 = vmatprep.mubr.f32.mxu0 0.0
      %1661 = vmatmul.mubr.f32.gmra.mrb[0].mxu0 %v1337
      %v1662 = vpop.f32.mrb[0].mxu0
      %v1663 = vadd.f32 %v1086, %v1662
      %v1664 = vpop.f32.mrb[0].mxu0
      %1665 = vmatprep.mubr.f32.mxu0 0.0
      %1666 = vmatmul.mubr.f32.gmra.mrb[0].mxu0 %v1340
      %v1667 = vpop.f32.mrb[0].mxu0
      %v1668 = vadd.f32 %v1091, %v1667
      %v1669 = vpop.f32.mrb[0].mxu0
      %1670 = vmatprep.mubr.f32.mxu0 0.0
      %1671 = vmatmul.mubr.f32.gmra.mrb[0].mxu0 %v1343
      %v1672 = vpop.f32.mrb[0].mxu0
      %v1673 = vadd.f32 %v1096, %v1672
      %v1674 = vpop.f32.mrb[0].mxu0
      %1675 = vmatprep.mubr.f32.mxu0 0.0
      %1676 = vmatmul.mubr.f32.gmra.mrb[0].mxu0 %v1346
      %v1677 = vpop.f32.mrb[0].mxu0
      %v1678 = vadd.f32 %v1101, %v1677
      %v1679 = vpop.f32.mrb[0].mxu0
      %1680 = vmatprep.mubr.f32.mxu0 0.0
      %1681 = vmatmul.mubr.f32.gmra.mrb[0].mxu0 %v1349
      %v1682 = vpop.f32.mrb[0].mxu0
      %v1683 = vadd.f32 %v1106, %v1682
      %v1684 = vpop.f32.mrb[0].mxu0
      %1685 = vmatprep.mubr.f32.mxu0 0.0
      %1686 = vmatmul.mubr.f32.gmra.mrb[0].mxu0 %v1352
      %v1687 = vpop.f32.mrb[0].mxu0
      %v1688 = vadd.f32 %v1111, %v1687
      %v1689 = vpop.f32.mrb[0].mxu0
      %1690 = vmatprep.mubr.f32.mxu0 0.0
      %1691 = vmatmul.mubr.f32.gmra.mrb[0].mxu0 %v1355
      %v1692 = vpop.f32.mrb[0].mxu0
      %v1693 = vadd.f32 %v1116, %v1692
      %v1694 = vpop.f32.mrb[0].mxu0
      %1695 = vmatprep.mubr.f32.mxu0 0.0
      %1696 = vmatmul.mubr.f32.gmra.mrb[0].mxu0 %v1358
      %v1697 = vpop.f32.mrb[0].mxu0
      %v1698 = vadd.f32 %v1121, %v1697
      %v1699 = vpop.f32.mrb[0].mxu0
      %1700 = vmatprep.mubr.f32.mxu0 0.0
      %1701 = vmatmul.mubr.f32.gmra.mrb[0].mxu0 %v1361
      %v1702 = vpop.f32.mrb[0].mxu0
      %v1703 = vadd.f32 %v1126, %v1702
      %v1704 = vpop.f32.mrb[0].mxu0
      %1705 = vmatprep.mubr.f32.mxu0 0.0
      %1706 = vmatmul.mubr.f32.gmra.mrb[0].mxu0 %v1364
      %v1707 = vpop.f32.mrb[0].mxu0
      %v1708 = vadd.f32 %v1131, %v1707
      %v1709 = vpop.f32.mrb[0].mxu0
      %1710 = vmatprep.mubr.f32.mxu0 0.0
      %1711 = vmatmul.mubr.f32.gmra.mrb[0].mxu0 %v1367
      %v1712 = vpop.f32.mrb[0].mxu0
      %v1713 = vadd.f32 %v1136, %v1712
      %v1714 = vpop.f32.mrb[0].mxu0
      %1715 = vmatprep.mubr.f32.mxu0 0.0
      %1716 = vmatmul.mubr.f32.gmra.mrb[0].mxu0 %v1370
      %v1717 = vpop.f32.mrb[0].mxu0
      %v1718 = vadd.f32 %v1141, %v1717
      %v1719 = vpop.f32.mrb[0].mxu0
      %1720 = vmatprep.mubr.f32.mxu0 0.0
      %1721 = vmatmul.mubr.f32.gmra.mrb[0].mxu0 %v1373
      %v1722 = vpop.f32.mrb[0].mxu0
      %v1723 = vadd.f32 %v1146, %v1722
      %v1724 = vpop.f32.mrb[0].mxu0
      %1725 = vmatprep.mubr.f32.mxu0 0.0
      %1726 = vmatmul.mubr.f32.gmra.mrb[0].mxu0 %v1376
      %v1727 = vpop.f32.mrb[0].mxu0
      %v1728 = vadd.f32 %v1151, %v1727
      %v1729 = vpop.f32.mrb[0].mxu0
      %1730 = vmatprep.mubr.f32.mxu0 0.0
      %1731 = vmatmul.mubr.f32.gmra.mrb[0].mxu0 %v1379
      %v1732 = vpop.f32.mrb[0].mxu0
      %v1733 = vadd.f32 %v1156, %v1732
      %v1734 = vpop.f32.mrb[0].mxu0
      %1735 = vmatprep.mubr.f32.mxu0 0.0
      %1736 = vmatmul.mubr.f32.gmra.mrb[0].mxu0 %v1382
      %v1737 = vpop.f32.mrb[0].mxu0
      %v1738 = vadd.f32 %v1161, %v1737
      %v1739 = vpop.f32.mrb[0].mxu0
      %1740 = vmatprep.mubr.f32.mxu0 0.0
      %1741 = vmatmul.mubr.f32.gmra.mrb[0].mxu0 %v1385
      %v1742 = vpop.f32.mrb[0].mxu0
      %v1743 = vadd.f32 %v1166, %v1742
      %v1744 = vpop.f32.mrb[0].mxu0
      %1745 = vmatprep.mubr.f32.mxu0 0.0
      %1746 = vmatmul.mubr.f32.gmra.mrb[0].mxu0 %v1388
      %v1747 = vpop.f32.mrb[0].mxu0
      %v1748 = vadd.f32 %v1171, %v1747
      %v1749 = vpop.f32.mrb[0].mxu0
      %1750 = vmatprep.mubr.f32.mxu0 0.0
      %1751 = vmatmul.mubr.f32.gmra.mrb[0].mxu0 %v1391
      %v1752 = vpop.f32.mrb[0].mxu0
      %v1753 = vadd.f32 %v1176, %v1752
      %v1754 = vpop.f32.mrb[0].mxu0
      %1755 = vmatprep.mubr.f32.mxu0 0.0
      %1756 = vmatmul.mubr.f32.gmra.mrb[0].mxu0 %v1394
      %v1757 = vpop.f32.mrb[0].mxu0
      %v1758 = vadd.f32 %v1181, %v1757
      %v1759 = vpop.f32.mrb[0].mxu0
      %1760 = vmatprep.mubr.f32.mxu0 0.0
      %1761 = vmatmul.mubr.f32.gmra.mrb[0].mxu0 %v1397
      %v1762 = vpop.f32.mrb[0].mxu0
      %v1763 = vadd.f32 %v1186, %v1762
      %v1764 = vpop.f32.mrb[0].mxu0
      %1765 = vmatprep.mubr.f32.mxu0 0.0
      %1766 = vmatmul.mubr.f32.gmra.mrb[0].mxu0 %v1400
      %v1767 = vpop.f32.mrb[0].mxu0
      %v1768 = vadd.f32 %v1191, %v1767
      %v1769 = vpop.f32.mrb[0].mxu0
      %1770 = vmatprep.mubr.f32.mxu0 0.0
      %1771 = vmatmul.mubr.f32.gmra.mrb[0].mxu0 %v1403
      %v1772 = vpop.f32.mrb[0].mxu0
      %v1773 = vadd.f32 %v1196, %v1772
      %v1774 = vpop.f32.mrb[0].mxu0
      %1775 = vmatprep.mubr.f32.mxu0 0.0
      %1776 = vmatmul.mubr.f32.gmra.mrb[0].mxu0 %v1406
      %v1777 = vpop.f32.mrb[0].mxu0
      %v1778 = vadd.f32 %v1201, %v1777
      %v1779 = vpop.f32.mrb[0].mxu0
      %1780 = vmatprep.mubr.f32.mxu0 0.0
      %1781 = vmatmul.mubr.f32.gmra.mrb[0].mxu0 %v1409
      %v1782 = vpop.f32.mrb[0].mxu0
      %v1783 = vadd.f32 %v1206, %v1782
      %v1784 = vpop.f32.mrb[0].mxu0
      %1785 = vmatprep.mubr.f32.mxu0 0.0
      %1786 = vmatmul.mubr.f32.gmra.mrb[0].mxu0 %v1412
      %v1787 = vpop.f32.mrb[0].mxu0
      %v1788 = vadd.f32 %v1211, %v1787
      %v1789 = vpop.f32.mrb[0].mxu0
      %1790 = vmatprep.mubr.f32.mxu0 0.0
      %1791 = vmatmul.mubr.f32.gmra.mrb[0].mxu0 %v1415
      %v1792 = vpop.f32.mrb[0].mxu0
      %v1793 = vadd.f32 %v1216, %v1792
      %v1794 = vpop.f32.mrb[0].mxu0
      %1795 = vmatprep.mubr.f32.mxu0 0.0
      %1796 = vmatmul.mubr.f32.gmra.mrb[0].mxu0 %v1418
      %v1797 = vpop.f32.mrb[0].mxu0
      %v1798 = vadd.f32 %v1221, %v1797
      %v1799 = vpop.f32.mrb[0].mxu0
      %1800 = vmatprep.mubr.f32.mxu0 0.0
      %1801 = vmatmul.mubr.f32.gmra.mrb[0].mxu0 %v1421
      %v1802 = vpop.f32.mrb[0].mxu0
      %v1803 = vadd.f32 %v1226, %v1802
      %v1804 = vpop.f32.mrb[0].mxu0
      %1805 = vmatprep.mubr.f32.mxu0 0.0
      %1806 = vmatmul.mubr.f32.gmra.mrb[0].mxu0 %v1424
      %v1807 = vpop.f32.mrb[0].mxu0
      %v1808 = vadd.f32 %v1231, %v1807
      %v1809 = vpop.f32.mrb[0].mxu0
      %1810 = vdwg.mxu0
      %v1811 = vld [vmem:[%s5 + $0x40] sm:$0xff]
      %v1812 = vld [vmem:[%s5 + $0x48] sm:$0xff]
      %v1813 = vld [vmem:[%s5 + $0x50] sm:$0xff]
      %v1814 = vld [vmem:[%s5 + $0x58] sm:$0xff]
      %v1816 = vsel %vm656, %v584, 0
      %v1819 = vsel %vm656, %v585, 0
      %v1822 = vsel %vm656, %v586, 0
      %v1825 = vsel %vm656, %v587, 0
      %v1828 = vsel %vm656, %v588, 0
      %v1831 = vsel %vm656, %v589, 0
      %v1834 = vsel %vm656, %v590, 0
      %v1837 = vsel %vm656, %v591, 0
      %v1840 = vsel %vm656, %v592, 0
      %v1843 = vsel %vm656, %v593, 0
      %v1846 = vsel %vm656, %v594, 0
      %v1849 = vsel %vm656, %v595, 0
      %v1852 = vsel %vm656, %v596, 0
      %v1855 = vsel %vm656, %v597, 0
      %v1858 = vsel %vm656, %v598, 0
      %v1861 = vsel %vm656, %v599, 0
      %v1864 = vsel %vm656, %v600, 0
      %v1867 = vsel %vm656, %v601, 0
      %v1870 = vsel %vm656, %v602, 0
      %v1873 = vsel %vm656, %v603, 0
      %v1876 = vsel %vm656, %v604, 0
      %v1879 = vsel %vm656, %v605, 0
      %v1882 = vsel %vm656, %v606, 0
      %v1885 = vsel %vm656, %v607, 0
      %v1888 = vsel %vm656, %v608, 0
      %v1891 = vsel %vm656, %v609, 0
      %v1894 = vsel %vm656, %v610, 0
      %v1897 = vsel %vm656, %v611, 0
      %v1900 = vsel %vm656, %v612, 0
      %v1903 = vsel %vm656, %v613, 0
      %v1906 = vsel %vm656, %v614, 0
      %v1909 = vsel %vm656, %v615, 0
      %v1912 = vsel %vm656, %v616, 0
      %v1915 = vsel %vm656, %v617, 0
      %v1918 = vsel %vm656, %v618, 0
      %v1921 = vsel %vm656, %v619, 0
      %v1924 = vsel %vm656, %v620, 0
      %v1927 = vsel %vm656, %v621, 0
      %v1930 = vsel %vm656, %v622, 0
      %v1933 = vsel %vm656, %v623, 0
      %v1936 = vsel %vm656, %v624, 0
      %v1939 = vsel %vm656, %v625, 0
      %v1942 = vsel %vm656, %v626, 0
      %v1945 = vsel %vm656, %v627, 0
      %v1948 = vsel %vm656, %v628, 0
      %v1951 = vsel %vm656, %v629, 0
      %v1954 = vsel %vm656, %v630, 0
      %v1957 = vsel %vm656, %v631, 0
      %v1960 = vsel %vm656, %v632, 0
      %v1963 = vsel %vm656, %v633, 0
      %v1966 = vsel %vm656, %v634, 0
      %v1969 = vsel %vm656, %v635, 0
      %v1972 = vsel %vm656, %v636, 0
      %v1975 = vsel %vm656, %v637, 0
      %v1978 = vsel %vm656, %v638, 0
      %v1981 = vsel %vm656, %v639, 0
      %v1984 = vsel %vm656, %v640, 0
      %v1987 = vsel %vm656, %v641, 0
      %v1990 = vsel %vm656, %v642, 0
      %v1993 = vsel %vm656, %v643, 0
      %v1996 = vsel %vm656, %v644, 0
      %v1999 = vsel %vm656, %v645, 0
      %v2002 = vsel %vm656, %v646, 0
      %v2005 = vsel %vm656, %v647, 0
      %2007 = vmatprep.subr.mxu0 0.0
      %2008 = vmatpush1.msra.mxu0 %v1811
      %2009 = vmatprep.subr.mxu0 0.0
      %2010 = vmatpush1.msra.mxu0 %v1812
      %2011 = vmatprep.subr.mxu0 0.0
      %2012 = vmatpush1.msra.mxu0 %v1813
      %2013 = vmatprep.subr.mxu0 0.0
      %2014 = vmatpush1.msra.mxu0 %v1814
      %2015 = vmatprep.subr.mxu0 0.0
      %2016 = vmatpush1.msra.mxu0 0.0
      %2017 = vmatprep.subr.mxu0 0.0
      %2018 = vmatpush1.msra.mxu0 0.0
      %2019 = vmatprep.subr.mxu0 0.0
      %2020 = vmatpush1.msra.mxu0 0.0
      %2021 = vmatprep.subr.mxu0 0.0
      %2022 = vmatpush1.msra.mxu0 0.0
      %2023 = vmatprep.subr.mxu0 0.0
      %2024 = vmatpush1.msra.mxu0 0.0
      %2025 = vmatprep.subr.mxu0 0.0
      %2026 = vmatpush1.msra.mxu0 0.0
      %2027 = vmatprep.subr.mxu0 0.0
      %2028 = vmatpush1.msra.mxu0 0.0
      %2029 = vmatprep.subr.mxu0 0.0
      %2030 = vmatpush1.msra.mxu0 0.0
      %2031 = vmatprep.subr.mxu0 0.0
      %2032 = vmatpush1.msra.mxu0 0.0
      %2033 = vmatprep.subr.mxu0 0.0
      %2034 = vmatpush1.msra.mxu0 0.0
      %2035 = vmatprep.subr.mxu0 0.0
      %2036 = vmatpush1.msra.mxu0 0.0
      %2037 = vmatprep.subr.mxu0 0.0
      %2038 = vmatpush1.msra.mxu0 0.0
      %2039 = vmatprep.subr.mxu0 0.0
      %2040 = vmatpush1.msra.mxu0 0.0
      %2041 = vmatprep.subr.mxu0 0.0
      %2042 = vmatpush1.msra.mxu0 0.0
      %2043 = vmatprep.subr.mxu0 0.0
      %2044 = vmatpush1.msra.mxu0 0.0
      %2045 = vmatprep.subr.mxu0 0.0
      %2046 = vmatpush1.msra.mxu0 0.0
      %2047 = vmatprep.subr.mxu0 0.0
      %2048 = vmatpush1.msra.mxu0 0.0
      %2049 = vmatprep.subr.mxu0 0.0
      %2050 = vmatpush1.msra.mxu0 0.0
      %2051 = vmatprep.subr.mxu0 0.0
      %2052 = vmatpush1.msra.mxu0 0.0
      %2053 = vmatprep.subr.mxu0 0.0
      %2054 = vmatpush1.msra.mxu0 0.0
      %2055 = vmatprep.subr.mxu0 0.0
      %2056 = vmatpush1.msra.mxu0 0.0
      %2057 = vmatprep.subr.mxu0 0.0
      %2058 = vmatpush1.msra.mxu0 0.0
      %2059 = vmatprep.subr.mxu0 0.0
      %2060 = vmatpush1.msra.mxu0 0.0
      %2061 = vmatprep.subr.mxu0 0.0
      %2062 = vmatpush1.msra.mxu0 0.0
      %2063 = vmatprep.subr.mxu0 0.0
      %2064 = vmatpush1.msra.mxu0 0.0
      %2065 = vmatprep.subr.mxu0 0.0
      %2066 = vmatpush1.msra.mxu0 0.0
      %2067 = vmatprep.subr.mxu0 0.0
      %2068 = vmatpush1.msra.mxu0 0.0
      %2069 = vmatprep.subr.mxu0 0.0
      %2070 = vmatpush1.msra.mxu0 0.0
      %2071 = vmatprep.mubr.f32.mxu0 0.0
      %2072 = vmatmul.mubr.f32.gmra.mrb[0].mxu0 %v1816
      %v2073 = vpop.f32.mrb[0].mxu0
      %v2074 = vadd.f32 0.0, %v2073
      %v2075 = vpop.f32.mrb[0].mxu0
      %2076 = vmatprep.mubr.f32.mxu0 0.0
      %2077 = vmatmul.mubr.f32.gmra.mrb[0].mxu0 %v1819
      %v2078 = vpop.f32.mrb[0].mxu0
      %v2079 = vadd.f32 0.0, %v2078
      %v2080 = vpop.f32.mrb[0].mxu0
      %2081 = vmatprep.mubr.f32.mxu0 0.0
      %2082 = vmatmul.mubr.f32.gmra.mrb[0].mxu0 %v1822
      %v2083 = vpop.f32.mrb[0].mxu0
      %v2084 = vadd.f32 0.0, %v2083
      %v2085 = vpop.f32.mrb[0].mxu0
      %2086 = vmatprep.mubr.f32.mxu0 0.0
      %2087 = vmatmul.mubr.f32.gmra.mrb[0].mxu0 %v1825
      %v2088 = vpop.f32.mrb[0].mxu0
      %v2089 = vadd.f32 0.0, %v2088
      %v2090 = vpop.f32.mrb[0].mxu0
      %2091 = vmatprep.mubr.f32.mxu0 0.0
      %2092 = vmatmul.mubr.f32.gmra.mrb[0].mxu0 %v1828
      %v2093 = vpop.f32.mrb[0].mxu0
      %v2094 = vadd.f32 0.0, %v2093
      %v2095 = vpop.f32.mrb[0].mxu0
      %2096 = vmatprep.mubr.f32.mxu0 0.0
      %2097 = vmatmul.mubr.f32.gmra.mrb[0].mxu0 %v1831
      %v2098 = vpop.f32.mrb[0].mxu0
      %v2099 = vadd.f32 0.0, %v2098
      %v2100 = vpop.f32.mrb[0].mxu0
      %2101 = vmatprep.mubr.f32.mxu0 0.0
      %2102 = vmatmul.mubr.f32.gmra.mrb[0].mxu0 %v1834
      %v2103 = vpop.f32.mrb[0].mxu0
      %v2104 = vadd.f32 0.0, %v2103
      %v2105 = vpop.f32.mrb[0].mxu0
      %2106 = vmatprep.mubr.f32.mxu0 0.0
      %2107 = vmatmul.mubr.f32.gmra.mrb[0].mxu0 %v1837
      %v2108 = vpop.f32.mrb[0].mxu0
      %v2109 = vadd.f32 0.0, %v2108
      %v2110 = vpop.f32.mrb[0].mxu0
      %2111 = vmatprep.mubr.f32.mxu0 0.0
      %2112 = vmatmul.mubr.f32.gmra.mrb[0].mxu0 %v1840
      %v2113 = vpop.f32.mrb[0].mxu0
      %v2114 = vadd.f32 0.0, %v2113
      %v2115 = vpop.f32.mrb[0].mxu0
      %2116 = vmatprep.mubr.f32.mxu0 0.0
      %2117 = vmatmul.mubr.f32.gmra.mrb[0].mxu0 %v1843
      %v2118 = vpop.f32.mrb[0].mxu0
      %v2119 = vadd.f32 0.0, %v2118
      %v2120 = vpop.f32.mrb[0].mxu0
      %2121 = vmatprep.mubr.f32.mxu0 0.0
      %2122 = vmatmul.mubr.f32.gmra.mrb[0].mxu0 %v1846
      %v2123 = vpop.f32.mrb[0].mxu0
      %v2124 = vadd.f32 0.0, %v2123
      %v2125 = vpop.f32.mrb[0].mxu0
      %2126 = vmatprep.mubr.f32.mxu0 0.0
      %2127 = vmatmul.mubr.f32.gmra.mrb[0].mxu0 %v1849
      %v2128 = vpop.f32.mrb[0].mxu0
      %v2129 = vadd.f32 0.0, %v2128
      %v2130 = vpop.f32.mrb[0].mxu0
      %2131 = vmatprep.mubr.f32.mxu0 0.0
      %2132 = vmatmul.mubr.f32.gmra.mrb[0].mxu0 %v1852
      %v2133 = vpop.f32.mrb[0].mxu0
      %v2134 = vadd.f32 0.0, %v2133
      %v2135 = vpop.f32.mrb[0].mxu0
      %2136 = vmatprep.mubr.f32.mxu0 0.0
      %2137 = vmatmul.mubr.f32.gmra.mrb[0].mxu0 %v1855
      %v2138 = vpop.f32.mrb[0].mxu0
      %v2139 = vadd.f32 0.0, %v2138
      %v2140 = vpop.f32.mrb[0].mxu0
      %2141 = vmatprep.mubr.f32.mxu0 0.0
      %2142 = vmatmul.mubr.f32.gmra.mrb[0].mxu0 %v1858
      %v2143 = vpop.f32.mrb[0].mxu0
      %v2144 = vadd.f32 0.0, %v2143
      %v2145 = vpop.f32.mrb[0].mxu0
      %2146 = vmatprep.mubr.f32.mxu0 0.0
      %2147 = vmatmul.mubr.f32.gmra.mrb[0].mxu0 %v1861
      %v2148 = vpop.f32.mrb[0].mxu0
      %v2149 = vadd.f32 0.0, %v2148
      %v2150 = vpop.f32.mrb[0].mxu0
      %2151 = vmatprep.mubr.f32.mxu0 0.0
      %2152 = vmatmul.mubr.f32.gmra.mrb[0].mxu0 %v1864
      %v2153 = vpop.f32.mrb[0].mxu0
      %v2154 = vadd.f32 0.0, %v2153
      %v2155 = vpop.f32.mrb[0].mxu0
      %2156 = vmatprep.mubr.f32.mxu0 0.0
      %2157 = vmatmul.mubr.f32.gmra.mrb[0].mxu0 %v1867
      %v2158 = vpop.f32.mrb[0].mxu0
      %v2159 = vadd.f32 0.0, %v2158
      %v2160 = vpop.f32.mrb[0].mxu0
      %2161 = vmatprep.mubr.f32.mxu0 0.0
      %2162 = vmatmul.mubr.f32.gmra.mrb[0].mxu0 %v1870
      %v2163 = vpop.f32.mrb[0].mxu0
      %v2164 = vadd.f32 0.0, %v2163
      %v2165 = vpop.f32.mrb[0].mxu0
      %2166 = vmatprep.mubr.f32.mxu0 0.0
      %2167 = vmatmul.mubr.f32.gmra.mrb[0].mxu0 %v1873
      %v2168 = vpop.f32.mrb[0].mxu0
      %v2169 = vadd.f32 0.0, %v2168
      %v2170 = vpop.f32.mrb[0].mxu0
      %2171 = vmatprep.mubr.f32.mxu0 0.0
      %2172 = vmatmul.mubr.f32.gmra.mrb[0].mxu0 %v1876
      %v2173 = vpop.f32.mrb[0].mxu0
      %v2174 = vadd.f32 0.0, %v2173
      %v2175 = vpop.f32.mrb[0].mxu0
      %2176 = vmatprep.mubr.f32.mxu0 0.0
      %2177 = vmatmul.mubr.f32.gmra.mrb[0].mxu0 %v1879
      %v2178 = vpop.f32.mrb[0].mxu0
      %v2179 = vadd.f32 0.0, %v2178
      %v2180 = vpop.f32.mrb[0].mxu0
      %2181 = vmatprep.mubr.f32.mxu0 0.0
      %2182 = vmatmul.mubr.f32.gmra.mrb[0].mxu0 %v1882
      %v2183 = vpop.f32.mrb[0].mxu0
      %v2184 = vadd.f32 0.0, %v2183
      %v2185 = vpop.f32.mrb[0].mxu0
      %2186 = vmatprep.mubr.f32.mxu0 0.0
      %2187 = vmatmul.mubr.f32.gmra.mrb[0].mxu0 %v1885
      %v2188 = vpop.f32.mrb[0].mxu0
      %v2189 = vadd.f32 0.0, %v2188
      %v2190 = vpop.f32.mrb[0].mxu0
      %2191 = vmatprep.mubr.f32.mxu0 0.0
      %2192 = vmatmul.mubr.f32.gmra.mrb[0].mxu0 %v1888
      %v2193 = vpop.f32.mrb[0].mxu0
      %v2194 = vadd.f32 0.0, %v2193
      %v2195 = vpop.f32.mrb[0].mxu0
      %2196 = vmatprep.mubr.f32.mxu0 0.0
      %2197 = vmatmul.mubr.f32.gmra.mrb[0].mxu0 %v1891
      %v2198 = vpop.f32.mrb[0].mxu0
      %v2199 = vadd.f32 0.0, %v2198
      %v2200 = vpop.f32.mrb[0].mxu0
      %2201 = vmatprep.mubr.f32.mxu0 0.0
      %2202 = vmatmul.mubr.f32.gmra.mrb[0].mxu0 %v1894
      %v2203 = vpop.f32.mrb[0].mxu0
      %v2204 = vadd.f32 0.0, %v2203
      %v2205 = vpop.f32.mrb[0].mxu0
      %2206 = vmatprep.mubr.f32.mxu0 0.0
      %2207 = vmatmul.mubr.f32.gmra.mrb[0].mxu0 %v1897
      %v2208 = vpop.f32.mrb[0].mxu0
      %v2209 = vadd.f32 0.0, %v2208
      %v2210 = vpop.f32.mrb[0].mxu0
      %2211 = vmatprep.mubr.f32.mxu0 0.0
      %2212 = vmatmul.mubr.f32.gmra.mrb[0].mxu0 %v1900
      %v2213 = vpop.f32.mrb[0].mxu0
      %v2214 = vadd.f32 0.0, %v2213
      %v2215 = vpop.f32.mrb[0].mxu0
      %2216 = vmatprep.mubr.f32.mxu0 0.0
      %2217 = vmatmul.mubr.f32.gmra.mrb[0].mxu0 %v1903
      %v2218 = vpop.f32.mrb[0].mxu0
      %v2219 = vadd.f32 0.0, %v2218
      %v2220 = vpop.f32.mrb[0].mxu0
      %2221 = vmatprep.mubr.f32.mxu0 0.0
      %2222 = vmatmul.mubr.f32.gmra.mrb[0].mxu0 %v1906
      %v2223 = vpop.f32.mrb[0].mxu0
      %v2224 = vadd.f32 0.0, %v2223
      %v2225 = vpop.f32.mrb[0].mxu0
      %2226 = vmatprep.mubr.f32.mxu0 0.0
      %2227 = vmatmul.mubr.f32.gmra.mrb[0].mxu0 %v1909
      %v2228 = vpop.f32.mrb[0].mxu0
      %v2229 = vadd.f32 0.0, %v2228
      %v2230 = vpop.f32.mrb[0].mxu0
      %2231 = vmatprep.mubr.f32.mxu0 0.0
      %2232 = vmatmul.mubr.f32.gmra.mrb[0].mxu0 %v1912
      %v2233 = vpop.f32.mrb[0].mxu0
      %v2234 = vadd.f32 0.0, %v2233
      %v2235 = vpop.f32.mrb[0].mxu0
      %2236 = vmatprep.mubr.f32.mxu0 0.0
      %2237 = vmatmul.mubr.f32.gmra.mrb[0].mxu0 %v1915
      %v2238 = vpop.f32.mrb[0].mxu0
      %v2239 = vadd.f32 0.0, %v2238
      %v2240 = vpop.f32.mrb[0].mxu0
      %2241 = vmatprep.mubr.f32.mxu0 0.0
      %2242 = vmatmul.mubr.f32.gmra.mrb[0].mxu0 %v1918
      %v2243 = vpop.f32.mrb[0].mxu0
      %v2244 = vadd.f32 0.0, %v2243
      %v2245 = vpop.f32.mrb[0].mxu0
      %2246 = vmatprep.mubr.f32.mxu0 0.0
      %2247 = vmatmul.mubr.f32.gmra.mrb[0].mxu0 %v1921
      %v2248 = vpop.f32.mrb[0].mxu0
      %v2249 = vadd.f32 0.0, %v2248
      %v2250 = vpop.f32.mrb[0].mxu0
      %2251 = vmatprep.mubr.f32.mxu0 0.0
      %2252 = vmatmul.mubr.f32.gmra.mrb[0].mxu0 %v1924
      %v2253 = vpop.f32.mrb[0].mxu0
      %v2254 = vadd.f32 0.0, %v2253
      %v2255 = vpop.f32.mrb[0].mxu0
      %2256 = vmatprep.mubr.f32.mxu0 0.0
      %2257 = vmatmul.mubr.f32.gmra.mrb[0].mxu0 %v1927
      %v2258 = vpop.f32.mrb[0].mxu0
      %v2259 = vadd.f32 0.0, %v2258
      %v2260 = vpop.f32.mrb[0].mxu0
      %2261 = vmatprep.mubr.f32.mxu0 0.0
      %2262 = vmatmul.mubr.f32.gmra.mrb[0].mxu0 %v1930
      %v2263 = vpop.f32.mrb[0].mxu0
      %v2264 = vadd.f32 0.0, %v2263
      %v2265 = vpop.f32.mrb[0].mxu0
      %2266 = vmatprep.mubr.f32.mxu0 0.0
      %2267 = vmatmul.mubr.f32.gmra.mrb[0].mxu0 %v1933
      %v2268 = vpop.f32.mrb[0].mxu0
      %v2269 = vadd.f32 0.0, %v2268
      %v2270 = vpop.f32.mrb[0].mxu0
      %2271 = vmatprep.mubr.f32.mxu0 0.0
      %2272 = vmatmul.mubr.f32.gmra.mrb[0].mxu0 %v1936
      %v2273 = vpop.f32.mrb[0].mxu0
      %v2274 = vadd.f32 0.0, %v2273
      %v2275 = vpop.f32.mrb[0].mxu0
      %2276 = vmatprep.mubr.f32.mxu0 0.0
      %2277 = vmatmul.mubr.f32.gmra.mrb[0].mxu0 %v1939
      %v2278 = vpop.f32.mrb[0].mxu0
      %v2279 = vadd.f32 0.0, %v2278
      %v2280 = vpop.f32.mrb[0].mxu0
      %2281 = vmatprep.mubr.f32.mxu0 0.0
      %2282 = vmatmul.mubr.f32.gmra.mrb[0].mxu0 %v1942
      %v2283 = vpop.f32.mrb[0].mxu0
      %v2284 = vadd.f32 0.0, %v2283
      %v2285 = vpop.f32.mrb[0].mxu0
      %2286 = vmatprep.mubr.f32.mxu0 0.0
      %2287 = vmatmul.mubr.f32.gmra.mrb[0].mxu0 %v1945
      %v2288 = vpop.f32.mrb[0].mxu0
      %v2289 = vadd.f32 0.0, %v2288
      %v2290 = vpop.f32.mrb[0].mxu0
      %2291 = vmatprep.mubr.f32.mxu0 0.0
      %2292 = vmatmul.mubr.f32.gmra.mrb[0].mxu0 %v1948
      %v2293 = vpop.f32.mrb[0].mxu0
      %v2294 = vadd.f32 0.0, %v2293
      %v2295 = vpop.f32.mrb[0].mxu0
      %2296 = vmatprep.mubr.f32.mxu0 0.0
      %2297 = vmatmul.mubr.f32.gmra.mrb[0].mxu0 %v1951
      %v2298 = vpop.f32.mrb[0].mxu0
      %v2299 = vadd.f32 0.0, %v2298
      %v2300 = vpop.f32.mrb[0].mxu0
      %2301 = vmatprep.mubr.f32.mxu0 0.0
      %2302 = vmatmul.mubr.f32.gmra.mrb[0].mxu0 %v1954
      %v2303 = vpop.f32.mrb[0].mxu0
      %v2304 = vadd.f32 0.0, %v2303
      %v2305 = vpop.f32.mrb[0].mxu0
      %2306 = vmatprep.mubr.f32.mxu0 0.0
      %2307 = vmatmul.mubr.f32.gmra.mrb[0].mxu0 %v1957
      %v2308 = vpop.f32.mrb[0].mxu0
      %v2309 = vadd.f32 0.0, %v2308
      %v2310 = vpop.f32.mrb[0].mxu0
      %2311 = vmatprep.mubr.f32.mxu0 0.0
      %2312 = vmatmul.mubr.f32.gmra.mrb[0].mxu0 %v1960
      %v2313 = vpop.f32.mrb[0].mxu0
      %v2314 = vadd.f32 0.0, %v2313
      %v2315 = vpop.f32.mrb[0].mxu0
      %2316 = vmatprep.mubr.f32.mxu0 0.0
      %2317 = vmatmul.mubr.f32.gmra.mrb[0].mxu0 %v1963
      %v2318 = vpop.f32.mrb[0].mxu0
      %v2319 = vadd.f32 0.0, %v2318
      %v2320 = vpop.f32.mrb[0].mxu0
      %2321 = vmatprep.mubr.f32.mxu0 0.0
      %2322 = vmatmul.mubr.f32.gmra.mrb[0].mxu0 %v1966
      %v2323 = vpop.f32.mrb[0].mxu0
      %v2324 = vadd.f32 0.0, %v2323
      %v2325 = vpop.f32.mrb[0].mxu0
      %2326 = vmatprep.mubr.f32.mxu0 0.0
      %2327 = vmatmul.mubr.f32.gmra.mrb[0].mxu0 %v1969
      %v2328 = vpop.f32.mrb[0].mxu0
      %v2329 = vadd.f32 0.0, %v2328
      %v2330 = vpop.f32.mrb[0].mxu0
      %2331 = vmatprep.mubr.f32.mxu0 0.0
      %2332 = vmatmul.mubr.f32.gmra.mrb[0].mxu0 %v1972
      %v2333 = vpop.f32.mrb[0].mxu0
      %v2334 = vadd.f32 0.0, %v2333
      %v2335 = vpop.f32.mrb[0].mxu0
      %2336 = vmatprep.mubr.f32.mxu0 0.0
      %2337 = vmatmul.mubr.f32.gmra.mrb[0].mxu0 %v1975
      %v2338 = vpop.f32.mrb[0].mxu0
      %v2339 = vadd.f32 0.0, %v2338
      %v2340 = vpop.f32.mrb[0].mxu0
      %2341 = vmatprep.mubr.f32.mxu0 0.0
      %2342 = vmatmul.mubr.f32.gmra.mrb[0].mxu0 %v1978
      %v2343 = vpop.f32.mrb[0].mxu0
      %v2344 = vadd.f32 0.0, %v2343
      %v2345 = vpop.f32.mrb[0].mxu0
      %2346 = vmatprep.mubr.f32.mxu0 0.0
      %2347 = vmatmul.mubr.f32.gmra.mrb[0].mxu0 %v1981
      %v2348 = vpop.f32.mrb[0].mxu0
      %v2349 = vadd.f32 0.0, %v2348
      %v2350 = vpop.f32.mrb[0].mxu0
      %2351 = vmatprep.mubr.f32.mxu0 0.0
      %2352 = vmatmul.mubr.f32.gmra.mrb[0].mxu0 %v1984
      %v2353 = vpop.f32.mrb[0].mxu0
      %v2354 = vadd.f32 0.0, %v2353
      %v2355 = vpop.f32.mrb[0].mxu0
      %2356 = vmatprep.mubr.f32.mxu0 0.0
      %2357 = vmatmul.mubr.f32.gmra.mrb[0].mxu0 %v1987
      %v2358 = vpop.f32.mrb[0].mxu0
      %v2359 = vadd.f32 0.0, %v2358
      %v2360 = vpop.f32.mrb[0].mxu0
      %2361 = vmatprep.mubr.f32.mxu0 0.0
      %2362 = vmatmul.mubr.f32.gmra.mrb[0].mxu0 %v1990
      %v2363 = vpop.f32.mrb[0].mxu0
      %v2364 = vadd.f32 0.0, %v2363
      %v2365 = vpop.f32.mrb[0].mxu0
      %2366 = vmatprep.mubr.f32.mxu0 0.0
      %2367 = vmatmul.mubr.f32.gmra.mrb[0].mxu0 %v1993
      %v2368 = vpop.f32.mrb[0].mxu0
      %v2369 = vadd.f32 0.0, %v2368
      %v2370 = vpop.f32.mrb[0].mxu0
      %2371 = vmatprep.mubr.f32.mxu0 0.0
      %2372 = vmatmul.mubr.f32.gmra.mrb[0].mxu0 %v1996
      %v2373 = vpop.f32.mrb[0].mxu0
      %v2374 = vadd.f32 0.0, %v2373
      %v2375 = vpop.f32.mrb[0].mxu0
      %2376 = vmatprep.mubr.f32.mxu0 0.0
      %2377 = vmatmul.mubr.f32.gmra.mrb[0].mxu0 %v1999
      %v2378 = vpop.f32.mrb[0].mxu0
      %v2379 = vadd.f32 0.0, %v2378
      %v2380 = vpop.f32.mrb[0].mxu0
      %2381 = vmatprep.mubr.f32.mxu0 0.0
      %2382 = vmatmul.mubr.f32.gmra.mrb[0].mxu0 %v2002
      %v2383 = vpop.f32.mrb[0].mxu0
      %v2384 = vadd.f32 0.0, %v2383
      %v2385 = vpop.f32.mrb[0].mxu0
      %2386 = vmatprep.mubr.f32.mxu0 0.0
      %2387 = vmatmul.mubr.f32.gmra.mrb[0].mxu0 %v2005
      %v2388 = vpop.f32.mrb[0].mxu0
      %v2389 = vadd.f32 0.0, %v2388
      %v2390 = vpop.f32.mrb[0].mxu0
      %2391 = vdwg.mxu0
      %v2392 = vadd.f32 %v1493, %v2074
      %v2393 = vadd.f32 %v1498, %v2079
      %v2394 = vadd.f32 %v1503, %v2084
      %v2395 = vadd.f32 %v1508, %v2089
      %v2396 = vadd.f32 %v1513, %v2094
      %v2397 = vadd.f32 %v1518, %v2099
      %v2398 = vadd.f32 %v1523, %v2104
      %v2399 = vadd.f32 %v1528, %v2109
      %v2400 = vadd.f32 %v1533, %v2114
      %v2401 = vadd.f32 %v1538, %v2119
      %v2402 = vadd.f32 %v1543, %v2124
      %v2403 = vadd.f32 %v1548, %v2129
      %v2404 = vadd.f32 %v1553, %v2134
      %v2405 = vadd.f32 %v1558, %v2139
      %v2406 = vadd.f32 %v1563, %v2144
      %v2407 = vadd.f32 %v1568, %v2149
      %v2408 = vadd.f32 %v1573, %v2154
      %v2409 = vadd.f32 %v1578, %v2159
      %v2410 = vadd.f32 %v1583, %v2164
      %v2411 = vadd.f32 %v1588, %v2169
      %v2412 = vadd.f32 %v1593, %v2174
      %v2413 = vadd.f32 %v1598, %v2179
      %v2414 = vadd.f32 %v1603, %v2184
      %v2415 = vadd.f32 %v1608, %v2189
      %v2416 = vadd.f32 %v1613, %v2194
      %v2417 = vadd.f32 %v1618, %v2199
      %v2418 = vadd.f32 %v1623, %v2204
      %v2419 = vadd.f32 %v1628, %v2209
      %v2420 = vadd.f32 %v1633, %v2214
      %v2421 = vadd.f32 %v1638, %v2219
      %v2422 = vadd.f32 %v1643, %v2224
      %v2423 = vadd.f32 %v1648, %v2229
      %v2424 = vadd.f32 %v1653, %v2234
      %v2425 = vadd.f32 %v1658, %v2239
      %v2426 = vadd.f32 %v1663, %v2244
      %v2427 = vadd.f32 %v1668, %v2249
      %v2428 = vadd.f32 %v1673, %v2254
      %v2429 = vadd.f32 %v1678, %v2259
      %v2430 = vadd.f32 %v1683, %v2264
      %v2431 = vadd.f32 %v1688, %v2269
      %v2432 = vadd.f32 %v1693, %v2274
      %v2433 = vadd.f32 %v1698, %v2279
      %v2434 = vadd.f32 %v1703, %v2284
      %v2435 = vadd.f32 %v1708, %v2289
      %v2436 = vadd.f32 %v1713, %v2294
      %v2437 = vadd.f32 %v1718, %v2299
      %v2438 = vadd.f32 %v1723, %v2304
      %v2439 = vadd.f32 %v1728, %v2309
      %v2440 = vadd.f32 %v1733, %v2314
      %v2441 = vadd.f32 %v1738, %v2319
      %v2442 = vadd.f32 %v1743, %v2324
      %v2443 = vadd.f32 %v1748, %v2329
      %v2444 = vadd.f32 %v1753, %v2334
      %v2445 = vadd.f32 %v1758, %v2339
      %v2446 = vadd.f32 %v1763, %v2344
      %v2447 = vadd.f32 %v1768, %v2349
      %v2448 = vadd.f32 %v1773, %v2354
      %v2449 = vadd.f32 %v1778, %v2359
      %v2450 = vadd.f32 %v1783, %v2364
      %v2451 = vadd.f32 %v1788, %v2369
      %v2452 = vadd.f32 %v1793, %v2374
      %v2453 = vadd.f32 %v1798, %v2379
      %v2454 = vadd.f32 %v1803, %v2384
      %v2455 = vadd.f32 %v1808, %v2389
      %v2456 = vld [vmem:[%s448] sm:$0xff]
      %v2457 = vld [vmem:[%s448 + $0x8] sm:$0xff]
      %v2458 = vld [vmem:[%s448 + $0x10] sm:$0xff]
      %v2459 = vld [vmem:[%s448 + $0x18] sm:$0xff]
      %v2460 = vld [vmem:[%s448 + $0x20] sm:$0xff]
      %v2461 = vld [vmem:[%s448 + $0x28] sm:$0xff]
      %v2462 = vld [vmem:[%s448 + $0x30] sm:$0xff]
      %v2463 = vld [vmem:[%s448 + $0x38] sm:$0xff]
      %v2464 = vld [vmem:[%s448 + $0x40] sm:$0xff]
      %v2465 = vld [vmem:[%s448 + $0x48] sm:$0xff]
      %v2466 = vld [vmem:[%s448 + $0x50] sm:$0xff]
      %v2467 = vld [vmem:[%s448 + $0x58] sm:$0xff]
      %v2468 = vld [vmem:[%s448 + $0x60] sm:$0xff]
      %v2469 = vld [vmem:[%s448 + $0x68] sm:$0xff]
      %v2470 = vld [vmem:[%s448 + $0x70] sm:$0xff]
      %v2471 = vld [vmem:[%s448 + $0x78] sm:$0xff]
      %v2472 = vld [vmem:[%s448 + $0x80] sm:$0xff]
      %v2473 = vld [vmem:[%s448 + $0x88] sm:$0xff]
      %v2474 = vld [vmem:[%s448 + $0x90] sm:$0xff]
      %v2475 = vld [vmem:[%s448 + $0x98] sm:$0xff]
      %v2476 = vld [vmem:[%s448 + $0xa0] sm:$0xff]
      %v2477 = vld [vmem:[%s448 + $0xa8] sm:$0xff]
      %v2478 = vld [vmem:[%s448 + $0xb0] sm:$0xff]
      %v2479 = vld [vmem:[%s448 + $0xb8] sm:$0xff]
      %v2480 = vld [vmem:[%s448 + $0xc0] sm:$0xff]
      %v2481 = vld [vmem:[%s448 + $0xc8] sm:$0xff]
      %v2482 = vld [vmem:[%s448 + $0xd0] sm:$0xff]
      %v2483 = vld [vmem:[%s448 + $0xd8] sm:$0xff]
      %v2484 = vld [vmem:[%s448 + $0xe0] sm:$0xff]
      %v2485 = vld [vmem:[%s448 + $0xe8] sm:$0xff]
      %v2486 = vld [vmem:[%s448 + $0xf0] sm:$0xff]
      %v2487 = vld [vmem:[%s448 + $0xf8] sm:$0xff]
      %v2488 = vld [vmem:[%s448 + $0x100] sm:$0xff]
      %v2489 = vld [vmem:[%s448 + $0x108] sm:$0xff]
      %v2490 = vld [vmem:[%s448 + $0x110] sm:$0xff]
      %v2491 = vld [vmem:[%s448 + $0x118] sm:$0xff]
      %v2492 = vld [vmem:[%s448 + $0x120] sm:$0xff]
      %v2493 = vld [vmem:[%s448 + $0x128] sm:$0xff]
      %v2494 = vld [vmem:[%s448 + $0x130] sm:$0xff]
      %v2495 = vld [vmem:[%s448 + $0x138] sm:$0xff]
      %v2496 = vld [vmem:[%s448 + $0x140] sm:$0xff]
      %v2497 = vld [vmem:[%s448 + $0x148] sm:$0xff]
      %v2498 = vld [vmem:[%s448 + $0x150] sm:$0xff]
      %v2499 = vld [vmem:[%s448 + $0x158] sm:$0xff]
      %v2500 = vld [vmem:[%s448 + $0x160] sm:$0xff]
      %v2501 = vld [vmem:[%s448 + $0x168] sm:$0xff]
      %v2502 = vld [vmem:[%s448 + $0x170] sm:$0xff]
      %v2503 = vld [vmem:[%s448 + $0x178] sm:$0xff]
      %v2504 = vld [vmem:[%s448 + $0x180] sm:$0xff]
      %v2505 = vld [vmem:[%s448 + $0x188] sm:$0xff]
      %v2506 = vld [vmem:[%s448 + $0x190] sm:$0xff]
      %v2507 = vld [vmem:[%s448 + $0x198] sm:$0xff]
      %v2508 = vld [vmem:[%s448 + $0x1a0] sm:$0xff]
      %v2509 = vld [vmem:[%s448 + $0x1a8] sm:$0xff]
      %v2510 = vld [vmem:[%s448 + $0x1b0] sm:$0xff]
      %v2511 = vld [vmem:[%s448 + $0x1b8] sm:$0xff]
      %v2512 = vld [vmem:[%s448 + $0x1c0] sm:$0xff]
      %v2513 = vld [vmem:[%s448 + $0x1c8] sm:$0xff]
      %v2514 = vld [vmem:[%s448 + $0x1d0] sm:$0xff]
      %v2515 = vld [vmem:[%s448 + $0x1d8] sm:$0xff]
      %v2516 = vld [vmem:[%s448 + $0x1e0] sm:$0xff]
      %v2517 = vld [vmem:[%s448 + $0x1e8] sm:$0xff]
      %v2518 = vld [vmem:[%s448 + $0x1f0] sm:$0xff]
      %v2519 = vld [vmem:[%s448 + $0x1f8] sm:$0xff]
      %v2520 = vlaneseq
      %v2521 = vand.u32 %v2520, 127
      %2522 = vset.pattern.permute.xlu0 0
      %2523 = vperm.xlu0 %2522, %v2456
      %v2524 = vpop.permute.xlu0 %2523
      %2525 = vset.pattern.permute.xlu0 0
      %2526 = vperm.xlu0 %2525, %v2457
      %v2527 = vpop.permute.xlu0 %2526
      %2528 = vset.pattern.permute.xlu0 0
      %2529 = vperm.xlu0 %2528, %v2458
      %v2530 = vpop.permute.xlu0 %2529
      %2531 = vset.pattern.permute.xlu0 0
      %2532 = vperm.xlu0 %2531, %v2459
      %v2533 = vpop.permute.xlu0 %2532
      %2534 = vset.pattern.permute.xlu0 0
      %2535 = vperm.xlu0 %2534, %v2460
      %v2536 = vpop.permute.xlu0 %2535
      %2537 = vset.pattern.permute.xlu0 0
      %2538 = vperm.xlu0 %2537, %v2461
      %v2539 = vpop.permute.xlu0 %2538
      %2540 = vset.pattern.permute.xlu0 0
      %2541 = vperm.xlu0 %2540, %v2462
      %v2542 = vpop.permute.xlu0 %2541
      %2543 = vset.pattern.permute.xlu0 0
      %2544 = vperm.xlu0 %2543, %v2463
      %v2545 = vpop.permute.xlu0 %2544
      %2546 = vset.pattern.permute.xlu0 0
      %2547 = vperm.xlu0 %2546, %v2464
      %v2548 = vpop.permute.xlu0 %2547
      %2549 = vset.pattern.permute.xlu0 0
      %2550 = vperm.xlu0 %2549, %v2465
      %v2551 = vpop.permute.xlu0 %2550
      %2552 = vset.pattern.permute.xlu0 0
      %2553 = vperm.xlu0 %2552, %v2466
      %v2554 = vpop.permute.xlu0 %2553
      %2555 = vset.pattern.permute.xlu0 0
      %2556 = vperm.xlu0 %2555, %v2467
      %v2557 = vpop.permute.xlu0 %2556
      %2558 = vset.pattern.permute.xlu0 0
      %2559 = vperm.xlu0 %2558, %v2468
      %v2560 = vpop.permute.xlu0 %2559
      %2561 = vset.pattern.permute.xlu0 0
      %2562 = vperm.xlu0 %2561, %v2469
      %v2563 = vpop.permute.xlu0 %2562
      %2564 = vset.pattern.permute.xlu0 0
      %2565 = vperm.xlu0 %2564, %v2470
      %v2566 = vpop.permute.xlu0 %2565
      %2567 = vset.pattern.permute.xlu0 0
      %2568 = vperm.xlu0 %2567, %v2471
      %v2569 = vpop.permute.xlu0 %2568
      %2570 = vset.pattern.permute.xlu0 0
      %2571 = vperm.xlu0 %2570, %v2472
      %v2572 = vpop.permute.xlu0 %2571
      %2573 = vset.pattern.permute.xlu0 0
      %2574 = vperm.xlu0 %2573, %v2473
      %v2575 = vpop.permute.xlu0 %2574
      %2576 = vset.pattern.permute.xlu0 0
      %2577 = vperm.xlu0 %2576, %v2474
      %v2578 = vpop.permute.xlu0 %2577
      %2579 = vset.pattern.permute.xlu0 0
      %2580 = vperm.xlu0 %2579, %v2475
      %v2581 = vpop.permute.xlu0 %2580
      %2582 = vset.pattern.permute.xlu0 0
      %2583 = vperm.xlu0 %2582, %v2476
      %v2584 = vpop.permute.xlu0 %2583
      %2585 = vset.pattern.permute.xlu0 0
      %2586 = vperm.xlu0 %2585, %v2477
      %v2587 = vpop.permute.xlu0 %2586
      %2588 = vset.pattern.permute.xlu0 0
      %2589 = vperm.xlu0 %2588, %v2478
      %v2590 = vpop.permute.xlu0 %2589
      %2591 = vset.pattern.permute.xlu0 0
      %2592 = vperm.xlu0 %2591, %v2479
      %v2593 = vpop.permute.xlu0 %2592
      %2594 = vset.pattern.permute.xlu0 0
      %2595 = vperm.xlu0 %2594, %v2480
      %v2596 = vpop.permute.xlu0 %2595
      %2597 = vset.pattern.permute.xlu0 0
      %2598 = vperm.xlu0 %2597, %v2481
      %v2599 = vpop.permute.xlu0 %2598
      %2600 = vset.pattern.permute.xlu0 0
      %2601 = vperm.xlu0 %2600, %v2482
      %v2602 = vpop.permute.xlu0 %2601
      %2603 = vset.pattern.permute.xlu0 0
      %2604 = vperm.xlu0 %2603, %v2483
      %v2605 = vpop.permute.xlu0 %2604
      %2606 = vset.pattern.permute.xlu0 0
      %2607 = vperm.xlu0 %2606, %v2484
      %v2608 = vpop.permute.xlu0 %2607
      %2609 = vset.pattern.permute.xlu0 0
      %2610 = vperm.xlu0 %2609, %v2485
      %v2611 = vpop.permute.xlu0 %2610
      %2612 = vset.pattern.permute.xlu0 0
      %2613 = vperm.xlu0 %2612, %v2486
      %v2614 = vpop.permute.xlu0 %2613
      %2615 = vset.pattern.permute.xlu0 0
      %2616 = vperm.xlu0 %2615, %v2487
      %v2617 = vpop.permute.xlu0 %2616
      %2618 = vset.pattern.permute.xlu0 0
      %2619 = vperm.xlu0 %2618, %v2488
      %v2620 = vpop.permute.xlu0 %2619
      %2621 = vset.pattern.permute.xlu0 0
      %2622 = vperm.xlu0 %2621, %v2489
      %v2623 = vpop.permute.xlu0 %2622
      %2624 = vset.pattern.permute.xlu0 0
      %2625 = vperm.xlu0 %2624, %v2490
      %v2626 = vpop.permute.xlu0 %2625
      %2627 = vset.pattern.permute.xlu0 0
      %2628 = vperm.xlu0 %2627, %v2491
      %v2629 = vpop.permute.xlu0 %2628
      %2630 = vset.pattern.permute.xlu0 0
      %2631 = vperm.xlu0 %2630, %v2492
      %v2632 = vpop.permute.xlu0 %2631
      %2633 = vset.pattern.permute.xlu0 0
      %2634 = vperm.xlu0 %2633, %v2493
      %v2635 = vpop.permute.xlu0 %2634
      %2636 = vset.pattern.permute.xlu0 0
      %2637 = vperm.xlu0 %2636, %v2494
      %v2638 = vpop.permute.xlu0 %2637
      %2639 = vset.pattern.permute.xlu0 0
      %2640 = vperm.xlu0 %2639, %v2495
      %v2641 = vpop.permute.xlu0 %2640
      %2642 = vset.pattern.permute.xlu0 0
      %2643 = vperm.xlu0 %2642, %v2496
      %v2644 = vpop.permute.xlu0 %2643
      %2645 = vset.pattern.permute.xlu0 0
      %2646 = vperm.xlu0 %2645, %v2497
      %v2647 = vpop.permute.xlu0 %2646
      %2648 = vset.pattern.permute.xlu0 0
      %2649 = vperm.xlu0 %2648, %v2498
      %v2650 = vpop.permute.xlu0 %2649
      %2651 = vset.pattern.permute.xlu0 0
      %2652 = vperm.xlu0 %2651, %v2499
      %v2653 = vpop.permute.xlu0 %2652
      %2654 = vset.pattern.permute.xlu0 0
      %2655 = vperm.xlu0 %2654, %v2500
      %v2656 = vpop.permute.xlu0 %2655
      %2657 = vset.pattern.permute.xlu0 0
      %2658 = vperm.xlu0 %2657, %v2501
      %v2659 = vpop.permute.xlu0 %2658
      %2660 = vset.pattern.permute.xlu0 0
      %2661 = vperm.xlu0 %2660, %v2502
      %v2662 = vpop.permute.xlu0 %2661
      %2663 = vset.pattern.permute.xlu0 0
      %2664 = vperm.xlu0 %2663, %v2503
      %v2665 = vpop.permute.xlu0 %2664
      %2666 = vset.pattern.permute.xlu0 0
      %2667 = vperm.xlu0 %2666, %v2504
      %v2668 = vpop.permute.xlu0 %2667
      %2669 = vset.pattern.permute.xlu0 0
      %2670 = vperm.xlu0 %2669, %v2505
      %v2671 = vpop.permute.xlu0 %2670
      %2672 = vset.pattern.permute.xlu0 0
      %2673 = vperm.xlu0 %2672, %v2506
      %v2674 = vpop.permute.xlu0 %2673
      %2675 = vset.pattern.permute.xlu0 0
      %2676 = vperm.xlu0 %2675, %v2507
      %v2677 = vpop.permute.xlu0 %2676
      %2678 = vset.pattern.permute.xlu0 0
      %2679 = vperm.xlu0 %2678, %v2508
      %v2680 = vpop.permute.xlu0 %2679
      %2681 = vset.pattern.permute.xlu0 0
      %2682 = vperm.xlu0 %2681, %v2509
      %v2683 = vpop.permute.xlu0 %2682
      %2684 = vset.pattern.permute.xlu0 0
      %2685 = vperm.xlu0 %2684, %v2510
      %v2686 = vpop.permute.xlu0 %2685
      %2687 = vset.pattern.permute.xlu0 0
      %2688 = vperm.xlu0 %2687, %v2511
      %v2689 = vpop.permute.xlu0 %2688
      %2690 = vset.pattern.permute.xlu0 0
      %2691 = vperm.xlu0 %2690, %v2512
      %v2692 = vpop.permute.xlu0 %2691
      %2693 = vset.pattern.permute.xlu0 0
      %2694 = vperm.xlu0 %2693, %v2513
      %v2695 = vpop.permute.xlu0 %2694
      %2696 = vset.pattern.permute.xlu0 0
      %2697 = vperm.xlu0 %2696, %v2514
      %v2698 = vpop.permute.xlu0 %2697
      %2699 = vset.pattern.permute.xlu0 0
      %2700 = vperm.xlu0 %2699, %v2515
      %v2701 = vpop.permute.xlu0 %2700
      %2702 = vset.pattern.permute.xlu0 0
      %2703 = vperm.xlu0 %2702, %v2516
      %v2704 = vpop.permute.xlu0 %2703
      %2705 = vset.pattern.permute.xlu0 0
      %2706 = vperm.xlu0 %2705, %v2517
      %v2707 = vpop.permute.xlu0 %2706
      %2708 = vset.pattern.permute.xlu0 0
      %2709 = vperm.xlu0 %2708, %v2518
      %v2710 = vpop.permute.xlu0 %2709
      %2711 = vset.pattern.permute.xlu0 0
      %2712 = vperm.xlu0 %2711, %v2519
      %v2713 = vpop.permute.xlu0 %2712
      %vm2714 = vcmp.eq.s32.totalorder %v2521, %v2524
      %vm2715 = vcmp.eq.s32.totalorder %v2521, %v2527
      %vm2716 = vcmp.eq.s32.totalorder %v2521, %v2530
      %vm2717 = vcmp.eq.s32.totalorder %v2521, %v2533
      %vm2718 = vcmp.eq.s32.totalorder %v2521, %v2536
      %vm2719 = vcmp.eq.s32.totalorder %v2521, %v2539
      %vm2720 = vcmp.eq.s32.totalorder %v2521, %v2542
      %vm2721 = vcmp.eq.s32.totalorder %v2521, %v2545
      %vm2722 = vcmp.eq.s32.totalorder %v2521, %v2548
      %vm2723 = vcmp.eq.s32.totalorder %v2521, %v2551
      %vm2724 = vcmp.eq.s32.totalorder %v2521, %v2554
      %vm2725 = vcmp.eq.s32.totalorder %v2521, %v2557
      %vm2726 = vcmp.eq.s32.totalorder %v2521, %v2560
      %vm2727 = vcmp.eq.s32.totalorder %v2521, %v2563
      %vm2728 = vcmp.eq.s32.totalorder %v2521, %v2566
      %vm2729 = vcmp.eq.s32.totalorder %v2521, %v2569
      %vm2730 = vcmp.eq.s32.totalorder %v2521, %v2572
      %vm2731 = vcmp.eq.s32.totalorder %v2521, %v2575
      %vm2732 = vcmp.eq.s32.totalorder %v2521, %v2578
      %vm2733 = vcmp.eq.s32.totalorder %v2521, %v2581
      %vm2734 = vcmp.eq.s32.totalorder %v2521, %v2584
      %vm2735 = vcmp.eq.s32.totalorder %v2521, %v2587
      %vm2736 = vcmp.eq.s32.totalorder %v2521, %v2590
      %vm2737 = vcmp.eq.s32.totalorder %v2521, %v2593
      %vm2738 = vcmp.eq.s32.totalorder %v2521, %v2596
      %vm2739 = vcmp.eq.s32.totalorder %v2521, %v2599
      %vm2740 = vcmp.eq.s32.totalorder %v2521, %v2602
      %vm2741 = vcmp.eq.s32.totalorder %v2521, %v2605
      %vm2742 = vcmp.eq.s32.totalorder %v2521, %v2608
      %vm2743 = vcmp.eq.s32.totalorder %v2521, %v2611
      %vm2744 = vcmp.eq.s32.totalorder %v2521, %v2614
      %vm2745 = vcmp.eq.s32.totalorder %v2521, %v2617
      %vm2746 = vcmp.eq.s32.totalorder %v2521, %v2620
      %vm2747 = vcmp.eq.s32.totalorder %v2521, %v2623
      %vm2748 = vcmp.eq.s32.totalorder %v2521, %v2626
      %vm2749 = vcmp.eq.s32.totalorder %v2521, %v2629
      %vm2750 = vcmp.eq.s32.totalorder %v2521, %v2632
      %vm2751 = vcmp.eq.s32.totalorder %v2521, %v2635
      %vm2752 = vcmp.eq.s32.totalorder %v2521, %v2638
      %vm2753 = vcmp.eq.s32.totalorder %v2521, %v2641
      %vm2754 = vcmp.eq.s32.totalorder %v2521, %v2644
      %vm2755 = vcmp.eq.s32.totalorder %v2521, %v2647
      %vm2756 = vcmp.eq.s32.totalorder %v2521, %v2650
      %vm2757 = vcmp.eq.s32.totalorder %v2521, %v2653
      %vm2758 = vcmp.eq.s32.totalorder %v2521, %v2656
      %vm2759 = vcmp.eq.s32.totalorder %v2521, %v2659
      %vm2760 = vcmp.eq.s32.totalorder %v2521, %v2662
      %vm2761 = vcmp.eq.s32.totalorder %v2521, %v2665
      %vm2762 = vcmp.eq.s32.totalorder %v2521, %v2668
      %vm2763 = vcmp.eq.s32.totalorder %v2521, %v2671
      %vm2764 = vcmp.eq.s32.totalorder %v2521, %v2674
      %vm2765 = vcmp.eq.s32.totalorder %v2521, %v2677
      %vm2766 = vcmp.eq.s32.totalorder %v2521, %v2680
      %vm2767 = vcmp.eq.s32.totalorder %v2521, %v2683
      %vm2768 = vcmp.eq.s32.totalorder %v2521, %v2686
      %vm2769 = vcmp.eq.s32.totalorder %v2521, %v2689
      %vm2770 = vcmp.eq.s32.totalorder %v2521, %v2692
      %vm2771 = vcmp.eq.s32.totalorder %v2521, %v2695
      %vm2772 = vcmp.eq.s32.totalorder %v2521, %v2698
      %vm2773 = vcmp.eq.s32.totalorder %v2521, %v2701
      %vm2774 = vcmp.eq.s32.totalorder %v2521, %v2704
      %vm2775 = vcmp.eq.s32.totalorder %v2521, %v2707
      %vm2776 = vcmp.eq.s32.totalorder %v2521, %v2710
      %vm2777 = vcmp.eq.s32.totalorder %v2521, %v2713
      %v2778 = vsel %vm2714, 1, 0
      %v2779 = vsel %vm2715, 1, 0
      %v2780 = vsel %vm2716, 1, 0
      %v2781 = vsel %vm2717, 1, 0
      %v2782 = vsel %vm2718, 1, 0
      %v2783 = vsel %vm2719, 1, 0
      %v2784 = vsel %vm2720, 1, 0
      %v2785 = vsel %vm2721, 1, 0
      %v2786 = vsel %vm2722, 1, 0
      %v2787 = vsel %vm2723, 1, 0
      %v2788 = vsel %vm2724, 1, 0
      %v2789 = vsel %vm2725, 1, 0
      %v2790 = vsel %vm2726, 1, 0
      %v2791 = vsel %vm2727, 1, 0
      %v2792 = vsel %vm2728, 1, 0
      %v2793 = vsel %vm2729, 1, 0
      %v2794 = vsel %vm2730, 1, 0
      %v2795 = vsel %vm2731, 1, 0
      %v2796 = vsel %vm2732, 1, 0
      %v2797 = vsel %vm2733, 1, 0
      %v2798 = vsel %vm2734, 1, 0
      %v2799 = vsel %vm2735, 1, 0
      %v2800 = vsel %vm2736, 1, 0
      %v2801 = vsel %vm2737, 1, 0
      %v2802 = vsel %vm2738, 1, 0
      %v2803 = vsel %vm2739, 1, 0
      %v2804 = vsel %vm2740, 1, 0
      %v2805 = vsel %vm2741, 1, 0
      %v2806 = vsel %vm2742, 1, 0
      %v2807 = vsel %vm2743, 1, 0
      %v2808 = vsel %vm2744, 1, 0
      %v2809 = vsel %vm2745, 1, 0
      %v2810 = vsel %vm2746, 1, 0
      %v2811 = vsel %vm2747, 1, 0
      %v2812 = vsel %vm2748, 1, 0
      %v2813 = vsel %vm2749, 1, 0
      %v2814 = vsel %vm2750, 1, 0
      %v2815 = vsel %vm2751, 1, 0
      %v2816 = vsel %vm2752, 1, 0
      %v2817 = vsel %vm2753, 1, 0
      %v2818 = vsel %vm2754, 1, 0
      %v2819 = vsel %vm2755, 1, 0
      %v2820 = vsel %vm2756, 1, 0
      %v2821 = vsel %vm2757, 1, 0
      %v2822 = vsel %vm2758, 1, 0
      %v2823 = vsel %vm2759, 1, 0
      %v2824 = vsel %vm2760, 1, 0
      %v2825 = vsel %vm2761, 1, 0
      %v2826 = vsel %vm2762, 1, 0
      %v2827 = vsel %vm2763, 1, 0
      %v2828 = vsel %vm2764, 1, 0
      %v2829 = vsel %vm2765, 1, 0
      %v2830 = vsel %vm2766, 1, 0
      %v2831 = vsel %vm2767, 1, 0
      %v2832 = vsel %vm2768, 1, 0
      %v2833 = vsel %vm2769, 1, 0
      %v2834 = vsel %vm2770, 1, 0
      %v2835 = vsel %vm2771, 1, 0
      %v2836 = vsel %vm2772, 1, 0
      %v2837 = vsel %vm2773, 1, 0
      %v2838 = vsel %vm2774, 1, 0
      %v2839 = vsel %vm2775, 1, 0
      %v2840 = vsel %vm2776, 1, 0
      %v2841 = vsel %vm2777, 1, 0
      %v2842 = vcvt.s32.f32 %v2778
      %v2843 = vcvt.s32.f32 %v2779
      %v2844 = vcvt.s32.f32 %v2780
      %v2845 = vcvt.s32.f32 %v2781
      %v2846 = vcvt.s32.f32 %v2782
      %v2847 = vcvt.s32.f32 %v2783
      %v2848 = vcvt.s32.f32 %v2784
      %v2849 = vcvt.s32.f32 %v2785
      %v2850 = vcvt.s32.f32 %v2786
      %v2851 = vcvt.s32.f32 %v2787
      %v2852 = vcvt.s32.f32 %v2788
      %v2853 = vcvt.s32.f32 %v2789
      %v2854 = vcvt.s32.f32 %v2790
      %v2855 = vcvt.s32.f32 %v2791
      %v2856 = vcvt.s32.f32 %v2792
      %v2857 = vcvt.s32.f32 %v2793
      %v2858 = vcvt.s32.f32 %v2794
      %v2859 = vcvt.s32.f32 %v2795
      %v2860 = vcvt.s32.f32 %v2796
      %v2861 = vcvt.s32.f32 %v2797
      %v2862 = vcvt.s32.f32 %v2798
      %v2863 = vcvt.s32.f32 %v2799
      %v2864 = vcvt.s32.f32 %v2800
      %v2865 = vcvt.s32.f32 %v2801
      %v2866 = vcvt.s32.f32 %v2802
      %v2867 = vcvt.s32.f32 %v2803
      %v2868 = vcvt.s32.f32 %v2804
      %v2869 = vcvt.s32.f32 %v2805
      %v2870 = vcvt.s32.f32 %v2806
      %v2871 = vcvt.s32.f32 %v2807
      %v2872 = vcvt.s32.f32 %v2808
      %v2873 = vcvt.s32.f32 %v2809
      %v2874 = vcvt.s32.f32 %v2810
      %v2875 = vcvt.s32.f32 %v2811
      %v2876 = vcvt.s32.f32 %v2812
      %v2877 = vcvt.s32.f32 %v2813
      %v2878 = vcvt.s32.f32 %v2814
      %v2879 = vcvt.s32.f32 %v2815
      %v2880 = vcvt.s32.f32 %v2816
      %v2881 = vcvt.s32.f32 %v2817
      %v2882 = vcvt.s32.f32 %v2818
      %v2883 = vcvt.s32.f32 %v2819
      %v2884 = vcvt.s32.f32 %v2820
      %v2885 = vcvt.s32.f32 %v2821
      %v2886 = vcvt.s32.f32 %v2822
      %v2887 = vcvt.s32.f32 %v2823
      %v2888 = vcvt.s32.f32 %v2824
      %v2889 = vcvt.s32.f32 %v2825
      %v2890 = vcvt.s32.f32 %v2826
      %v2891 = vcvt.s32.f32 %v2827
      %v2892 = vcvt.s32.f32 %v2828
      %v2893 = vcvt.s32.f32 %v2829
      %v2894 = vcvt.s32.f32 %v2830
      %v2895 = vcvt.s32.f32 %v2831
      %v2896 = vcvt.s32.f32 %v2832
      %v2897 = vcvt.s32.f32 %v2833
      %v2898 = vcvt.s32.f32 %v2834
      %v2899 = vcvt.s32.f32 %v2835
      %v2900 = vcvt.s32.f32 %v2836
      %v2901 = vcvt.s32.f32 %v2837
      %v2902 = vcvt.s32.f32 %v2838
      %v2903 = vcvt.s32.f32 %v2839
      %v2904 = vcvt.s32.f32 %v2840
      %v2905 = vcvt.s32.f32 %v2841
      %v2906 = vld [vmem:[%s4] sm:$0xff]
      %vm2907 = vcmask 64512
      %v2909 = vsel %vm2907, %v2842, 0
      %v2912 = vsel %vm2907, %v2843, 0
      %v2915 = vsel %vm2907, %v2844, 0
      %v2918 = vsel %vm2907, %v2845, 0
      %v2921 = vsel %vm2907, %v2846, 0
      %v2924 = vsel %vm2907, %v2847, 0
      %v2927 = vsel %vm2907, %v2848, 0
      %v2930 = vsel %vm2907, %v2849, 0
      %v2933 = vsel %vm2907, %v2850, 0
      %v2936 = vsel %vm2907, %v2851, 0
      %v2939 = vsel %vm2907, %v2852, 0
      %v2942 = vsel %vm2907, %v2853, 0
      %v2945 = vsel %vm2907, %v2854, 0
      %v2948 = vsel %vm2907, %v2855, 0
      %v2951 = vsel %vm2907, %v2856, 0
      %v2954 = vsel %vm2907, %v2857, 0
      %v2957 = vsel %vm2907, %v2858, 0
      %v2960 = vsel %vm2907, %v2859, 0
      %v2963 = vsel %vm2907, %v2860, 0
      %v2966 = vsel %vm2907, %v2861, 0
      %v2969 = vsel %vm2907, %v2862, 0
      %v2972 = vsel %vm2907, %v2863, 0
      %v2975 = vsel %vm2907, %v2864, 0
      %v2978 = vsel %vm2907, %v2865, 0
      %v2981 = vsel %vm2907, %v2866, 0
      %v2984 = vsel %vm2907, %v2867, 0
      %v2987 = vsel %vm2907, %v2868, 0
      %v2990 = vsel %vm2907, %v2869, 0
      %v2993 = vsel %vm2907, %v2870, 0
      %v2996 = vsel %vm2907, %v2871, 0
      %v2999 = vsel %vm2907, %v2872, 0
      %v3002 = vsel %vm2907, %v2873, 0
      %v3005 = vsel %vm2907, %v2874, 0
      %v3008 = vsel %vm2907, %v2875, 0
      %v3011 = vsel %vm2907, %v2876, 0
      %v3014 = vsel %vm2907, %v2877, 0
      %v3017 = vsel %vm2907, %v2878, 0
      %v3020 = vsel %vm2907, %v2879, 0
      %v3023 = vsel %vm2907, %v2880, 0
      %v3026 = vsel %vm2907, %v2881, 0
      %v3029 = vsel %vm2907, %v2882, 0
      %v3032 = vsel %vm2907, %v2883, 0
      %v3035 = vsel %vm2907, %v2884, 0
      %v3038 = vsel %vm2907, %v2885, 0
      %v3041 = vsel %vm2907, %v2886, 0
      %v3044 = vsel %vm2907, %v2887, 0
      %v3047 = vsel %vm2907, %v2888, 0
      %v3050 = vsel %vm2907, %v2889, 0
      %v3053 = vsel %vm2907, %v2890, 0
      %v3056 = vsel %vm2907, %v2891, 0
      %v3059 = vsel %vm2907, %v2892, 0
      %v3062 = vsel %vm2907, %v2893, 0
      %v3065 = vsel %vm2907, %v2894, 0
      %v3068 = vsel %vm2907, %v2895, 0
      %v3071 = vsel %vm2907, %v2896, 0
      %v3074 = vsel %vm2907, %v2897, 0
      %v3077 = vsel %vm2907, %v2898, 0
      %v3080 = vsel %vm2907, %v2899, 0
      %v3083 = vsel %vm2907, %v2900, 0
      %v3086 = vsel %vm2907, %v2901, 0
      %v3089 = vsel %vm2907, %v2902, 0
      %v3092 = vsel %vm2907, %v2903, 0
      %v3095 = vsel %vm2907, %v2904, 0
      %v3098 = vsel %vm2907, %v2905, 0
      %3100 = vmatprep.subr.mxu0 0.0
      %3101 = vmatpush1.msra.mxu0 %v2906
      %3102 = vmatprep.subr.mxu0 0.0
      %3103 = vmatpush1.msra.mxu0 0.0
      %3104 = vmatprep.subr.mxu0 0.0
      %3105 = vmatpush1.msra.mxu0 0.0
      %3106 = vmatprep.subr.mxu0 0.0
      %3107 = vmatpush1.msra.mxu0 0.0
      %3108 = vmatprep.subr.mxu0 0.0
      %3109 = vmatpush1.msra.mxu0 0.0
      %3110 = vmatprep.subr.mxu0 0.0
      %3111 = vmatpush1.msra.mxu0 0.0
      %3112 = vmatprep.subr.mxu0 0.0
      %3113 = vmatpush1.msra.mxu0 0.0
      %3114 = vmatprep.subr.mxu0 0.0
      %3115 = vmatpush1.msra.mxu0 0.0
      %3116 = vmatprep.subr.mxu0 0.0
      %3117 = vmatpush1.msra.mxu0 0.0
      %3118 = vmatprep.subr.mxu0 0.0
      %3119 = vmatpush1.msra.mxu0 0.0
      %3120 = vmatprep.subr.mxu0 0.0
      %3121 = vmatpush1.msra.mxu0 0.0
      %3122 = vmatprep.subr.mxu0 0.0
      %3123 = vmatpush1.msra.mxu0 0.0
      %3124 = vmatprep.subr.mxu0 0.0
      %3125 = vmatpush1.msra.mxu0 0.0
      %3126 = vmatprep.subr.mxu0 0.0
      %3127 = vmatpush1.msra.mxu0 0.0
      %3128 = vmatprep.subr.mxu0 0.0
      %3129 = vmatpush1.msra.mxu0 0.0
      %3130 = vmatprep.subr.mxu0 0.0
      %3131 = vmatpush1.msra.mxu0 0.0
      %3132 = vmatprep.subr.mxu0 0.0
      %3133 = vmatpush1.msra.mxu0 0.0
      %3134 = vmatprep.subr.mxu0 0.0
      %3135 = vmatpush1.msra.mxu0 0.0
      %3136 = vmatprep.subr.mxu0 0.0
      %3137 = vmatpush1.msra.mxu0 0.0
      %3138 = vmatprep.subr.mxu0 0.0
      %3139 = vmatpush1.msra.mxu0 0.0
      %3140 = vmatprep.subr.mxu0 0.0
      %3141 = vmatpush1.msra.mxu0 0.0
      %3142 = vmatprep.subr.mxu0 0.0
      %3143 = vmatpush1.msra.mxu0 0.0
      %3144 = vmatprep.subr.mxu0 0.0
      %3145 = vmatpush1.msra.mxu0 0.0
      %3146 = vmatprep.subr.mxu0 0.0
      %3147 = vmatpush1.msra.mxu0 0.0
      %3148 = vmatprep.subr.mxu0 0.0
      %3149 = vmatpush1.msra.mxu0 0.0
      %3150 = vmatprep.subr.mxu0 0.0
      %3151 = vmatpush1.msra.mxu0 0.0
      %3152 = vmatprep.subr.mxu0 0.0
      %3153 = vmatpush1.msra.mxu0 0.0
      %3154 = vmatprep.subr.mxu0 0.0
      %3155 = vmatpush1.msra.mxu0 0.0
      %3156 = vmatprep.subr.mxu0 0.0
      %3157 = vmatpush1.msra.mxu0 0.0
      %3158 = vmatprep.subr.mxu0 0.0
      %3159 = vmatpush1.msra.mxu0 0.0
      %3160 = vmatprep.subr.mxu0 0.0
      %3161 = vmatpush1.msra.mxu0 0.0
      %3162 = vmatprep.subr.mxu0 0.0
      %3163 = vmatpush1.msra.mxu0 0.0
      %3164 = vmatprep.mubr.f32.mxu0 0.0
      %3165 = vmatmul.mubr.f32.gmra.mrb[0].mxu0 %v2909
      %v3166 = vpop.f32.mrb[0].mxu0
      %v3167 = vadd.f32 0.0, %v3166
      %v3168 = vpop.f32.mrb[0].mxu0
      %3169 = vmatprep.mubr.f32.mxu0 0.0
      %3170 = vmatmul.mubr.f32.gmra.mrb[0].mxu0 %v2912
      %v3171 = vpop.f32.mrb[0].mxu0
      %v3172 = vadd.f32 0.0, %v3171
      %v3173 = vpop.f32.mrb[0].mxu0
      %3174 = vmatprep.mubr.f32.mxu0 0.0
      %3175 = vmatmul.mubr.f32.gmra.mrb[0].mxu0 %v2915
      %v3176 = vpop.f32.mrb[0].mxu0
      %v3177 = vadd.f32 0.0, %v3176
      %v3178 = vpop.f32.mrb[0].mxu0
      %3179 = vmatprep.mubr.f32.mxu0 0.0
      %3180 = vmatmul.mubr.f32.gmra.mrb[0].mxu0 %v2918
      %v3181 = vpop.f32.mrb[0].mxu0
      %v3182 = vadd.f32 0.0, %v3181
      %v3183 = vpop.f32.mrb[0].mxu0
      %3184 = vmatprep.mubr.f32.mxu0 0.0
      %3185 = vmatmul.mubr.f32.gmra.mrb[0].mxu0 %v2921
      %v3186 = vpop.f32.mrb[0].mxu0
      %v3187 = vadd.f32 0.0, %v3186
      %v3188 = vpop.f32.mrb[0].mxu0
      %3189 = vmatprep.mubr.f32.mxu0 0.0
      %3190 = vmatmul.mubr.f32.gmra.mrb[0].mxu0 %v2924
      %v3191 = vpop.f32.mrb[0].mxu0
      %v3192 = vadd.f32 0.0, %v3191
      %v3193 = vpop.f32.mrb[0].mxu0
      %3194 = vmatprep.mubr.f32.mxu0 0.0
      %3195 = vmatmul.mubr.f32.gmra.mrb[0].mxu0 %v2927
      %v3196 = vpop.f32.mrb[0].mxu0
      %v3197 = vadd.f32 0.0, %v3196
      %v3198 = vpop.f32.mrb[0].mxu0
      %3199 = vmatprep.mubr.f32.mxu0 0.0
      %3200 = vmatmul.mubr.f32.gmra.mrb[0].mxu0 %v2930
      %v3201 = vpop.f32.mrb[0].mxu0
      %v3202 = vadd.f32 0.0, %v3201
      %v3203 = vpop.f32.mrb[0].mxu0
      %3204 = vmatprep.mubr.f32.mxu0 0.0
      %3205 = vmatmul.mubr.f32.gmra.mrb[0].mxu0 %v2933
      %v3206 = vpop.f32.mrb[0].mxu0
      %v3207 = vadd.f32 0.0, %v3206
      %v3208 = vpop.f32.mrb[0].mxu0
      %3209 = vmatprep.mubr.f32.mxu0 0.0
      %3210 = vmatmul.mubr.f32.gmra.mrb[0].mxu0 %v2936
      %v3211 = vpop.f32.mrb[0].mxu0
      %v3212 = vadd.f32 0.0, %v3211
      %v3213 = vpop.f32.mrb[0].mxu0
      %3214 = vmatprep.mubr.f32.mxu0 0.0
      %3215 = vmatmul.mubr.f32.gmra.mrb[0].mxu0 %v2939
      %v3216 = vpop.f32.mrb[0].mxu0
      %v3217 = vadd.f32 0.0, %v3216
      %v3218 = vpop.f32.mrb[0].mxu0
      %3219 = vmatprep.mubr.f32.mxu0 0.0
      %3220 = vmatmul.mubr.f32.gmra.mrb[0].mxu0 %v2942
      %v3221 = vpop.f32.mrb[0].mxu0
      %v3222 = vadd.f32 0.0, %v3221
      %v3223 = vpop.f32.mrb[0].mxu0
      %3224 = vmatprep.mubr.f32.mxu0 0.0
      %3225 = vmatmul.mubr.f32.gmra.mrb[0].mxu0 %v2945
      %v3226 = vpop.f32.mrb[0].mxu0
      %v3227 = vadd.f32 0.0, %v3226
      %v3228 = vpop.f32.mrb[0].mxu0
      %3229 = vmatprep.mubr.f32.mxu0 0.0
      %3230 = vmatmul.mubr.f32.gmra.mrb[0].mxu0 %v2948
      %v3231 = vpop.f32.mrb[0].mxu0
      %v3232 = vadd.f32 0.0, %v3231
      %v3233 = vpop.f32.mrb[0].mxu0
      %3234 = vmatprep.mubr.f32.mxu0 0.0
      %3235 = vmatmul.mubr.f32.gmra.mrb[0].mxu0 %v2951
      %v3236 = vpop.f32.mrb[0].mxu0
      %v3237 = vadd.f32 0.0, %v3236
      %v3238 = vpop.f32.mrb[0].mxu0
      %3239 = vmatprep.mubr.f32.mxu0 0.0
      %3240 = vmatmul.mubr.f32.gmra.mrb[0].mxu0 %v2954
      %v3241 = vpop.f32.mrb[0].mxu0
      %v3242 = vadd.f32 0.0, %v3241
      %v3243 = vpop.f32.mrb[0].mxu0
      %3244 = vmatprep.mubr.f32.mxu0 0.0
      %3245 = vmatmul.mubr.f32.gmra.mrb[0].mxu0 %v2957
      %v3246 = vpop.f32.mrb[0].mxu0
      %v3247 = vadd.f32 0.0, %v3246
      %v3248 = vpop.f32.mrb[0].mxu0
      %3249 = vmatprep.mubr.f32.mxu0 0.0
      %3250 = vmatmul.mubr.f32.gmra.mrb[0].mxu0 %v2960
      %v3251 = vpop.f32.mrb[0].mxu0
      %v3252 = vadd.f32 0.0, %v3251
      %v3253 = vpop.f32.mrb[0].mxu0
      %3254 = vmatprep.mubr.f32.mxu0 0.0
      %3255 = vmatmul.mubr.f32.gmra.mrb[0].mxu0 %v2963
      %v3256 = vpop.f32.mrb[0].mxu0
      %v3257 = vadd.f32 0.0, %v3256
      %v3258 = vpop.f32.mrb[0].mxu0
      %3259 = vmatprep.mubr.f32.mxu0 0.0
      %3260 = vmatmul.mubr.f32.gmra.mrb[0].mxu0 %v2966
      %v3261 = vpop.f32.mrb[0].mxu0
      %v3262 = vadd.f32 0.0, %v3261
      %v3263 = vpop.f32.mrb[0].mxu0
      %3264 = vmatprep.mubr.f32.mxu0 0.0
      %3265 = vmatmul.mubr.f32.gmra.mrb[0].mxu0 %v2969
      %v3266 = vpop.f32.mrb[0].mxu0
      %v3267 = vadd.f32 0.0, %v3266
      %v3268 = vpop.f32.mrb[0].mxu0
      %3269 = vmatprep.mubr.f32.mxu0 0.0
      %3270 = vmatmul.mubr.f32.gmra.mrb[0].mxu0 %v2972
      %v3271 = vpop.f32.mrb[0].mxu0
      %v3272 = vadd.f32 0.0, %v3271
      %v3273 = vpop.f32.mrb[0].mxu0
      %3274 = vmatprep.mubr.f32.mxu0 0.0
      %3275 = vmatmul.mubr.f32.gmra.mrb[0].mxu0 %v2975
      %v3276 = vpop.f32.mrb[0].mxu0
      %v3277 = vadd.f32 0.0, %v3276
      %v3278 = vpop.f32.mrb[0].mxu0
      %3279 = vmatprep.mubr.f32.mxu0 0.0
      %3280 = vmatmul.mubr.f32.gmra.mrb[0].mxu0 %v2978
      %v3281 = vpop.f32.mrb[0].mxu0
      %v3282 = vadd.f32 0.0, %v3281
      %v3283 = vpop.f32.mrb[0].mxu0
      %3284 = vmatprep.mubr.f32.mxu0 0.0
      %3285 = vmatmul.mubr.f32.gmra.mrb[0].mxu0 %v2981
      %v3286 = vpop.f32.mrb[0].mxu0
      %v3287 = vadd.f32 0.0, %v3286
      %v3288 = vpop.f32.mrb[0].mxu0
      %3289 = vmatprep.mubr.f32.mxu0 0.0
      %3290 = vmatmul.mubr.f32.gmra.mrb[0].mxu0 %v2984
      %v3291 = vpop.f32.mrb[0].mxu0
      %v3292 = vadd.f32 0.0, %v3291
      %v3293 = vpop.f32.mrb[0].mxu0
      %3294 = vmatprep.mubr.f32.mxu0 0.0
      %3295 = vmatmul.mubr.f32.gmra.mrb[0].mxu0 %v2987
      %v3296 = vpop.f32.mrb[0].mxu0
      %v3297 = vadd.f32 0.0, %v3296
      %v3298 = vpop.f32.mrb[0].mxu0
      %3299 = vmatprep.mubr.f32.mxu0 0.0
      %3300 = vmatmul.mubr.f32.gmra.mrb[0].mxu0 %v2990
      %v3301 = vpop.f32.mrb[0].mxu0
      %v3302 = vadd.f32 0.0, %v3301
      %v3303 = vpop.f32.mrb[0].mxu0
      %3304 = vmatprep.mubr.f32.mxu0 0.0
      %3305 = vmatmul.mubr.f32.gmra.mrb[0].mxu0 %v2993
      %v3306 = vpop.f32.mrb[0].mxu0
      %v3307 = vadd.f32 0.0, %v3306
      %v3308 = vpop.f32.mrb[0].mxu0
      %3309 = vmatprep.mubr.f32.mxu0 0.0
      %3310 = vmatmul.mubr.f32.gmra.mrb[0].mxu0 %v2996
      %v3311 = vpop.f32.mrb[0].mxu0
      %v3312 = vadd.f32 0.0, %v3311
      %v3313 = vpop.f32.mrb[0].mxu0
      %3314 = vmatprep.mubr.f32.mxu0 0.0
      %3315 = vmatmul.mubr.f32.gmra.mrb[0].mxu0 %v2999
      %v3316 = vpop.f32.mrb[0].mxu0
      %v3317 = vadd.f32 0.0, %v3316
      %v3318 = vpop.f32.mrb[0].mxu0
      %3319 = vmatprep.mubr.f32.mxu0 0.0
      %3320 = vmatmul.mubr.f32.gmra.mrb[0].mxu0 %v3002
      %v3321 = vpop.f32.mrb[0].mxu0
      %v3322 = vadd.f32 0.0, %v3321
      %v3323 = vpop.f32.mrb[0].mxu0
      %3324 = vmatprep.mubr.f32.mxu0 0.0
      %3325 = vmatmul.mubr.f32.gmra.mrb[0].mxu0 %v3005
      %v3326 = vpop.f32.mrb[0].mxu0
      %v3327 = vadd.f32 0.0, %v3326
      %v3328 = vpop.f32.mrb[0].mxu0
      %3329 = vmatprep.mubr.f32.mxu0 0.0
      %3330 = vmatmul.mubr.f32.gmra.mrb[0].mxu0 %v3008
      %v3331 = vpop.f32.mrb[0].mxu0
      %v3332 = vadd.f32 0.0, %v3331
      %v3333 = vpop.f32.mrb[0].mxu0
      %3334 = vmatprep.mubr.f32.mxu0 0.0
      %3335 = vmatmul.mubr.f32.gmra.mrb[0].mxu0 %v3011
      %v3336 = vpop.f32.mrb[0].mxu0
      %v3337 = vadd.f32 0.0, %v3336
      %v3338 = vpop.f32.mrb[0].mxu0
      %3339 = vmatprep.mubr.f32.mxu0 0.0
      %3340 = vmatmul.mubr.f32.gmra.mrb[0].mxu0 %v3014
      %v3341 = vpop.f32.mrb[0].mxu0
      %v3342 = vadd.f32 0.0, %v3341
      %v3343 = vpop.f32.mrb[0].mxu0
      %3344 = vmatprep.mubr.f32.mxu0 0.0
      %3345 = vmatmul.mubr.f32.gmra.mrb[0].mxu0 %v3017
      %v3346 = vpop.f32.mrb[0].mxu0
      %v3347 = vadd.f32 0.0, %v3346
      %v3348 = vpop.f32.mrb[0].mxu0
      %3349 = vmatprep.mubr.f32.mxu0 0.0
      %3350 = vmatmul.mubr.f32.gmra.mrb[0].mxu0 %v3020
      %v3351 = vpop.f32.mrb[0].mxu0
      %v3352 = vadd.f32 0.0, %v3351
      %v3353 = vpop.f32.mrb[0].mxu0
      %3354 = vmatprep.mubr.f32.mxu0 0.0
      %3355 = vmatmul.mubr.f32.gmra.mrb[0].mxu0 %v3023
      %v3356 = vpop.f32.mrb[0].mxu0
      %v3357 = vadd.f32 0.0, %v3356
      %v3358 = vpop.f32.mrb[0].mxu0
      %3359 = vmatprep.mubr.f32.mxu0 0.0
      %3360 = vmatmul.mubr.f32.gmra.mrb[0].mxu0 %v3026
      %v3361 = vpop.f32.mrb[0].mxu0
      %v3362 = vadd.f32 0.0, %v3361
      %v3363 = vpop.f32.mrb[0].mxu0
      %3364 = vmatprep.mubr.f32.mxu0 0.0
      %3365 = vmatmul.mubr.f32.gmra.mrb[0].mxu0 %v3029
      %v3366 = vpop.f32.mrb[0].mxu0
      %v3367 = vadd.f32 0.0, %v3366
      %v3368 = vpop.f32.mrb[0].mxu0
      %3369 = vmatprep.mubr.f32.mxu0 0.0
      %3370 = vmatmul.mubr.f32.gmra.mrb[0].mxu0 %v3032
      %v3371 = vpop.f32.mrb[0].mxu0
      %v3372 = vadd.f32 0.0, %v3371
      %v3373 = vpop.f32.mrb[0].mxu0
      %3374 = vmatprep.mubr.f32.mxu0 0.0
      %3375 = vmatmul.mubr.f32.gmra.mrb[0].mxu0 %v3035
      %v3376 = vpop.f32.mrb[0].mxu0
      %v3377 = vadd.f32 0.0, %v3376
      %v3378 = vpop.f32.mrb[0].mxu0
      %3379 = vmatprep.mubr.f32.mxu0 0.0
      %3380 = vmatmul.mubr.f32.gmra.mrb[0].mxu0 %v3038
      %v3381 = vpop.f32.mrb[0].mxu0
      %v3382 = vadd.f32 0.0, %v3381
      %v3383 = vpop.f32.mrb[0].mxu0
      %3384 = vmatprep.mubr.f32.mxu0 0.0
      %3385 = vmatmul.mubr.f32.gmra.mrb[0].mxu0 %v3041
      %v3386 = vpop.f32.mrb[0].mxu0
      %v3387 = vadd.f32 0.0, %v3386
      %v3388 = vpop.f32.mrb[0].mxu0
      %3389 = vmatprep.mubr.f32.mxu0 0.0
      %3390 = vmatmul.mubr.f32.gmra.mrb[0].mxu0 %v3044
      %v3391 = vpop.f32.mrb[0].mxu0
      %v3392 = vadd.f32 0.0, %v3391
      %v3393 = vpop.f32.mrb[0].mxu0
      %3394 = vmatprep.mubr.f32.mxu0 0.0
      %3395 = vmatmul.mubr.f32.gmra.mrb[0].mxu0 %v3047
      %v3396 = vpop.f32.mrb[0].mxu0
      %v3397 = vadd.f32 0.0, %v3396
      %v3398 = vpop.f32.mrb[0].mxu0
      %3399 = vmatprep.mubr.f32.mxu0 0.0
      %3400 = vmatmul.mubr.f32.gmra.mrb[0].mxu0 %v3050
      %v3401 = vpop.f32.mrb[0].mxu0
      %v3402 = vadd.f32 0.0, %v3401
      %v3403 = vpop.f32.mrb[0].mxu0
      %3404 = vmatprep.mubr.f32.mxu0 0.0
      %3405 = vmatmul.mubr.f32.gmra.mrb[0].mxu0 %v3053
      %v3406 = vpop.f32.mrb[0].mxu0
      %v3407 = vadd.f32 0.0, %v3406
      %v3408 = vpop.f32.mrb[0].mxu0
      %3409 = vmatprep.mubr.f32.mxu0 0.0
      %3410 = vmatmul.mubr.f32.gmra.mrb[0].mxu0 %v3056
      %v3411 = vpop.f32.mrb[0].mxu0
      %v3412 = vadd.f32 0.0, %v3411
      %v3413 = vpop.f32.mrb[0].mxu0
      %3414 = vmatprep.mubr.f32.mxu0 0.0
      %3415 = vmatmul.mubr.f32.gmra.mrb[0].mxu0 %v3059
      %v3416 = vpop.f32.mrb[0].mxu0
      %v3417 = vadd.f32 0.0, %v3416
      %v3418 = vpop.f32.mrb[0].mxu0
      %3419 = vmatprep.mubr.f32.mxu0 0.0
      %3420 = vmatmul.mubr.f32.gmra.mrb[0].mxu0 %v3062
      %v3421 = vpop.f32.mrb[0].mxu0
      %v3422 = vadd.f32 0.0, %v3421
      %v3423 = vpop.f32.mrb[0].mxu0
      %3424 = vmatprep.mubr.f32.mxu0 0.0
      %3425 = vmatmul.mubr.f32.gmra.mrb[0].mxu0 %v3065
      %v3426 = vpop.f32.mrb[0].mxu0
      %v3427 = vadd.f32 0.0, %v3426
      %v3428 = vpop.f32.mrb[0].mxu0
      %3429 = vmatprep.mubr.f32.mxu0 0.0
      %3430 = vmatmul.mubr.f32.gmra.mrb[0].mxu0 %v3068
      %v3431 = vpop.f32.mrb[0].mxu0
      %v3432 = vadd.f32 0.0, %v3431
      %v3433 = vpop.f32.mrb[0].mxu0
      %3434 = vmatprep.mubr.f32.mxu0 0.0
      %3435 = vmatmul.mubr.f32.gmra.mrb[0].mxu0 %v3071
      %v3436 = vpop.f32.mrb[0].mxu0
      %v3437 = vadd.f32 0.0, %v3436
      %v3438 = vpop.f32.mrb[0].mxu0
      %3439 = vmatprep.mubr.f32.mxu0 0.0
      %3440 = vmatmul.mubr.f32.gmra.mrb[0].mxu0 %v3074
      %v3441 = vpop.f32.mrb[0].mxu0
      %v3442 = vadd.f32 0.0, %v3441
      %v3443 = vpop.f32.mrb[0].mxu0
      %3444 = vmatprep.mubr.f32.mxu0 0.0
      %3445 = vmatmul.mubr.f32.gmra.mrb[0].mxu0 %v3077
      %v3446 = vpop.f32.mrb[0].mxu0
      %v3447 = vadd.f32 0.0, %v3446
      %v3448 = vpop.f32.mrb[0].mxu0
      %3449 = vmatprep.mubr.f32.mxu0 0.0
      %3450 = vmatmul.mubr.f32.gmra.mrb[0].mxu0 %v3080
      %v3451 = vpop.f32.mrb[0].mxu0
      %v3452 = vadd.f32 0.0, %v3451
      %v3453 = vpop.f32.mrb[0].mxu0
      %3454 = vmatprep.mubr.f32.mxu0 0.0
      %3455 = vmatmul.mubr.f32.gmra.mrb[0].mxu0 %v3083
      %v3456 = vpop.f32.mrb[0].mxu0
      %v3457 = vadd.f32 0.0, %v3456
      %v3458 = vpop.f32.mrb[0].mxu0
      %3459 = vmatprep.mubr.f32.mxu0 0.0
      %3460 = vmatmul.mubr.f32.gmra.mrb[0].mxu0 %v3086
      %v3461 = vpop.f32.mrb[0].mxu0
      %v3462 = vadd.f32 0.0, %v3461
      %v3463 = vpop.f32.mrb[0].mxu0
      %3464 = vmatprep.mubr.f32.mxu0 0.0
      %3465 = vmatmul.mubr.f32.gmra.mrb[0].mxu0 %v3089
      %v3466 = vpop.f32.mrb[0].mxu0
      %v3467 = vadd.f32 0.0, %v3466
      %v3468 = vpop.f32.mrb[0].mxu0
      %3469 = vmatprep.mubr.f32.mxu0 0.0
      %3470 = vmatmul.mubr.f32.gmra.mrb[0].mxu0 %v3092
      %v3471 = vpop.f32.mrb[0].mxu0
      %v3472 = vadd.f32 0.0, %v3471
      %v3473 = vpop.f32.mrb[0].mxu0
      %3474 = vmatprep.mubr.f32.mxu0 0.0
      %3475 = vmatmul.mubr.f32.gmra.mrb[0].mxu0 %v3095
      %v3476 = vpop.f32.mrb[0].mxu0
      %v3477 = vadd.f32 0.0, %v3476
      %v3478 = vpop.f32.mrb[0].mxu0
      %3479 = vmatprep.mubr.f32.mxu0 0.0
      %3480 = vmatmul.mubr.f32.gmra.mrb[0].mxu0 %v3098
      %v3481 = vpop.f32.mrb[0].mxu0
      %v3482 = vadd.f32 0.0, %v3481
      %v3483 = vpop.f32.mrb[0].mxu0
      %3484 = vdwg.mxu0
      %v3485 = vadd.f32 %v2392, %v3167
      %v3486 = vadd.f32 %v2393, %v3172
      %v3487 = vadd.f32 %v2394, %v3177
      %v3488 = vadd.f32 %v2395, %v3182
      %v3489 = vadd.f32 %v2396, %v3187
      %v3490 = vadd.f32 %v2397, %v3192
      %v3491 = vadd.f32 %v2398, %v3197
      %v3492 = vadd.f32 %v2399, %v3202
      %v3493 = vadd.f32 %v2400, %v3207
      %v3494 = vadd.f32 %v2401, %v3212
      %v3495 = vadd.f32 %v2402, %v3217
      %v3496 = vadd.f32 %v2403, %v3222
      %v3497 = vadd.f32 %v2404, %v3227
      %v3498 = vadd.f32 %v2405, %v3232
      %v3499 = vadd.f32 %v2406, %v3237
      %v3500 = vadd.f32 %v2407, %v3242
      %v3501 = vadd.f32 %v2408, %v3247
      %v3502 = vadd.f32 %v2409, %v3252
      %v3503 = vadd.f32 %v2410, %v3257
      %v3504 = vadd.f32 %v2411, %v3262
      %v3505 = vadd.f32 %v2412, %v3267
      %v3506 = vadd.f32 %v2413, %v3272
      %v3507 = vadd.f32 %v2414, %v3277
      %v3508 = vadd.f32 %v2415, %v3282
      %v3509 = vadd.f32 %v2416, %v3287
      %v3510 = vadd.f32 %v2417, %v3292
      %v3511 = vadd.f32 %v2418, %v3297
      %v3512 = vadd.f32 %v2419, %v3302
      %v3513 = vadd.f32 %v2420, %v3307
      %v3514 = vadd.f32 %v2421, %v3312
      %v3515 = vadd.f32 %v2422, %v3317
      %v3516 = vadd.f32 %v2423, %v3322
      %v3517 = vadd.f32 %v2424, %v3327
      %v3518 = vadd.f32 %v2425, %v3332
      %v3519 = vadd.f32 %v2426, %v3337
      %v3520 = vadd.f32 %v2427, %v3342
      %v3521 = vadd.f32 %v2428, %v3347
      %v3522 = vadd.f32 %v2429, %v3352
      %v3523 = vadd.f32 %v2430, %v3357
      %v3524 = vadd.f32 %v2431, %v3362
      %v3525 = vadd.f32 %v2432, %v3367
      %v3526 = vadd.f32 %v2433, %v3372
      %v3527 = vadd.f32 %v2434, %v3377
      %v3528 = vadd.f32 %v2435, %v3382
      %v3529 = vadd.f32 %v2436, %v3387
      %v3530 = vadd.f32 %v2437, %v3392
      %v3531 = vadd.f32 %v2438, %v3397
      %v3532 = vadd.f32 %v2439, %v3402
      %v3533 = vadd.f32 %v2440, %v3407
      %v3534 = vadd.f32 %v2441, %v3412
      %v3535 = vadd.f32 %v2442, %v3417
      %v3536 = vadd.f32 %v2443, %v3422
      %v3537 = vadd.f32 %v2444, %v3427
      %v3538 = vadd.f32 %v2445, %v3432
      %v3539 = vadd.f32 %v2446, %v3437
      %v3540 = vadd.f32 %v2447, %v3442
      %v3541 = vadd.f32 %v2448, %v3447
      %v3542 = vadd.f32 %v2449, %v3452
      %v3543 = vadd.f32 %v2450, %v3457
      %v3544 = vadd.f32 %v2451, %v3462
      %v3545 = vadd.f32 %v2452, %v3467
      %v3546 = vadd.f32 %v2453, %v3472
      %v3547 = vadd.f32 %v2454, %v3477
      %v3548 = vadd.f32 %v2455, %v3482
      %v3549 = vld [vmem:[%s6] sm:$0x1]
      %v3551 = vlaneseq
      %v3552 = vshrl.u32 %v3551, 7
      %v3553 = vsub.s32 0, %v3552
      %v3554 = vrot.slane %v3549, %v3553
      %v3556 = vadd.f32 %v3485, %v3554
      %v3557 = vadd.f32 %v3486, %v3554
      %v3558 = vadd.f32 %v3487, %v3554
      %v3559 = vadd.f32 %v3488, %v3554
      %v3560 = vadd.f32 %v3489, %v3554
      %v3561 = vadd.f32 %v3490, %v3554
      %v3562 = vadd.f32 %v3491, %v3554
      %v3563 = vadd.f32 %v3492, %v3554
      %v3564 = vadd.f32 %v3493, %v3554
      %v3565 = vadd.f32 %v3494, %v3554
      %v3566 = vadd.f32 %v3495, %v3554
      %v3567 = vadd.f32 %v3496, %v3554
      %v3568 = vadd.f32 %v3497, %v3554
      %v3569 = vadd.f32 %v3498, %v3554
      %v3570 = vadd.f32 %v3499, %v3554
      %v3571 = vadd.f32 %v3500, %v3554
      %v3572 = vadd.f32 %v3501, %v3554
      %v3573 = vadd.f32 %v3502, %v3554
      %v3574 = vadd.f32 %v3503, %v3554
      %v3575 = vadd.f32 %v3504, %v3554
      %v3576 = vadd.f32 %v3505, %v3554
      %v3577 = vadd.f32 %v3506, %v3554
      %v3578 = vadd.f32 %v3507, %v3554
      %v3579 = vadd.f32 %v3508, %v3554
      %v3580 = vadd.f32 %v3509, %v3554
      %v3581 = vadd.f32 %v3510, %v3554
      %v3582 = vadd.f32 %v3511, %v3554
      %v3583 = vadd.f32 %v3512, %v3554
      %v3584 = vadd.f32 %v3513, %v3554
      %v3585 = vadd.f32 %v3514, %v3554
      %v3586 = vadd.f32 %v3515, %v3554
      %v3587 = vadd.f32 %v3516, %v3554
      %v3588 = vadd.f32 %v3517, %v3554
      %v3589 = vadd.f32 %v3518, %v3554
      %v3590 = vadd.f32 %v3519, %v3554
      %v3591 = vadd.f32 %v3520, %v3554
      %v3592 = vadd.f32 %v3521, %v3554
      %v3593 = vadd.f32 %v3522, %v3554
      %v3594 = vadd.f32 %v3523, %v3554
      %v3595 = vadd.f32 %v3524, %v3554
      %v3596 = vadd.f32 %v3525, %v3554
      %v3597 = vadd.f32 %v3526, %v3554
      %v3598 = vadd.f32 %v3527, %v3554
      %v3599 = vadd.f32 %v3528, %v3554
      %v3600 = vadd.f32 %v3529, %v3554
      %v3601 = vadd.f32 %v3530, %v3554
      %v3602 = vadd.f32 %v3531, %v3554
      %v3603 = vadd.f32 %v3532, %v3554
      %v3604 = vadd.f32 %v3533, %v3554
      %v3605 = vadd.f32 %v3534, %v3554
      %v3606 = vadd.f32 %v3535, %v3554
      %v3607 = vadd.f32 %v3536, %v3554
      %v3608 = vadd.f32 %v3537, %v3554
      %v3609 = vadd.f32 %v3538, %v3554
      %v3610 = vadd.f32 %v3539, %v3554
      %v3611 = vadd.f32 %v3540, %v3554
      %v3612 = vadd.f32 %v3541, %v3554
      %v3613 = vadd.f32 %v3542, %v3554
      %v3614 = vadd.f32 %v3543, %v3554
      %v3615 = vadd.f32 %v3544, %v3554
      %v3616 = vadd.f32 %v3545, %v3554
      %v3617 = vadd.f32 %v3546, %v3554
      %v3618 = vadd.f32 %v3547, %v3554
      %v3619 = vadd.f32 %v3548, %v3554
      %v3620 = vxor.u32 %v3556, 2147483648
      %v3621 = vxor.u32 %v3557, 2147483648
      %v3622 = vxor.u32 %v3558, 2147483648
      %v3623 = vxor.u32 %v3559, 2147483648
      %v3624 = vxor.u32 %v3560, 2147483648
      %v3625 = vxor.u32 %v3561, 2147483648
      %v3626 = vxor.u32 %v3562, 2147483648
      %v3627 = vxor.u32 %v3563, 2147483648
      %v3628 = vxor.u32 %v3564, 2147483648
      %v3629 = vxor.u32 %v3565, 2147483648
      %v3630 = vxor.u32 %v3566, 2147483648
      %v3631 = vxor.u32 %v3567, 2147483648
      %v3632 = vxor.u32 %v3568, 2147483648
      %v3633 = vxor.u32 %v3569, 2147483648
      %v3634 = vxor.u32 %v3570, 2147483648
      %v3635 = vxor.u32 %v3571, 2147483648
      %v3636 = vxor.u32 %v3572, 2147483648
      %v3637 = vxor.u32 %v3573, 2147483648
      %v3638 = vxor.u32 %v3574, 2147483648
      %v3639 = vxor.u32 %v3575, 2147483648
      %v3640 = vxor.u32 %v3576, 2147483648
      %v3641 = vxor.u32 %v3577, 2147483648
      %v3642 = vxor.u32 %v3578, 2147483648
      %v3643 = vxor.u32 %v3579, 2147483648
      %v3644 = vxor.u32 %v3580, 2147483648
      %v3645 = vxor.u32 %v3581, 2147483648
      %v3646 = vxor.u32 %v3582, 2147483648
      %v3647 = vxor.u32 %v3583, 2147483648
      %v3648 = vxor.u32 %v3584, 2147483648
      %v3649 = vxor.u32 %v3585, 2147483648
      %v3650 = vxor.u32 %v3586, 2147483648
      %v3651 = vxor.u32 %v3587, 2147483648
      %v3652 = vxor.u32 %v3588, 2147483648
      %v3653 = vxor.u32 %v3589, 2147483648
      %v3654 = vxor.u32 %v3590, 2147483648
      %v3655 = vxor.u32 %v3591, 2147483648
      %v3656 = vxor.u32 %v3592, 2147483648
      %v3657 = vxor.u32 %v3593, 2147483648
      %v3658 = vxor.u32 %v3594, 2147483648
      %v3659 = vxor.u32 %v3595, 2147483648
      %v3660 = vxor.u32 %v3596, 2147483648
      %v3661 = vxor.u32 %v3597, 2147483648
      %v3662 = vxor.u32 %v3598, 2147483648
      %v3663 = vxor.u32 %v3599, 2147483648
      %v3664 = vxor.u32 %v3600, 2147483648
      %v3665 = vxor.u32 %v3601, 2147483648
      %v3666 = vxor.u32 %v3602, 2147483648
      %v3667 = vxor.u32 %v3603, 2147483648
      %v3668 = vxor.u32 %v3604, 2147483648
      %v3669 = vxor.u32 %v3605, 2147483648
      %v3670 = vxor.u32 %v3606, 2147483648
      %v3671 = vxor.u32 %v3607, 2147483648
      %v3672 = vxor.u32 %v3608, 2147483648
      %v3673 = vxor.u32 %v3609, 2147483648
      %v3674 = vxor.u32 %v3610, 2147483648
      %v3675 = vxor.u32 %v3611, 2147483648
      %v3676 = vxor.u32 %v3612, 2147483648
      %v3677 = vxor.u32 %v3613, 2147483648
      %v3678 = vxor.u32 %v3614, 2147483648
      %v3679 = vxor.u32 %v3615, 2147483648
      %v3680 = vxor.u32 %v3616, 2147483648
      %v3681 = vxor.u32 %v3617, 2147483648
      %v3682 = vxor.u32 %v3618, 2147483648
      %v3683 = vxor.u32 %v3619, 2147483648
      %v3684 = vmul.f32 %v3620, 1.442695
      %v3685 = vpow.pop %v3684
      %v3686 = vmul.f32 %v3621, 1.442695
      %v3687 = vpow.pop %v3686
      %v3688 = vmul.f32 %v3622, 1.442695
      %v3689 = vpow.pop %v3688
      %v3690 = vmul.f32 %v3623, 1.442695
      %v3691 = vpow.pop %v3690
      %v3692 = vmul.f32 %v3624, 1.442695
      %v3693 = vpow.pop %v3692
      %v3694 = vmul.f32 %v3625, 1.442695
      %v3695 = vpow.pop %v3694
      %v3696 = vmul.f32 %v3626, 1.442695
      %v3697 = vpow.pop %v3696
      %v3698 = vmul.f32 %v3627, 1.442695
      %v3699 = vpow.pop %v3698
      %v3700 = vmul.f32 %v3628, 1.442695
      %v3701 = vpow.pop %v3700
      %v3702 = vmul.f32 %v3629, 1.442695
      %v3703 = vpow.pop %v3702
      %v3704 = vmul.f32 %v3630, 1.442695
      %v3705 = vpow.pop %v3704
      %v3706 = vmul.f32 %v3631, 1.442695
      %v3707 = vpow.pop %v3706
      %v3708 = vmul.f32 %v3632, 1.442695
      %v3709 = vpow.pop %v3708
      %v3710 = vmul.f32 %v3633, 1.442695
      %v3711 = vpow.pop %v3710
      %v3712 = vmul.f32 %v3634, 1.442695
      %v3713 = vpow.pop %v3712
      %v3714 = vmul.f32 %v3635, 1.442695
      %v3715 = vpow.pop %v3714
      %v3716 = vmul.f32 %v3636, 1.442695
      %v3717 = vpow.pop %v3716
      %v3718 = vmul.f32 %v3637, 1.442695
      %v3719 = vpow.pop %v3718
      %v3720 = vmul.f32 %v3638, 1.442695
      %v3721 = vpow.pop %v3720
      %v3722 = vmul.f32 %v3639, 1.442695
      %v3723 = vpow.pop %v3722
      %v3724 = vmul.f32 %v3640, 1.442695
      %v3725 = vpow.pop %v3724
      %v3726 = vmul.f32 %v3641, 1.442695
      %v3727 = vpow.pop %v3726
      %v3728 = vmul.f32 %v3642, 1.442695
      %v3729 = vpow.pop %v3728
      %v3730 = vmul.f32 %v3643, 1.442695
      %v3731 = vpow.pop %v3730
      %v3732 = vmul.f32 %v3644, 1.442695
      %v3733 = vpow.pop %v3732
      %v3734 = vmul.f32 %v3645, 1.442695
      %v3735 = vpow.pop %v3734
      %v3736 = vmul.f32 %v3646, 1.442695
      %v3737 = vpow.pop %v3736
      %v3738 = vmul.f32 %v3647, 1.442695
      %v3739 = vpow.pop %v3738
      %v3740 = vmul.f32 %v3648, 1.442695
      %v3741 = vpow.pop %v3740
      %v3742 = vmul.f32 %v3649, 1.442695
      %v3743 = vpow.pop %v3742
      %v3744 = vmul.f32 %v3650, 1.442695
      %v3745 = vpow.pop %v3744
      %v3746 = vmul.f32 %v3651, 1.442695
      %v3747 = vpow.pop %v3746
      %v3748 = vmul.f32 %v3652, 1.442695
      %v3749 = vpow.pop %v3748
      %v3750 = vmul.f32 %v3653, 1.442695
      %v3751 = vpow.pop %v3750
      %v3752 = vmul.f32 %v3654, 1.442695
      %v3753 = vpow.pop %v3752
      %v3754 = vmul.f32 %v3655, 1.442695
      %v3755 = vpow.pop %v3754
      %v3756 = vmul.f32 %v3656, 1.442695
      %v3757 = vpow.pop %v3756
      %v3758 = vmul.f32 %v3657, 1.442695
      %v3759 = vpow.pop %v3758
      %v3760 = vmul.f32 %v3658, 1.442695
      %v3761 = vpow.pop %v3760
      %v3762 = vmul.f32 %v3659, 1.442695
      %v3763 = vpow.pop %v3762
      %v3764 = vmul.f32 %v3660, 1.442695
      %v3765 = vpow.pop %v3764
      %v3766 = vmul.f32 %v3661, 1.442695
      %v3767 = vpow.pop %v3766
      %v3768 = vmul.f32 %v3662, 1.442695
      %v3769 = vpow.pop %v3768
      %v3770 = vmul.f32 %v3663, 1.442695
      %v3771 = vpow.pop %v3770
      %v3772 = vmul.f32 %v3664, 1.442695
      %v3773 = vpow.pop %v3772
      %v3774 = vmul.f32 %v3665, 1.442695
      %v3775 = vpow.pop %v3774
      %v3776 = vmul.f32 %v3666, 1.442695
      %v3777 = vpow.pop %v3776
      %v3778 = vmul.f32 %v3667, 1.442695
      %v3779 = vpow.pop %v3778
      %v3780 = vmul.f32 %v3668, 1.442695
      %v3781 = vpow.pop %v3780
      %v3782 = vmul.f32 %v3669, 1.442695
      %v3783 = vpow.pop %v3782
      %v3784 = vmul.f32 %v3670, 1.442695
      %v3785 = vpow.pop %v3784
      %v3786 = vmul.f32 %v3671, 1.442695
      %v3787 = vpow.pop %v3786
      %v3788 = vmul.f32 %v3672, 1.442695
      %v3789 = vpow.pop %v3788
      %v3790 = vmul.f32 %v3673, 1.442695
      %v3791 = vpow.pop %v3790
      %v3792 = vmul.f32 %v3674, 1.442695
      %v3793 = vpow.pop %v3792
      %v3794 = vmul.f32 %v3675, 1.442695
      %v3795 = vpow.pop %v3794
      %v3796 = vmul.f32 %v3676, 1.442695
      %v3797 = vpow.pop %v3796
      %v3798 = vmul.f32 %v3677, 1.442695
      %v3799 = vpow.pop %v3798
      %v3800 = vmul.f32 %v3678, 1.442695
      %v3801 = vpow.pop %v3800
      %v3802 = vmul.f32 %v3679, 1.442695
      %v3803 = vpow.pop %v3802
      %v3804 = vmul.f32 %v3680, 1.442695
      %v3805 = vpow.pop %v3804
      %v3806 = vmul.f32 %v3681, 1.442695
      %v3807 = vpow.pop %v3806
      %v3808 = vmul.f32 %v3682, 1.442695
      %v3809 = vpow.pop %v3808
      %v3810 = vmul.f32 %v3683, 1.442695
      %v3811 = vpow.pop %v3810
      %v3812 = vadd.f32 %v3685, 1.0
      %v3813 = vadd.f32 %v3687, 1.0
      %v3814 = vadd.f32 %v3689, 1.0
      %v3815 = vadd.f32 %v3691, 1.0
      %v3816 = vadd.f32 %v3693, 1.0
      %v3817 = vadd.f32 %v3695, 1.0
      %v3818 = vadd.f32 %v3697, 1.0
      %v3819 = vadd.f32 %v3699, 1.0
      %v3820 = vadd.f32 %v3701, 1.0
      %v3821 = vadd.f32 %v3703, 1.0
      %v3822 = vadd.f32 %v3705, 1.0
      %v3823 = vadd.f32 %v3707, 1.0
      %v3824 = vadd.f32 %v3709, 1.0
      %v3825 = vadd.f32 %v3711, 1.0
      %v3826 = vadd.f32 %v3713, 1.0
      %v3827 = vadd.f32 %v3715, 1.0
      %v3828 = vadd.f32 %v3717, 1.0
      %v3829 = vadd.f32 %v3719, 1.0
      %v3830 = vadd.f32 %v3721, 1.0
      %v3831 = vadd.f32 %v3723, 1.0
      %v3832 = vadd.f32 %v3725, 1.0
      %v3833 = vadd.f32 %v3727, 1.0
      %v3834 = vadd.f32 %v3729, 1.0
      %v3835 = vadd.f32 %v3731, 1.0
      %v3836 = vadd.f32 %v3733, 1.0
      %v3837 = vadd.f32 %v3735, 1.0
      %v3838 = vadd.f32 %v3737, 1.0
      %v3839 = vadd.f32 %v3739, 1.0
      %v3840 = vadd.f32 %v3741, 1.0
      %v3841 = vadd.f32 %v3743, 1.0
      %v3842 = vadd.f32 %v3745, 1.0
      %v3843 = vadd.f32 %v3747, 1.0
      %v3844 = vadd.f32 %v3749, 1.0
      %v3845 = vadd.f32 %v3751, 1.0
      %v3846 = vadd.f32 %v3753, 1.0
      %v3847 = vadd.f32 %v3755, 1.0
      %v3848 = vadd.f32 %v3757, 1.0
      %v3849 = vadd.f32 %v3759, 1.0
      %v3850 = vadd.f32 %v3761, 1.0
      %v3851 = vadd.f32 %v3763, 1.0
      %v3852 = vadd.f32 %v3765, 1.0
      %v3853 = vadd.f32 %v3767, 1.0
      %v3854 = vadd.f32 %v3769, 1.0
      %v3855 = vadd.f32 %v3771, 1.0
      %v3856 = vadd.f32 %v3773, 1.0
      %v3857 = vadd.f32 %v3775, 1.0
      %v3858 = vadd.f32 %v3777, 1.0
      %v3859 = vadd.f32 %v3779, 1.0
      %v3860 = vadd.f32 %v3781, 1.0
      %v3861 = vadd.f32 %v3783, 1.0
      %v3862 = vadd.f32 %v3785, 1.0
      %v3863 = vadd.f32 %v3787, 1.0
      %v3864 = vadd.f32 %v3789, 1.0
      %v3865 = vadd.f32 %v3791, 1.0
      %v3866 = vadd.f32 %v3793, 1.0
      %v3867 = vadd.f32 %v3795, 1.0
      %v3868 = vadd.f32 %v3797, 1.0
      %v3869 = vadd.f32 %v3799, 1.0
      %v3870 = vadd.f32 %v3801, 1.0
      %v3871 = vadd.f32 %v3803, 1.0
      %v3872 = vadd.f32 %v3805, 1.0
      %v3873 = vadd.f32 %v3807, 1.0
      %v3874 = vadd.f32 %v3809, 1.0
      %v3875 = vadd.f32 %v3811, 1.0
      %v3876 = vrcp.pop %v3812
      %v3877 = vmul.f32 1.0, %v3876
      %v3878 = vrcp.pop %v3813
      %v3879 = vmul.f32 1.0, %v3878
      %v3880 = vrcp.pop %v3814
      %v3881 = vmul.f32 1.0, %v3880
      %v3882 = vrcp.pop %v3815
      %v3883 = vmul.f32 1.0, %v3882
      %v3884 = vrcp.pop %v3816
      %v3885 = vmul.f32 1.0, %v3884
      %v3886 = vrcp.pop %v3817
      %v3887 = vmul.f32 1.0, %v3886
      %v3888 = vrcp.pop %v3818
      %v3889 = vmul.f32 1.0, %v3888
      %v3890 = vrcp.pop %v3819
      %v3891 = vmul.f32 1.0, %v3890
      %v3892 = vrcp.pop %v3820
      %v3893 = vmul.f32 1.0, %v3892
      %v3894 = vrcp.pop %v3821
      %v3895 = vmul.f32 1.0, %v3894
      %v3896 = vrcp.pop %v3822
      %v3897 = vmul.f32 1.0, %v3896
      %v3898 = vrcp.pop %v3823
      %v3899 = vmul.f32 1.0, %v3898
      %v3900 = vrcp.pop %v3824
      %v3901 = vmul.f32 1.0, %v3900
      %v3902 = vrcp.pop %v3825
      %v3903 = vmul.f32 1.0, %v3902
      %v3904 = vrcp.pop %v3826
      %v3905 = vmul.f32 1.0, %v3904
      %v3906 = vrcp.pop %v3827
      %v3907 = vmul.f32 1.0, %v3906
      %v3908 = vrcp.pop %v3828
      %v3909 = vmul.f32 1.0, %v3908
      %v3910 = vrcp.pop %v3829
      %v3911 = vmul.f32 1.0, %v3910
      %v3912 = vrcp.pop %v3830
      %v3913 = vmul.f32 1.0, %v3912
      %v3914 = vrcp.pop %v3831
      %v3915 = vmul.f32 1.0, %v3914
      %v3916 = vrcp.pop %v3832
      %v3917 = vmul.f32 1.0, %v3916
      %v3918 = vrcp.pop %v3833
      %v3919 = vmul.f32 1.0, %v3918
      %v3920 = vrcp.pop %v3834
      %v3921 = vmul.f32 1.0, %v3920
      %v3922 = vrcp.pop %v3835
      %v3923 = vmul.f32 1.0, %v3922
      %v3924 = vrcp.pop %v3836
      %v3925 = vmul.f32 1.0, %v3924
      %v3926 = vrcp.pop %v3837
      %v3927 = vmul.f32 1.0, %v3926
      %v3928 = vrcp.pop %v3838
      %v3929 = vmul.f32 1.0, %v3928
      %v3930 = vrcp.pop %v3839
      %v3931 = vmul.f32 1.0, %v3930
      %v3932 = vrcp.pop %v3840
      %v3933 = vmul.f32 1.0, %v3932
      %v3934 = vrcp.pop %v3841
      %v3935 = vmul.f32 1.0, %v3934
      %v3936 = vrcp.pop %v3842
      %v3937 = vmul.f32 1.0, %v3936
      %v3938 = vrcp.pop %v3843
      %v3939 = vmul.f32 1.0, %v3938
      %v3940 = vrcp.pop %v3844
      %v3941 = vmul.f32 1.0, %v3940
      %v3942 = vrcp.pop %v3845
      %v3943 = vmul.f32 1.0, %v3942
      %v3944 = vrcp.pop %v3846
      %v3945 = vmul.f32 1.0, %v3944
      %v3946 = vrcp.pop %v3847
      %v3947 = vmul.f32 1.0, %v3946
      %v3948 = vrcp.pop %v3848
      %v3949 = vmul.f32 1.0, %v3948
      %v3950 = vrcp.pop %v3849
      %v3951 = vmul.f32 1.0, %v3950
      %v3952 = vrcp.pop %v3850
      %v3953 = vmul.f32 1.0, %v3952
      %v3954 = vrcp.pop %v3851
      %v3955 = vmul.f32 1.0, %v3954
      %v3956 = vrcp.pop %v3852
      %v3957 = vmul.f32 1.0, %v3956
      %v3958 = vrcp.pop %v3853
      %v3959 = vmul.f32 1.0, %v3958
      %v3960 = vrcp.pop %v3854
      %v3961 = vmul.f32 1.0, %v3960
      %v3962 = vrcp.pop %v3855
      %v3963 = vmul.f32 1.0, %v3962
      %v3964 = vrcp.pop %v3856
      %v3965 = vmul.f32 1.0, %v3964
      %v3966 = vrcp.pop %v3857
      %v3967 = vmul.f32 1.0, %v3966
      %v3968 = vrcp.pop %v3858
      %v3969 = vmul.f32 1.0, %v3968
      %v3970 = vrcp.pop %v3859
      %v3971 = vmul.f32 1.0, %v3970
      %v3972 = vrcp.pop %v3860
      %v3973 = vmul.f32 1.0, %v3972
      %v3974 = vrcp.pop %v3861
      %v3975 = vmul.f32 1.0, %v3974
      %v3976 = vrcp.pop %v3862
      %v3977 = vmul.f32 1.0, %v3976
      %v3978 = vrcp.pop %v3863
      %v3979 = vmul.f32 1.0, %v3978
      %v3980 = vrcp.pop %v3864
      %v3981 = vmul.f32 1.0, %v3980
      %v3982 = vrcp.pop %v3865
      %v3983 = vmul.f32 1.0, %v3982
      %v3984 = vrcp.pop %v3866
      %v3985 = vmul.f32 1.0, %v3984
      %v3986 = vrcp.pop %v3867
      %v3987 = vmul.f32 1.0, %v3986
      %v3988 = vrcp.pop %v3868
      %v3989 = vmul.f32 1.0, %v3988
      %v3990 = vrcp.pop %v3869
      %v3991 = vmul.f32 1.0, %v3990
      %v3992 = vrcp.pop %v3870
      %v3993 = vmul.f32 1.0, %v3992
      %v3994 = vrcp.pop %v3871
      %v3995 = vmul.f32 1.0, %v3994
      %v3996 = vrcp.pop %v3872
      %v3997 = vmul.f32 1.0, %v3996
      %v3998 = vrcp.pop %v3873
      %v3999 = vmul.f32 1.0, %v3998
      %v4000 = vrcp.pop %v3874
      %v4001 = vmul.f32 1.0, %v4000
      %v4002 = vrcp.pop %v3875
      %v4003 = vmul.f32 1.0, %v4002
      %v4004 = vmul.f32 %v3556, %v3877
      %v4005 = vmul.f32 %v3557, %v3879
      %v4006 = vmul.f32 %v3558, %v3881
      %v4007 = vmul.f32 %v3559, %v3883
      %v4008 = vmul.f32 %v3560, %v3885
      %v4009 = vmul.f32 %v3561, %v3887
      %v4010 = vmul.f32 %v3562, %v3889
      %v4011 = vmul.f32 %v3563, %v3891
      %v4012 = vmul.f32 %v3564, %v3893
      %v4013 = vmul.f32 %v3565, %v3895
      %v4014 = vmul.f32 %v3566, %v3897
      %v4015 = vmul.f32 %v3567, %v3899
      %v4016 = vmul.f32 %v3568, %v3901
      %v4017 = vmul.f32 %v3569, %v3903
      %v4018 = vmul.f32 %v3570, %v3905
      %v4019 = vmul.f32 %v3571, %v3907
      %v4020 = vmul.f32 %v3572, %v3909
      %v4021 = vmul.f32 %v3573, %v3911
      %v4022 = vmul.f32 %v3574, %v3913
      %v4023 = vmul.f32 %v3575, %v3915
      %v4024 = vmul.f32 %v3576, %v3917
      %v4025 = vmul.f32 %v3577, %v3919
      %v4026 = vmul.f32 %v3578, %v3921
      %v4027 = vmul.f32 %v3579, %v3923
      %v4028 = vmul.f32 %v3580, %v3925
      %v4029 = vmul.f32 %v3581, %v3927
      %v4030 = vmul.f32 %v3582, %v3929
      %v4031 = vmul.f32 %v3583, %v3931
      %v4032 = vmul.f32 %v3584, %v3933
      %v4033 = vmul.f32 %v3585, %v3935
      %v4034 = vmul.f32 %v3586, %v3937
      %v4035 = vmul.f32 %v3587, %v3939
      %v4036 = vmul.f32 %v3588, %v3941
      %v4037 = vmul.f32 %v3589, %v3943
      %v4038 = vmul.f32 %v3590, %v3945
      %v4039 = vmul.f32 %v3591, %v3947
      %v4040 = vmul.f32 %v3592, %v3949
      %v4041 = vmul.f32 %v3593, %v3951
      %v4042 = vmul.f32 %v3594, %v3953
      %v4043 = vmul.f32 %v3595, %v3955
      %v4044 = vmul.f32 %v3596, %v3957
      %v4045 = vmul.f32 %v3597, %v3959
      %v4046 = vmul.f32 %v3598, %v3961
      %v4047 = vmul.f32 %v3599, %v3963
      %v4048 = vmul.f32 %v3600, %v3965
      %v4049 = vmul.f32 %v3601, %v3967
      %v4050 = vmul.f32 %v3602, %v3969
      %v4051 = vmul.f32 %v3603, %v3971
      %v4052 = vmul.f32 %v3604, %v3973
      %v4053 = vmul.f32 %v3605, %v3975
      %v4054 = vmul.f32 %v3606, %v3977
      %v4055 = vmul.f32 %v3607, %v3979
      %v4056 = vmul.f32 %v3608, %v3981
      %v4057 = vmul.f32 %v3609, %v3983
      %v4058 = vmul.f32 %v3610, %v3985
      %v4059 = vmul.f32 %v3611, %v3987
      %v4060 = vmul.f32 %v3612, %v3989
      %v4061 = vmul.f32 %v3613, %v3991
      %v4062 = vmul.f32 %v3614, %v3993
      %v4063 = vmul.f32 %v3615, %v3995
      %v4064 = vmul.f32 %v3616, %v3997
      %v4065 = vmul.f32 %v3617, %v3999
      %v4066 = vmul.f32 %v3618, %v4001
      %v4067 = vmul.f32 %v3619, %v4003
      %v4068 = vld [vmem:[%s7] sm:$0xff]
      %v4069 = vld [vmem:[%s7 + $0x8] sm:$0xff]
      %v4070 = vld [vmem:[%s7 + $0x10] sm:$0xff]
      %v4071 = vld [vmem:[%s7 + $0x18] sm:$0xff]
      %v4072 = vld [vmem:[%s8] sm:$0x1]
      %v4074 = vlaneseq
      %v4075 = vshrl.u32 %v4074, 7
      %v4076 = vsub.s32 0, %v4075
      %v4077 = vrot.slane %v4072, %v4076
      %v4080 = vsel %vm656, %v4004, 0
      %v4083 = vsel %vm656, %v4005, 0
      %v4086 = vsel %vm656, %v4006, 0
      %v4089 = vsel %vm656, %v4007, 0
      %v4092 = vsel %vm656, %v4008, 0
      %v4095 = vsel %vm656, %v4009, 0
      %v4098 = vsel %vm656, %v4010, 0
      %v4101 = vsel %vm656, %v4011, 0
      %v4104 = vsel %vm656, %v4012, 0
      %v4107 = vsel %vm656, %v4013, 0
      %v4110 = vsel %vm656, %v4014, 0
      %v4113 = vsel %vm656, %v4015, 0
      %v4116 = vsel %vm656, %v4016, 0
      %v4119 = vsel %vm656, %v4017, 0
      %v4122 = vsel %vm656, %v4018, 0
      %v4125 = vsel %vm656, %v4019, 0
      %v4128 = vsel %vm656, %v4020, 0
      %v4131 = vsel %vm656, %v4021, 0
      %v4134 = vsel %vm656, %v4022, 0
      %v4137 = vsel %vm656, %v4023, 0
      %v4140 = vsel %vm656, %v4024, 0
      %v4143 = vsel %vm656, %v4025, 0
      %v4146 = vsel %vm656, %v4026, 0
      %v4149 = vsel %vm656, %v4027, 0
      %v4152 = vsel %vm656, %v4028, 0
      %v4155 = vsel %vm656, %v4029, 0
      %v4158 = vsel %vm656, %v4030, 0
      %v4161 = vsel %vm656, %v4031, 0
      %v4164 = vsel %vm656, %v4032, 0
      %v4167 = vsel %vm656, %v4033, 0
      %v4170 = vsel %vm656, %v4034, 0
      %v4173 = vsel %vm656, %v4035, 0
      %v4176 = vsel %vm656, %v4036, 0
      %v4179 = vsel %vm656, %v4037, 0
      %v4182 = vsel %vm656, %v4038, 0
      %v4185 = vsel %vm656, %v4039, 0
      %v4188 = vsel %vm656, %v4040, 0
      %v4191 = vsel %vm656, %v4041, 0
      %v4194 = vsel %vm656, %v4042, 0
      %v4197 = vsel %vm656, %v4043, 0
      %v4200 = vsel %vm656, %v4044, 0
      %v4203 = vsel %vm656, %v4045, 0
      %v4206 = vsel %vm656, %v4046, 0
      %v4209 = vsel %vm656, %v4047, 0
      %v4212 = vsel %vm656, %v4048, 0
      %v4215 = vsel %vm656, %v4049, 0
      %v4218 = vsel %vm656, %v4050, 0
      %v4221 = vsel %vm656, %v4051, 0
      %v4224 = vsel %vm656, %v4052, 0
      %v4227 = vsel %vm656, %v4053, 0
      %v4230 = vsel %vm656, %v4054, 0
      %v4233 = vsel %vm656, %v4055, 0
      %v4236 = vsel %vm656, %v4056, 0
      %v4239 = vsel %vm656, %v4057, 0
      %v4242 = vsel %vm656, %v4058, 0
      %v4245 = vsel %vm656, %v4059, 0
      %v4248 = vsel %vm656, %v4060, 0
      %v4251 = vsel %vm656, %v4061, 0
      %v4254 = vsel %vm656, %v4062, 0
      %v4257 = vsel %vm656, %v4063, 0
      %v4260 = vsel %vm656, %v4064, 0
      %v4263 = vsel %vm656, %v4065, 0
      %v4266 = vsel %vm656, %v4066, 0
      %v4269 = vsel %vm656, %v4067, 0
      %4271 = vmatprep.subr.mxu0 0.0
      %4272 = vmatpush1.msra.mxu0 %v4068
      %4273 = vmatprep.subr.mxu0 0.0
      %4274 = vmatpush1.msra.mxu0 %v4069
      %4275 = vmatprep.subr.mxu0 0.0
      %4276 = vmatpush1.msra.mxu0 %v4070
      %4277 = vmatprep.subr.mxu0 0.0
      %4278 = vmatpush1.msra.mxu0 %v4071
      %4279 = vmatprep.subr.mxu0 0.0
      %4280 = vmatpush1.msra.mxu0 0.0
      %4281 = vmatprep.subr.mxu0 0.0
      %4282 = vmatpush1.msra.mxu0 0.0
      %4283 = vmatprep.subr.mxu0 0.0
      %4284 = vmatpush1.msra.mxu0 0.0
      %4285 = vmatprep.subr.mxu0 0.0
      %4286 = vmatpush1.msra.mxu0 0.0
      %4287 = vmatprep.subr.mxu0 0.0
      %4288 = vmatpush1.msra.mxu0 0.0
      %4289 = vmatprep.subr.mxu0 0.0
      %4290 = vmatpush1.msra.mxu0 0.0
      %4291 = vmatprep.subr.mxu0 0.0
      %4292 = vmatpush1.msra.mxu0 0.0
      %4293 = vmatprep.subr.mxu0 0.0
      %4294 = vmatpush1.msra.mxu0 0.0
      %4295 = vmatprep.subr.mxu0 0.0
      %4296 = vmatpush1.msra.mxu0 0.0
      %4297 = vmatprep.subr.mxu0 0.0
      %4298 = vmatpush1.msra.mxu0 0.0
      %4299 = vmatprep.subr.mxu0 0.0
      %4300 = vmatpush1.msra.mxu0 0.0
      %4301 = vmatprep.subr.mxu0 0.0
      %4302 = vmatpush1.msra.mxu0 0.0
      %4303 = vmatprep.subr.mxu0 0.0
      %4304 = vmatpush1.msra.mxu0 0.0
      %4305 = vmatprep.subr.mxu0 0.0
      %4306 = vmatpush1.msra.mxu0 0.0
      %4307 = vmatprep.subr.mxu0 0.0
      %4308 = vmatpush1.msra.mxu0 0.0
      %4309 = vmatprep.subr.mxu0 0.0
      %4310 = vmatpush1.msra.mxu0 0.0
      %4311 = vmatprep.subr.mxu0 0.0
      %4312 = vmatpush1.msra.mxu0 0.0
      %4313 = vmatprep.subr.mxu0 0.0
      %4314 = vmatpush1.msra.mxu0 0.0
      %4315 = vmatprep.subr.mxu0 0.0
      %4316 = vmatpush1.msra.mxu0 0.0
      %4317 = vmatprep.subr.mxu0 0.0
      %4318 = vmatpush1.msra.mxu0 0.0
      %4319 = vmatprep.subr.mxu0 0.0
      %4320 = vmatpush1.msra.mxu0 0.0
      %4321 = vmatprep.subr.mxu0 0.0
      %4322 = vmatpush1.msra.mxu0 0.0
      %4323 = vmatprep.subr.mxu0 0.0
      %4324 = vmatpush1.msra.mxu0 0.0
      %4325 = vmatprep.subr.mxu0 0.0
      %4326 = vmatpush1.msra.mxu0 0.0
      %4327 = vmatprep.subr.mxu0 0.0
      %4328 = vmatpush1.msra.mxu0 0.0
      %4329 = vmatprep.subr.mxu0 0.0
      %4330 = vmatpush1.msra.mxu0 0.0
      %4331 = vmatprep.subr.mxu0 0.0
      %4332 = vmatpush1.msra.mxu0 0.0
      %4333 = vmatprep.subr.mxu0 0.0
      %4334 = vmatpush1.msra.mxu0 0.0
      %4335 = vmatprep.mubr.f32.mxu0 0.0
      %4336 = vmatmul.mubr.f32.gmra.mrb[0].mxu0 %v4080
      %v4337 = vpop.f32.mrb[0].mxu0
      %v4338 = vadd.f32 %v4077, %v4337
      %v4339 = vpop.f32.mrb[0].mxu0
      %4340 = vmatprep.mubr.f32.mxu0 0.0
      %4341 = vmatmul.mubr.f32.gmra.mrb[0].mxu0 %v4083
      %v4342 = vpop.f32.mrb[0].mxu0
      %v4343 = vadd.f32 %v4077, %v4342
      %v4344 = vpop.f32.mrb[0].mxu0
      %4345 = vmatprep.mubr.f32.mxu0 0.0
      %4346 = vmatmul.mubr.f32.gmra.mrb[0].mxu0 %v4086
      %v4347 = vpop.f32.mrb[0].mxu0
      %v4348 = vadd.f32 %v4077, %v4347
      %v4349 = vpop.f32.mrb[0].mxu0
      %4350 = vmatprep.mubr.f32.mxu0 0.0
      %4351 = vmatmul.mubr.f32.gmra.mrb[0].mxu0 %v4089
      %v4352 = vpop.f32.mrb[0].mxu0
      %v4353 = vadd.f32 %v4077, %v4352
      %v4354 = vpop.f32.mrb[0].mxu0
      %4355 = vmatprep.mubr.f32.mxu0 0.0
      %4356 = vmatmul.mubr.f32.gmra.mrb[0].mxu0 %v4092
      %v4357 = vpop.f32.mrb[0].mxu0
      %v4358 = vadd.f32 %v4077, %v4357
      %v4359 = vpop.f32.mrb[0].mxu0
      %4360 = vmatprep.mubr.f32.mxu0 0.0
      %4361 = vmatmul.mubr.f32.gmra.mrb[0].mxu0 %v4095
      %v4362 = vpop.f32.mrb[0].mxu0
      %v4363 = vadd.f32 %v4077, %v4362
      %v4364 = vpop.f32.mrb[0].mxu0
      %4365 = vmatprep.mubr.f32.mxu0 0.0
      %4366 = vmatmul.mubr.f32.gmra.mrb[0].mxu0 %v4098
      %v4367 = vpop.f32.mrb[0].mxu0
      %v4368 = vadd.f32 %v4077, %v4367
      %v4369 = vpop.f32.mrb[0].mxu0
      %4370 = vmatprep.mubr.f32.mxu0 0.0
      %4371 = vmatmul.mubr.f32.gmra.mrb[0].mxu0 %v4101
      %v4372 = vpop.f32.mrb[0].mxu0
      %v4373 = vadd.f32 %v4077, %v4372
      %v4374 = vpop.f32.mrb[0].mxu0
      %4375 = vmatprep.mubr.f32.mxu0 0.0
      %4376 = vmatmul.mubr.f32.gmra.mrb[0].mxu0 %v4104
      %v4377 = vpop.f32.mrb[0].mxu0
      %v4378 = vadd.f32 %v4077, %v4377
      %v4379 = vpop.f32.mrb[0].mxu0
      %4380 = vmatprep.mubr.f32.mxu0 0.0
      %4381 = vmatmul.mubr.f32.gmra.mrb[0].mxu0 %v4107
      %v4382 = vpop.f32.mrb[0].mxu0
      %v4383 = vadd.f32 %v4077, %v4382
      %v4384 = vpop.f32.mrb[0].mxu0
      %4385 = vmatprep.mubr.f32.mxu0 0.0
      %4386 = vmatmul.mubr.f32.gmra.mrb[0].mxu0 %v4110
      %v4387 = vpop.f32.mrb[0].mxu0
      %v4388 = vadd.f32 %v4077, %v4387
      %v4389 = vpop.f32.mrb[0].mxu0
      %4390 = vmatprep.mubr.f32.mxu0 0.0
      %4391 = vmatmul.mubr.f32.gmra.mrb[0].mxu0 %v4113
      %v4392 = vpop.f32.mrb[0].mxu0
      %v4393 = vadd.f32 %v4077, %v4392
      %v4394 = vpop.f32.mrb[0].mxu0
      %4395 = vmatprep.mubr.f32.mxu0 0.0
      %4396 = vmatmul.mubr.f32.gmra.mrb[0].mxu0 %v4116
      %v4397 = vpop.f32.mrb[0].mxu0
      %v4398 = vadd.f32 %v4077, %v4397
      %v4399 = vpop.f32.mrb[0].mxu0
      %4400 = vmatprep.mubr.f32.mxu0 0.0
      %4401 = vmatmul.mubr.f32.gmra.mrb[0].mxu0 %v4119
      %v4402 = vpop.f32.mrb[0].mxu0
      %v4403 = vadd.f32 %v4077, %v4402
      %v4404 = vpop.f32.mrb[0].mxu0
      %4405 = vmatprep.mubr.f32.mxu0 0.0
      %4406 = vmatmul.mubr.f32.gmra.mrb[0].mxu0 %v4122
      %v4407 = vpop.f32.mrb[0].mxu0
      %v4408 = vadd.f32 %v4077, %v4407
      %v4409 = vpop.f32.mrb[0].mxu0
      %4410 = vmatprep.mubr.f32.mxu0 0.0
      %4411 = vmatmul.mubr.f32.gmra.mrb[0].mxu0 %v4125
      %v4412 = vpop.f32.mrb[0].mxu0
      %v4413 = vadd.f32 %v4077, %v4412
      %v4414 = vpop.f32.mrb[0].mxu0
      %4415 = vmatprep.mubr.f32.mxu0 0.0
      %4416 = vmatmul.mubr.f32.gmra.mrb[0].mxu0 %v4128
      %v4417 = vpop.f32.mrb[0].mxu0
      %v4418 = vadd.f32 %v4077, %v4417
      %v4419 = vpop.f32.mrb[0].mxu0
      %4420 = vmatprep.mubr.f32.mxu0 0.0
      %4421 = vmatmul.mubr.f32.gmra.mrb[0].mxu0 %v4131
      %v4422 = vpop.f32.mrb[0].mxu0
      %v4423 = vadd.f32 %v4077, %v4422
      %v4424 = vpop.f32.mrb[0].mxu0
      %4425 = vmatprep.mubr.f32.mxu0 0.0
      %4426 = vmatmul.mubr.f32.gmra.mrb[0].mxu0 %v4134
      %v4427 = vpop.f32.mrb[0].mxu0
      %v4428 = vadd.f32 %v4077, %v4427
      %v4429 = vpop.f32.mrb[0].mxu0
      %4430 = vmatprep.mubr.f32.mxu0 0.0
      %4431 = vmatmul.mubr.f32.gmra.mrb[0].mxu0 %v4137
      %v4432 = vpop.f32.mrb[0].mxu0
      %v4433 = vadd.f32 %v4077, %v4432
      %v4434 = vpop.f32.mrb[0].mxu0
      %4435 = vmatprep.mubr.f32.mxu0 0.0
      %4436 = vmatmul.mubr.f32.gmra.mrb[0].mxu0 %v4140
      %v4437 = vpop.f32.mrb[0].mxu0
      %v4438 = vadd.f32 %v4077, %v4437
      %v4439 = vpop.f32.mrb[0].mxu0
      %4440 = vmatprep.mubr.f32.mxu0 0.0
      %4441 = vmatmul.mubr.f32.gmra.mrb[0].mxu0 %v4143
      %v4442 = vpop.f32.mrb[0].mxu0
      %v4443 = vadd.f32 %v4077, %v4442
      %v4444 = vpop.f32.mrb[0].mxu0
      %4445 = vmatprep.mubr.f32.mxu0 0.0
      %4446 = vmatmul.mubr.f32.gmra.mrb[0].mxu0 %v4146
      %v4447 = vpop.f32.mrb[0].mxu0
      %v4448 = vadd.f32 %v4077, %v4447
      %v4449 = vpop.f32.mrb[0].mxu0
      %4450 = vmatprep.mubr.f32.mxu0 0.0
      %4451 = vmatmul.mubr.f32.gmra.mrb[0].mxu0 %v4149
      %v4452 = vpop.f32.mrb[0].mxu0
      %v4453 = vadd.f32 %v4077, %v4452
      %v4454 = vpop.f32.mrb[0].mxu0
      %4455 = vmatprep.mubr.f32.mxu0 0.0
      %4456 = vmatmul.mubr.f32.gmra.mrb[0].mxu0 %v4152
      %v4457 = vpop.f32.mrb[0].mxu0
      %v4458 = vadd.f32 %v4077, %v4457
      %v4459 = vpop.f32.mrb[0].mxu0
      %4460 = vmatprep.mubr.f32.mxu0 0.0
      %4461 = vmatmul.mubr.f32.gmra.mrb[0].mxu0 %v4155
      %v4462 = vpop.f32.mrb[0].mxu0
      %v4463 = vadd.f32 %v4077, %v4462
      %v4464 = vpop.f32.mrb[0].mxu0
      %4465 = vmatprep.mubr.f32.mxu0 0.0
      %4466 = vmatmul.mubr.f32.gmra.mrb[0].mxu0 %v4158
      %v4467 = vpop.f32.mrb[0].mxu0
      %v4468 = vadd.f32 %v4077, %v4467
      %v4469 = vpop.f32.mrb[0].mxu0
      %4470 = vmatprep.mubr.f32.mxu0 0.0
      %4471 = vmatmul.mubr.f32.gmra.mrb[0].mxu0 %v4161
      %v4472 = vpop.f32.mrb[0].mxu0
      %v4473 = vadd.f32 %v4077, %v4472
      %v4474 = vpop.f32.mrb[0].mxu0
      %4475 = vmatprep.mubr.f32.mxu0 0.0
      %4476 = vmatmul.mubr.f32.gmra.mrb[0].mxu0 %v4164
      %v4477 = vpop.f32.mrb[0].mxu0
      %v4478 = vadd.f32 %v4077, %v4477
      %v4479 = vpop.f32.mrb[0].mxu0
      %4480 = vmatprep.mubr.f32.mxu0 0.0
      %4481 = vmatmul.mubr.f32.gmra.mrb[0].mxu0 %v4167
      %v4482 = vpop.f32.mrb[0].mxu0
      %v4483 = vadd.f32 %v4077, %v4482
      %v4484 = vpop.f32.mrb[0].mxu0
      %4485 = vmatprep.mubr.f32.mxu0 0.0
      %4486 = vmatmul.mubr.f32.gmra.mrb[0].mxu0 %v4170
      %v4487 = vpop.f32.mrb[0].mxu0
      %v4488 = vadd.f32 %v4077, %v4487
      %v4489 = vpop.f32.mrb[0].mxu0
      %4490 = vmatprep.mubr.f32.mxu0 0.0
      %4491 = vmatmul.mubr.f32.gmra.mrb[0].mxu0 %v4173
      %v4492 = vpop.f32.mrb[0].mxu0
      %v4493 = vadd.f32 %v4077, %v4492
      %v4494 = vpop.f32.mrb[0].mxu0
      %4495 = vmatprep.mubr.f32.mxu0 0.0
      %4496 = vmatmul.mubr.f32.gmra.mrb[0].mxu0 %v4176
      %v4497 = vpop.f32.mrb[0].mxu0
      %v4498 = vadd.f32 %v4077, %v4497
      %v4499 = vpop.f32.mrb[0].mxu0
      %4500 = vmatprep.mubr.f32.mxu0 0.0
      %4501 = vmatmul.mubr.f32.gmra.mrb[0].mxu0 %v4179
      %v4502 = vpop.f32.mrb[0].mxu0
      %v4503 = vadd.f32 %v4077, %v4502
      %v4504 = vpop.f32.mrb[0].mxu0
      %4505 = vmatprep.mubr.f32.mxu0 0.0
      %4506 = vmatmul.mubr.f32.gmra.mrb[0].mxu0 %v4182
      %v4507 = vpop.f32.mrb[0].mxu0
      %v4508 = vadd.f32 %v4077, %v4507
      %v4509 = vpop.f32.mrb[0].mxu0
      %4510 = vmatprep.mubr.f32.mxu0 0.0
      %4511 = vmatmul.mubr.f32.gmra.mrb[0].mxu0 %v4185
      %v4512 = vpop.f32.mrb[0].mxu0
      %v4513 = vadd.f32 %v4077, %v4512
      %v4514 = vpop.f32.mrb[0].mxu0
      %4515 = vmatprep.mubr.f32.mxu0 0.0
      %4516 = vmatmul.mubr.f32.gmra.mrb[0].mxu0 %v4188
      %v4517 = vpop.f32.mrb[0].mxu0
      %v4518 = vadd.f32 %v4077, %v4517
      %v4519 = vpop.f32.mrb[0].mxu0
      %4520 = vmatprep.mubr.f32.mxu0 0.0
      %4521 = vmatmul.mubr.f32.gmra.mrb[0].mxu0 %v4191
      %v4522 = vpop.f32.mrb[0].mxu0
      %v4523 = vadd.f32 %v4077, %v4522
      %v4524 = vpop.f32.mrb[0].mxu0
      %4525 = vmatprep.mubr.f32.mxu0 0.0
      %4526 = vmatmul.mubr.f32.gmra.mrb[0].mxu0 %v4194
      %v4527 = vpop.f32.mrb[0].mxu0
      %v4528 = vadd.f32 %v4077, %v4527
      %v4529 = vpop.f32.mrb[0].mxu0
      %4530 = vmatprep.mubr.f32.mxu0 0.0
      %4531 = vmatmul.mubr.f32.gmra.mrb[0].mxu0 %v4197
      %v4532 = vpop.f32.mrb[0].mxu0
      %v4533 = vadd.f32 %v4077, %v4532
      %v4534 = vpop.f32.mrb[0].mxu0
      %4535 = vmatprep.mubr.f32.mxu0 0.0
      %4536 = vmatmul.mubr.f32.gmra.mrb[0].mxu0 %v4200
      %v4537 = vpop.f32.mrb[0].mxu0
      %v4538 = vadd.f32 %v4077, %v4537
      %v4539 = vpop.f32.mrb[0].mxu0
      %4540 = vmatprep.mubr.f32.mxu0 0.0
      %4541 = vmatmul.mubr.f32.gmra.mrb[0].mxu0 %v4203
      %v4542 = vpop.f32.mrb[0].mxu0
      %v4543 = vadd.f32 %v4077, %v4542
      %v4544 = vpop.f32.mrb[0].mxu0
      %4545 = vmatprep.mubr.f32.mxu0 0.0
      %4546 = vmatmul.mubr.f32.gmra.mrb[0].mxu0 %v4206
      %v4547 = vpop.f32.mrb[0].mxu0
      %v4548 = vadd.f32 %v4077, %v4547
      %v4549 = vpop.f32.mrb[0].mxu0
      %4550 = vmatprep.mubr.f32.mxu0 0.0
      %4551 = vmatmul.mubr.f32.gmra.mrb[0].mxu0 %v4209
      %v4552 = vpop.f32.mrb[0].mxu0
      %v4553 = vadd.f32 %v4077, %v4552
      %v4554 = vpop.f32.mrb[0].mxu0
      %4555 = vmatprep.mubr.f32.mxu0 0.0
      %4556 = vmatmul.mubr.f32.gmra.mrb[0].mxu0 %v4212
      %v4557 = vpop.f32.mrb[0].mxu0
      %v4558 = vadd.f32 %v4077, %v4557
      %v4559 = vpop.f32.mrb[0].mxu0
      %4560 = vmatprep.mubr.f32.mxu0 0.0
      %4561 = vmatmul.mubr.f32.gmra.mrb[0].mxu0 %v4215
      %v4562 = vpop.f32.mrb[0].mxu0
      %v4563 = vadd.f32 %v4077, %v4562
      %v4564 = vpop.f32.mrb[0].mxu0
      %4565 = vmatprep.mubr.f32.mxu0 0.0
      %4566 = vmatmul.mubr.f32.gmra.mrb[0].mxu0 %v4218
      %v4567 = vpop.f32.mrb[0].mxu0
      %v4568 = vadd.f32 %v4077, %v4567
      %v4569 = vpop.f32.mrb[0].mxu0
      %4570 = vmatprep.mubr.f32.mxu0 0.0
      %4571 = vmatmul.mubr.f32.gmra.mrb[0].mxu0 %v4221
      %v4572 = vpop.f32.mrb[0].mxu0
      %v4573 = vadd.f32 %v4077, %v4572
      %v4574 = vpop.f32.mrb[0].mxu0
      %4575 = vmatprep.mubr.f32.mxu0 0.0
      %4576 = vmatmul.mubr.f32.gmra.mrb[0].mxu0 %v4224
      %v4577 = vpop.f32.mrb[0].mxu0
      %v4578 = vadd.f32 %v4077, %v4577
      %v4579 = vpop.f32.mrb[0].mxu0
      %4580 = vmatprep.mubr.f32.mxu0 0.0
      %4581 = vmatmul.mubr.f32.gmra.mrb[0].mxu0 %v4227
      %v4582 = vpop.f32.mrb[0].mxu0
      %v4583 = vadd.f32 %v4077, %v4582
      %v4584 = vpop.f32.mrb[0].mxu0
      %4585 = vmatprep.mubr.f32.mxu0 0.0
      %4586 = vmatmul.mubr.f32.gmra.mrb[0].mxu0 %v4230
      %v4587 = vpop.f32.mrb[0].mxu0
      %v4588 = vadd.f32 %v4077, %v4587
      %v4589 = vpop.f32.mrb[0].mxu0
      %4590 = vmatprep.mubr.f32.mxu0 0.0
      %4591 = vmatmul.mubr.f32.gmra.mrb[0].mxu0 %v4233
      %v4592 = vpop.f32.mrb[0].mxu0
      %v4593 = vadd.f32 %v4077, %v4592
      %v4594 = vpop.f32.mrb[0].mxu0
      %4595 = vmatprep.mubr.f32.mxu0 0.0
      %4596 = vmatmul.mubr.f32.gmra.mrb[0].mxu0 %v4236
      %v4597 = vpop.f32.mrb[0].mxu0
      %v4598 = vadd.f32 %v4077, %v4597
      %v4599 = vpop.f32.mrb[0].mxu0
      %4600 = vmatprep.mubr.f32.mxu0 0.0
      %4601 = vmatmul.mubr.f32.gmra.mrb[0].mxu0 %v4239
      %v4602 = vpop.f32.mrb[0].mxu0
      %v4603 = vadd.f32 %v4077, %v4602
      %v4604 = vpop.f32.mrb[0].mxu0
      %4605 = vmatprep.mubr.f32.mxu0 0.0
      %4606 = vmatmul.mubr.f32.gmra.mrb[0].mxu0 %v4242
      %v4607 = vpop.f32.mrb[0].mxu0
      %v4608 = vadd.f32 %v4077, %v4607
      %v4609 = vpop.f32.mrb[0].mxu0
      %4610 = vmatprep.mubr.f32.mxu0 0.0
      %4611 = vmatmul.mubr.f32.gmra.mrb[0].mxu0 %v4245
      %v4612 = vpop.f32.mrb[0].mxu0
      %v4613 = vadd.f32 %v4077, %v4612
      %v4614 = vpop.f32.mrb[0].mxu0
      %4615 = vmatprep.mubr.f32.mxu0 0.0
      %4616 = vmatmul.mubr.f32.gmra.mrb[0].mxu0 %v4248
      %v4617 = vpop.f32.mrb[0].mxu0
      %v4618 = vadd.f32 %v4077, %v4617
      %v4619 = vpop.f32.mrb[0].mxu0
      %4620 = vmatprep.mubr.f32.mxu0 0.0
      %4621 = vmatmul.mubr.f32.gmra.mrb[0].mxu0 %v4251
      %v4622 = vpop.f32.mrb[0].mxu0
      %v4623 = vadd.f32 %v4077, %v4622
      %v4624 = vpop.f32.mrb[0].mxu0
      %4625 = vmatprep.mubr.f32.mxu0 0.0
      %4626 = vmatmul.mubr.f32.gmra.mrb[0].mxu0 %v4254
      %v4627 = vpop.f32.mrb[0].mxu0
      %v4628 = vadd.f32 %v4077, %v4627
      %v4629 = vpop.f32.mrb[0].mxu0
      %4630 = vmatprep.mubr.f32.mxu0 0.0
      %4631 = vmatmul.mubr.f32.gmra.mrb[0].mxu0 %v4257
      %v4632 = vpop.f32.mrb[0].mxu0
      %v4633 = vadd.f32 %v4077, %v4632
      %v4634 = vpop.f32.mrb[0].mxu0
      %4635 = vmatprep.mubr.f32.mxu0 0.0
      %4636 = vmatmul.mubr.f32.gmra.mrb[0].mxu0 %v4260
      %v4637 = vpop.f32.mrb[0].mxu0
      %v4638 = vadd.f32 %v4077, %v4637
      %v4639 = vpop.f32.mrb[0].mxu0
      %4640 = vmatprep.mubr.f32.mxu0 0.0
      %4641 = vmatmul.mubr.f32.gmra.mrb[0].mxu0 %v4263
      %v4642 = vpop.f32.mrb[0].mxu0
      %v4643 = vadd.f32 %v4077, %v4642
      %v4644 = vpop.f32.mrb[0].mxu0
      %4645 = vmatprep.mubr.f32.mxu0 0.0
      %4646 = vmatmul.mubr.f32.gmra.mrb[0].mxu0 %v4266
      %v4647 = vpop.f32.mrb[0].mxu0
      %v4648 = vadd.f32 %v4077, %v4647
      %v4649 = vpop.f32.mrb[0].mxu0
      %4650 = vmatprep.mubr.f32.mxu0 0.0
      %4651 = vmatmul.mubr.f32.gmra.mrb[0].mxu0 %v4269
      %v4652 = vpop.f32.mrb[0].mxu0
      %v4653 = vadd.f32 %v4077, %v4652
      %v4654 = vpop.f32.mrb[0].mxu0
      %4655 = vdwg.mxu0
      %v4656 = vxor.u32 %v4338, 2147483648
      %v4657 = vxor.u32 %v4343, 2147483648
      %v4658 = vxor.u32 %v4348, 2147483648
      %v4659 = vxor.u32 %v4353, 2147483648
      %v4660 = vxor.u32 %v4358, 2147483648
      %v4661 = vxor.u32 %v4363, 2147483648
      %v4662 = vxor.u32 %v4368, 2147483648
      %v4663 = vxor.u32 %v4373, 2147483648
      %v4664 = vxor.u32 %v4378, 2147483648
      %v4665 = vxor.u32 %v4383, 2147483648
      %v4666 = vxor.u32 %v4388, 2147483648
      %v4667 = vxor.u32 %v4393, 2147483648
      %v4668 = vxor.u32 %v4398, 2147483648
      %v4669 = vxor.u32 %v4403, 2147483648
      %v4670 = vxor.u32 %v4408, 2147483648
      %v4671 = vxor.u32 %v4413, 2147483648
      %v4672 = vxor.u32 %v4418, 2147483648
      %v4673 = vxor.u32 %v4423, 2147483648
      %v4674 = vxor.u32 %v4428, 2147483648
      %v4675 = vxor.u32 %v4433, 2147483648
      %v4676 = vxor.u32 %v4438, 2147483648
      %v4677 = vxor.u32 %v4443, 2147483648
      %v4678 = vxor.u32 %v4448, 2147483648
      %v4679 = vxor.u32 %v4453, 2147483648
      %v4680 = vxor.u32 %v4458, 2147483648
      %v4681 = vxor.u32 %v4463, 2147483648
      %v4682 = vxor.u32 %v4468, 2147483648
      %v4683 = vxor.u32 %v4473, 2147483648
      %v4684 = vxor.u32 %v4478, 2147483648
      %v4685 = vxor.u32 %v4483, 2147483648
      %v4686 = vxor.u32 %v4488, 2147483648
      %v4687 = vxor.u32 %v4493, 2147483648
      %v4688 = vxor.u32 %v4498, 2147483648
      %v4689 = vxor.u32 %v4503, 2147483648
      %v4690 = vxor.u32 %v4508, 2147483648
      %v4691 = vxor.u32 %v4513, 2147483648
      %v4692 = vxor.u32 %v4518, 2147483648
      %v4693 = vxor.u32 %v4523, 2147483648
      %v4694 = vxor.u32 %v4528, 2147483648
      %v4695 = vxor.u32 %v4533, 2147483648
      %v4696 = vxor.u32 %v4538, 2147483648
      %v4697 = vxor.u32 %v4543, 2147483648
      %v4698 = vxor.u32 %v4548, 2147483648
      %v4699 = vxor.u32 %v4553, 2147483648
      %v4700 = vxor.u32 %v4558, 2147483648
      %v4701 = vxor.u32 %v4563, 2147483648
      %v4702 = vxor.u32 %v4568, 2147483648
      %v4703 = vxor.u32 %v4573, 2147483648
      %v4704 = vxor.u32 %v4578, 2147483648
      %v4705 = vxor.u32 %v4583, 2147483648
      %v4706 = vxor.u32 %v4588, 2147483648
      %v4707 = vxor.u32 %v4593, 2147483648
      %v4708 = vxor.u32 %v4598, 2147483648
      %v4709 = vxor.u32 %v4603, 2147483648
      %v4710 = vxor.u32 %v4608, 2147483648
      %v4711 = vxor.u32 %v4613, 2147483648
      %v4712 = vxor.u32 %v4618, 2147483648
      %v4713 = vxor.u32 %v4623, 2147483648
      %v4714 = vxor.u32 %v4628, 2147483648
      %v4715 = vxor.u32 %v4633, 2147483648
      %v4716 = vxor.u32 %v4638, 2147483648
      %v4717 = vxor.u32 %v4643, 2147483648
      %v4718 = vxor.u32 %v4648, 2147483648
      %v4719 = vxor.u32 %v4653, 2147483648
      %v4720 = vmul.f32 %v4656, 1.442695
      %v4721 = vpow.pop %v4720
      %v4722 = vmul.f32 %v4657, 1.442695
      %v4723 = vpow.pop %v4722
      %v4724 = vmul.f32 %v4658, 1.442695
      %v4725 = vpow.pop %v4724
      %v4726 = vmul.f32 %v4659, 1.442695
      %v4727 = vpow.pop %v4726
      %v4728 = vmul.f32 %v4660, 1.442695
      %v4729 = vpow.pop %v4728
      %v4730 = vmul.f32 %v4661, 1.442695
      %v4731 = vpow.pop %v4730
      %v4732 = vmul.f32 %v4662, 1.442695
      %v4733 = vpow.pop %v4732
      %v4734 = vmul.f32 %v4663, 1.442695
      %v4735 = vpow.pop %v4734
      %v4736 = vmul.f32 %v4664, 1.442695
      %v4737 = vpow.pop %v4736
      %v4738 = vmul.f32 %v4665, 1.442695
      %v4739 = vpow.pop %v4738
      %v4740 = vmul.f32 %v4666, 1.442695
      %v4741 = vpow.pop %v4740
      %v4742 = vmul.f32 %v4667, 1.442695
      %v4743 = vpow.pop %v4742
      %v4744 = vmul.f32 %v4668, 1.442695
      %v4745 = vpow.pop %v4744
      %v4746 = vmul.f32 %v4669, 1.442695
      %v4747 = vpow.pop %v4746
      %v4748 = vmul.f32 %v4670, 1.442695
      %v4749 = vpow.pop %v4748
      %v4750 = vmul.f32 %v4671, 1.442695
      %v4751 = vpow.pop %v4750
      %v4752 = vmul.f32 %v4672, 1.442695
      %v4753 = vpow.pop %v4752
      %v4754 = vmul.f32 %v4673, 1.442695
      %v4755 = vpow.pop %v4754
      %v4756 = vmul.f32 %v4674, 1.442695
      %v4757 = vpow.pop %v4756
      %v4758 = vmul.f32 %v4675, 1.442695
      %v4759 = vpow.pop %v4758
      %v4760 = vmul.f32 %v4676, 1.442695
      %v4761 = vpow.pop %v4760
      %v4762 = vmul.f32 %v4677, 1.442695
      %v4763 = vpow.pop %v4762
      %v4764 = vmul.f32 %v4678, 1.442695
      %v4765 = vpow.pop %v4764
      %v4766 = vmul.f32 %v4679, 1.442695
      %v4767 = vpow.pop %v4766
      %v4768 = vmul.f32 %v4680, 1.442695
      %v4769 = vpow.pop %v4768
      %v4770 = vmul.f32 %v4681, 1.442695
      %v4771 = vpow.pop %v4770
      %v4772 = vmul.f32 %v4682, 1.442695
      %v4773 = vpow.pop %v4772
      %v4774 = vmul.f32 %v4683, 1.442695
      %v4775 = vpow.pop %v4774
      %v4776 = vmul.f32 %v4684, 1.442695
      %v4777 = vpow.pop %v4776
      %v4778 = vmul.f32 %v4685, 1.442695
      %v4779 = vpow.pop %v4778
      %v4780 = vmul.f32 %v4686, 1.442695
      %v4781 = vpow.pop %v4780
      %v4782 = vmul.f32 %v4687, 1.442695
      %v4783 = vpow.pop %v4782
      %v4784 = vmul.f32 %v4688, 1.442695
      %v4785 = vpow.pop %v4784
      %v4786 = vmul.f32 %v4689, 1.442695
      %v4787 = vpow.pop %v4786
      %v4788 = vmul.f32 %v4690, 1.442695
      %v4789 = vpow.pop %v4788
      %v4790 = vmul.f32 %v4691, 1.442695
      %v4791 = vpow.pop %v4790
      %v4792 = vmul.f32 %v4692, 1.442695
      %v4793 = vpow.pop %v4792
      %v4794 = vmul.f32 %v4693, 1.442695
      %v4795 = vpow.pop %v4794
      %v4796 = vmul.f32 %v4694, 1.442695
      %v4797 = vpow.pop %v4796
      %v4798 = vmul.f32 %v4695, 1.442695
      %v4799 = vpow.pop %v4798
      %v4800 = vmul.f32 %v4696, 1.442695
      %v4801 = vpow.pop %v4800
      %v4802 = vmul.f32 %v4697, 1.442695
      %v4803 = vpow.pop %v4802
      %v4804 = vmul.f32 %v4698, 1.442695
      %v4805 = vpow.pop %v4804
      %v4806 = vmul.f32 %v4699, 1.442695
      %v4807 = vpow.pop %v4806
      %v4808 = vmul.f32 %v4700, 1.442695
      %v4809 = vpow.pop %v4808
      %v4810 = vmul.f32 %v4701, 1.442695
      %v4811 = vpow.pop %v4810
      %v4812 = vmul.f32 %v4702, 1.442695
      %v4813 = vpow.pop %v4812
      %v4814 = vmul.f32 %v4703, 1.442695
      %v4815 = vpow.pop %v4814
      %v4816 = vmul.f32 %v4704, 1.442695
      %v4817 = vpow.pop %v4816
      %v4818 = vmul.f32 %v4705, 1.442695
      %v4819 = vpow.pop %v4818
      %v4820 = vmul.f32 %v4706, 1.442695
      %v4821 = vpow.pop %v4820
      %v4822 = vmul.f32 %v4707, 1.442695
      %v4823 = vpow.pop %v4822
      %v4824 = vmul.f32 %v4708, 1.442695
      %v4825 = vpow.pop %v4824
      %v4826 = vmul.f32 %v4709, 1.442695
      %v4827 = vpow.pop %v4826
      %v4828 = vmul.f32 %v4710, 1.442695
      %v4829 = vpow.pop %v4828
      %v4830 = vmul.f32 %v4711, 1.442695
      %v4831 = vpow.pop %v4830
      %v4832 = vmul.f32 %v4712, 1.442695
      %v4833 = vpow.pop %v4832
      %v4834 = vmul.f32 %v4713, 1.442695
      %v4835 = vpow.pop %v4834
      %v4836 = vmul.f32 %v4714, 1.442695
      %v4837 = vpow.pop %v4836
      %v4838 = vmul.f32 %v4715, 1.442695
      %v4839 = vpow.pop %v4838
      %v4840 = vmul.f32 %v4716, 1.442695
      %v4841 = vpow.pop %v4840
      %v4842 = vmul.f32 %v4717, 1.442695
      %v4843 = vpow.pop %v4842
      %v4844 = vmul.f32 %v4718, 1.442695
      %v4845 = vpow.pop %v4844
      %v4846 = vmul.f32 %v4719, 1.442695
      %v4847 = vpow.pop %v4846
      %v4848 = vadd.f32 %v4721, 1.0
      %v4849 = vadd.f32 %v4723, 1.0
      %v4850 = vadd.f32 %v4725, 1.0
      %v4851 = vadd.f32 %v4727, 1.0
      %v4852 = vadd.f32 %v4729, 1.0
      %v4853 = vadd.f32 %v4731, 1.0
      %v4854 = vadd.f32 %v4733, 1.0
      %v4855 = vadd.f32 %v4735, 1.0
      %v4856 = vadd.f32 %v4737, 1.0
      %v4857 = vadd.f32 %v4739, 1.0
      %v4858 = vadd.f32 %v4741, 1.0
      %v4859 = vadd.f32 %v4743, 1.0
      %v4860 = vadd.f32 %v4745, 1.0
      %v4861 = vadd.f32 %v4747, 1.0
      %v4862 = vadd.f32 %v4749, 1.0
      %v4863 = vadd.f32 %v4751, 1.0
      %v4864 = vadd.f32 %v4753, 1.0
      %v4865 = vadd.f32 %v4755, 1.0
      %v4866 = vadd.f32 %v4757, 1.0
      %v4867 = vadd.f32 %v4759, 1.0
      %v4868 = vadd.f32 %v4761, 1.0
      %v4869 = vadd.f32 %v4763, 1.0
      %v4870 = vadd.f32 %v4765, 1.0
      %v4871 = vadd.f32 %v4767, 1.0
      %v4872 = vadd.f32 %v4769, 1.0
      %v4873 = vadd.f32 %v4771, 1.0
      %v4874 = vadd.f32 %v4773, 1.0
      %v4875 = vadd.f32 %v4775, 1.0
      %v4876 = vadd.f32 %v4777, 1.0
      %v4877 = vadd.f32 %v4779, 1.0
      %v4878 = vadd.f32 %v4781, 1.0
      %v4879 = vadd.f32 %v4783, 1.0
      %v4880 = vadd.f32 %v4785, 1.0
      %v4881 = vadd.f32 %v4787, 1.0
      %v4882 = vadd.f32 %v4789, 1.0
      %v4883 = vadd.f32 %v4791, 1.0
      %v4884 = vadd.f32 %v4793, 1.0
      %v4885 = vadd.f32 %v4795, 1.0
      %v4886 = vadd.f32 %v4797, 1.0
      %v4887 = vadd.f32 %v4799, 1.0
      %v4888 = vadd.f32 %v4801, 1.0
      %v4889 = vadd.f32 %v4803, 1.0
      %v4890 = vadd.f32 %v4805, 1.0
      %v4891 = vadd.f32 %v4807, 1.0
      %v4892 = vadd.f32 %v4809, 1.0
      %v4893 = vadd.f32 %v4811, 1.0
      %v4894 = vadd.f32 %v4813, 1.0
      %v4895 = vadd.f32 %v4815, 1.0
      %v4896 = vadd.f32 %v4817, 1.0
      %v4897 = vadd.f32 %v4819, 1.0
      %v4898 = vadd.f32 %v4821, 1.0
      %v4899 = vadd.f32 %v4823, 1.0
      %v4900 = vadd.f32 %v4825, 1.0
      %v4901 = vadd.f32 %v4827, 1.0
      %v4902 = vadd.f32 %v4829, 1.0
      %v4903 = vadd.f32 %v4831, 1.0
      %v4904 = vadd.f32 %v4833, 1.0
      %v4905 = vadd.f32 %v4835, 1.0
      %v4906 = vadd.f32 %v4837, 1.0
      %v4907 = vadd.f32 %v4839, 1.0
      %v4908 = vadd.f32 %v4841, 1.0
      %v4909 = vadd.f32 %v4843, 1.0
      %v4910 = vadd.f32 %v4845, 1.0
      %v4911 = vadd.f32 %v4847, 1.0
      %v4912 = vrcp.pop %v4848
      %v4913 = vmul.f32 1.0, %v4912
      %v4914 = vrcp.pop %v4849
      %v4915 = vmul.f32 1.0, %v4914
      %v4916 = vrcp.pop %v4850
      %v4917 = vmul.f32 1.0, %v4916
      %v4918 = vrcp.pop %v4851
      %v4919 = vmul.f32 1.0, %v4918
      %v4920 = vrcp.pop %v4852
      %v4921 = vmul.f32 1.0, %v4920
      %v4922 = vrcp.pop %v4853
      %v4923 = vmul.f32 1.0, %v4922
      %v4924 = vrcp.pop %v4854
      %v4925 = vmul.f32 1.0, %v4924
      %v4926 = vrcp.pop %v4855
      %v4927 = vmul.f32 1.0, %v4926
      %v4928 = vrcp.pop %v4856
      %v4929 = vmul.f32 1.0, %v4928
      %v4930 = vrcp.pop %v4857
      %v4931 = vmul.f32 1.0, %v4930
      %v4932 = vrcp.pop %v4858
      %v4933 = vmul.f32 1.0, %v4932
      %v4934 = vrcp.pop %v4859
      %v4935 = vmul.f32 1.0, %v4934
      %v4936 = vrcp.pop %v4860
      %v4937 = vmul.f32 1.0, %v4936
      %v4938 = vrcp.pop %v4861
      %v4939 = vmul.f32 1.0, %v4938
      %v4940 = vrcp.pop %v4862
      %v4941 = vmul.f32 1.0, %v4940
      %v4942 = vrcp.pop %v4863
      %v4943 = vmul.f32 1.0, %v4942
      %v4944 = vrcp.pop %v4864
      %v4945 = vmul.f32 1.0, %v4944
      %v4946 = vrcp.pop %v4865
      %v4947 = vmul.f32 1.0, %v4946
      %v4948 = vrcp.pop %v4866
      %v4949 = vmul.f32 1.0, %v4948
      %v4950 = vrcp.pop %v4867
      %v4951 = vmul.f32 1.0, %v4950
      %v4952 = vrcp.pop %v4868
      %v4953 = vmul.f32 1.0, %v4952
      %v4954 = vrcp.pop %v4869
      %v4955 = vmul.f32 1.0, %v4954
      %v4956 = vrcp.pop %v4870
      %v4957 = vmul.f32 1.0, %v4956
      %v4958 = vrcp.pop %v4871
      %v4959 = vmul.f32 1.0, %v4958
      %v4960 = vrcp.pop %v4872
      %v4961 = vmul.f32 1.0, %v4960
      %v4962 = vrcp.pop %v4873
      %v4963 = vmul.f32 1.0, %v4962
      %v4964 = vrcp.pop %v4874
      %v4965 = vmul.f32 1.0, %v4964
      %v4966 = vrcp.pop %v4875
      %v4967 = vmul.f32 1.0, %v4966
      %v4968 = vrcp.pop %v4876
      %v4969 = vmul.f32 1.0, %v4968
      %v4970 = vrcp.pop %v4877
      %v4971 = vmul.f32 1.0, %v4970
      %v4972 = vrcp.pop %v4878
      %v4973 = vmul.f32 1.0, %v4972
      %v4974 = vrcp.pop %v4879
      %v4975 = vmul.f32 1.0, %v4974
      %v4976 = vrcp.pop %v4880
      %v4977 = vmul.f32 1.0, %v4976
      %v4978 = vrcp.pop %v4881
      %v4979 = vmul.f32 1.0, %v4978
      %v4980 = vrcp.pop %v4882
      %v4981 = vmul.f32 1.0, %v4980
      %v4982 = vrcp.pop %v4883
      %v4983 = vmul.f32 1.0, %v4982
      %v4984 = vrcp.pop %v4884
      %v4985 = vmul.f32 1.0, %v4984
      %v4986 = vrcp.pop %v4885
      %v4987 = vmul.f32 1.0, %v4986
      %v4988 = vrcp.pop %v4886
      %v4989 = vmul.f32 1.0, %v4988
      %v4990 = vrcp.pop %v4887
      %v4991 = vmul.f32 1.0, %v4990
      %v4992 = vrcp.pop %v4888
      %v4993 = vmul.f32 1.0, %v4992
      %v4994 = vrcp.pop %v4889
      %v4995 = vmul.f32 1.0, %v4994
      %v4996 = vrcp.pop %v4890
      %v4997 = vmul.f32 1.0, %v4996
      %v4998 = vrcp.pop %v4891
      %v4999 = vmul.f32 1.0, %v4998
      %v5000 = vrcp.pop %v4892
      %v5001 = vmul.f32 1.0, %v5000
      %v5002 = vrcp.pop %v4893
      %v5003 = vmul.f32 1.0, %v5002
      %v5004 = vrcp.pop %v4894
      %v5005 = vmul.f32 1.0, %v5004
      %v5006 = vrcp.pop %v4895
      %v5007 = vmul.f32 1.0, %v5006
      %v5008 = vrcp.pop %v4896
      %v5009 = vmul.f32 1.0, %v5008
      %v5010 = vrcp.pop %v4897
      %v5011 = vmul.f32 1.0, %v5010
      %v5012 = vrcp.pop %v4898
      %v5013 = vmul.f32 1.0, %v5012
      %v5014 = vrcp.pop %v4899
      %v5015 = vmul.f32 1.0, %v5014
      %v5016 = vrcp.pop %v4900
      %v5017 = vmul.f32 1.0, %v5016
      %v5018 = vrcp.pop %v4901
      %v5019 = vmul.f32 1.0, %v5018
      %v5020 = vrcp.pop %v4902
      %v5021 = vmul.f32 1.0, %v5020
      %v5022 = vrcp.pop %v4903
      %v5023 = vmul.f32 1.0, %v5022
      %v5024 = vrcp.pop %v4904
      %v5025 = vmul.f32 1.0, %v5024
      %v5026 = vrcp.pop %v4905
      %v5027 = vmul.f32 1.0, %v5026
      %v5028 = vrcp.pop %v4906
      %v5029 = vmul.f32 1.0, %v5028
      %v5030 = vrcp.pop %v4907
      %v5031 = vmul.f32 1.0, %v5030
      %v5032 = vrcp.pop %v4908
      %v5033 = vmul.f32 1.0, %v5032
      %v5034 = vrcp.pop %v4909
      %v5035 = vmul.f32 1.0, %v5034
      %v5036 = vrcp.pop %v4910
      %v5037 = vmul.f32 1.0, %v5036
      %v5038 = vrcp.pop %v4911
      %v5039 = vmul.f32 1.0, %v5038
      %v5040 = vmul.f32 %v4338, %v4913
      %v5041 = vmul.f32 %v4343, %v4915
      %v5042 = vmul.f32 %v4348, %v4917
      %v5043 = vmul.f32 %v4353, %v4919
      %v5044 = vmul.f32 %v4358, %v4921
      %v5045 = vmul.f32 %v4363, %v4923
      %v5046 = vmul.f32 %v4368, %v4925
      %v5047 = vmul.f32 %v4373, %v4927
      %v5048 = vmul.f32 %v4378, %v4929
      %v5049 = vmul.f32 %v4383, %v4931
      %v5050 = vmul.f32 %v4388, %v4933
      %v5051 = vmul.f32 %v4393, %v4935
      %v5052 = vmul.f32 %v4398, %v4937
      %v5053 = vmul.f32 %v4403, %v4939
      %v5054 = vmul.f32 %v4408, %v4941
      %v5055 = vmul.f32 %v4413, %v4943
      %v5056 = vmul.f32 %v4418, %v4945
      %v5057 = vmul.f32 %v4423, %v4947
      %v5058 = vmul.f32 %v4428, %v4949
      %v5059 = vmul.f32 %v4433, %v4951
      %v5060 = vmul.f32 %v4438, %v4953
      %v5061 = vmul.f32 %v4443, %v4955
      %v5062 = vmul.f32 %v4448, %v4957
      %v5063 = vmul.f32 %v4453, %v4959
      %v5064 = vmul.f32 %v4458, %v4961
      %v5065 = vmul.f32 %v4463, %v4963
      %v5066 = vmul.f32 %v4468, %v4965
      %v5067 = vmul.f32 %v4473, %v4967
      %v5068 = vmul.f32 %v4478, %v4969
      %v5069 = vmul.f32 %v4483, %v4971
      %v5070 = vmul.f32 %v4488, %v4973
      %v5071 = vmul.f32 %v4493, %v4975
      %v5072 = vmul.f32 %v4498, %v4977
      %v5073 = vmul.f32 %v4503, %v4979
      %v5074 = vmul.f32 %v4508, %v4981
      %v5075 = vmul.f32 %v4513, %v4983
      %v5076 = vmul.f32 %v4518, %v4985
      %v5077 = vmul.f32 %v4523, %v4987
      %v5078 = vmul.f32 %v4528, %v4989
      %v5079 = vmul.f32 %v4533, %v4991
      %v5080 = vmul.f32 %v4538, %v4993
      %v5081 = vmul.f32 %v4543, %v4995
      %v5082 = vmul.f32 %v4548, %v4997
      %v5083 = vmul.f32 %v4553, %v4999
      %v5084 = vmul.f32 %v4558, %v5001
      %v5085 = vmul.f32 %v4563, %v5003
      %v5086 = vmul.f32 %v4568, %v5005
      %v5087 = vmul.f32 %v4573, %v5007
      %v5088 = vmul.f32 %v4578, %v5009
      %v5089 = vmul.f32 %v4583, %v5011
      %v5090 = vmul.f32 %v4588, %v5013
      %v5091 = vmul.f32 %v4593, %v5015
      %v5092 = vmul.f32 %v4598, %v5017
      %v5093 = vmul.f32 %v4603, %v5019
      %v5094 = vmul.f32 %v4608, %v5021
      %v5095 = vmul.f32 %v4613, %v5023
      %v5096 = vmul.f32 %v4618, %v5025
      %v5097 = vmul.f32 %v4623, %v5027
      %v5098 = vmul.f32 %v4628, %v5029
      %v5099 = vmul.f32 %v4633, %v5031
      %v5100 = vmul.f32 %v4638, %v5033
      %v5101 = vmul.f32 %v4643, %v5035
      %v5102 = vmul.f32 %v4648, %v5037
      %v5103 = vmul.f32 %v4653, %v5039
      %v5104 = vld [vmem:[%s9] sm:$0xff]
      %v5105 = vld [vmem:[%s9 + $0x8] sm:$0xff]
      %v5106 = vld [vmem:[%s9 + $0x10] sm:$0xff]
      %v5107 = vld [vmem:[%s9 + $0x18] sm:$0xff]
      %v5108 = vld [vmem:[%s10] sm:$0x1]
      %v5110 = vlaneseq
      %v5111 = vshrl.u32 %v5110, 7
      %v5112 = vsub.s32 0, %v5111
      %v5113 = vrot.slane %v5108, %v5112
      %v5116 = vsel %vm656, %v5040, 0
      %v5119 = vsel %vm656, %v5041, 0
      %v5122 = vsel %vm656, %v5042, 0
      %v5125 = vsel %vm656, %v5043, 0
      %v5128 = vsel %vm656, %v5044, 0
      %v5131 = vsel %vm656, %v5045, 0
      %v5134 = vsel %vm656, %v5046, 0
      %v5137 = vsel %vm656, %v5047, 0
      %v5140 = vsel %vm656, %v5048, 0
      %v5143 = vsel %vm656, %v5049, 0
      %v5146 = vsel %vm656, %v5050, 0
      %v5149 = vsel %vm656, %v5051, 0
      %v5152 = vsel %vm656, %v5052, 0
      %v5155 = vsel %vm656, %v5053, 0
      %v5158 = vsel %vm656, %v5054, 0
      %v5161 = vsel %vm656, %v5055, 0
      %v5164 = vsel %vm656, %v5056, 0
      %v5167 = vsel %vm656, %v5057, 0
      %v5170 = vsel %vm656, %v5058, 0
      %v5173 = vsel %vm656, %v5059, 0
      %v5176 = vsel %vm656, %v5060, 0
      %v5179 = vsel %vm656, %v5061, 0
      %v5182 = vsel %vm656, %v5062, 0
      %v5185 = vsel %vm656, %v5063, 0
      %v5188 = vsel %vm656, %v5064, 0
      %v5191 = vsel %vm656, %v5065, 0
      %v5194 = vsel %vm656, %v5066, 0
      %v5197 = vsel %vm656, %v5067, 0
      %v5200 = vsel %vm656, %v5068, 0
      %v5203 = vsel %vm656, %v5069, 0
      %v5206 = vsel %vm656, %v5070, 0
      %v5209 = vsel %vm656, %v5071, 0
      %v5212 = vsel %vm656, %v5072, 0
      %v5215 = vsel %vm656, %v5073, 0
      %v5218 = vsel %vm656, %v5074, 0
      %v5221 = vsel %vm656, %v5075, 0
      %v5224 = vsel %vm656, %v5076, 0
      %v5227 = vsel %vm656, %v5077, 0
      %v5230 = vsel %vm656, %v5078, 0
      %v5233 = vsel %vm656, %v5079, 0
      %v5236 = vsel %vm656, %v5080, 0
      %v5239 = vsel %vm656, %v5081, 0
      %v5242 = vsel %vm656, %v5082, 0
      %v5245 = vsel %vm656, %v5083, 0
      %v5248 = vsel %vm656, %v5084, 0
      %v5251 = vsel %vm656, %v5085, 0
      %v5254 = vsel %vm656, %v5086, 0
      %v5257 = vsel %vm656, %v5087, 0
      %v5260 = vsel %vm656, %v5088, 0
      %v5263 = vsel %vm656, %v5089, 0
      %v5266 = vsel %vm656, %v5090, 0
      %v5269 = vsel %vm656, %v5091, 0
      %v5272 = vsel %vm656, %v5092, 0
      %v5275 = vsel %vm656, %v5093, 0
      %v5278 = vsel %vm656, %v5094, 0
      %v5281 = vsel %vm656, %v5095, 0
      %v5284 = vsel %vm656, %v5096, 0
      %v5287 = vsel %vm656, %v5097, 0
      %v5290 = vsel %vm656, %v5098, 0
      %v5293 = vsel %vm656, %v5099, 0
      %v5296 = vsel %vm656, %v5100, 0
      %v5299 = vsel %vm656, %v5101, 0
      %v5302 = vsel %vm656, %v5102, 0
      %v5305 = vsel %vm656, %v5103, 0
      %5307 = vmatprep.subr.mxu0 0.0
      %5308 = vmatpush1.msra.mxu0 %v5104
      %5309 = vmatprep.subr.mxu0 0.0
      %5310 = vmatpush1.msra.mxu0 %v5105
      %5311 = vmatprep.subr.mxu0 0.0
      %5312 = vmatpush1.msra.mxu0 %v5106
      %5313 = vmatprep.subr.mxu0 0.0
      %5314 = vmatpush1.msra.mxu0 %v5107
      %5315 = vmatprep.subr.mxu0 0.0
      %5316 = vmatpush1.msra.mxu0 0.0
      %5317 = vmatprep.subr.mxu0 0.0
      %5318 = vmatpush1.msra.mxu0 0.0
      %5319 = vmatprep.subr.mxu0 0.0
      %5320 = vmatpush1.msra.mxu0 0.0
      %5321 = vmatprep.subr.mxu0 0.0
      %5322 = vmatpush1.msra.mxu0 0.0
      %5323 = vmatprep.subr.mxu0 0.0
      %5324 = vmatpush1.msra.mxu0 0.0
      %5325 = vmatprep.subr.mxu0 0.0
      %5326 = vmatpush1.msra.mxu0 0.0
      %5327 = vmatprep.subr.mxu0 0.0
      %5328 = vmatpush1.msra.mxu0 0.0
      %5329 = vmatprep.subr.mxu0 0.0
      %5330 = vmatpush1.msra.mxu0 0.0
      %5331 = vmatprep.subr.mxu0 0.0
      %5332 = vmatpush1.msra.mxu0 0.0
      %5333 = vmatprep.subr.mxu0 0.0
      %5334 = vmatpush1.msra.mxu0 0.0
      %5335 = vmatprep.subr.mxu0 0.0
      %5336 = vmatpush1.msra.mxu0 0.0
      %5337 = vmatprep.subr.mxu0 0.0
      %5338 = vmatpush1.msra.mxu0 0.0
      %5339 = vmatprep.subr.mxu0 0.0
      %5340 = vmatpush1.msra.mxu0 0.0
      %5341 = vmatprep.subr.mxu0 0.0
      %5342 = vmatpush1.msra.mxu0 0.0
      %5343 = vmatprep.subr.mxu0 0.0
      %5344 = vmatpush1.msra.mxu0 0.0
      %5345 = vmatprep.subr.mxu0 0.0
      %5346 = vmatpush1.msra.mxu0 0.0
      %5347 = vmatprep.subr.mxu0 0.0
      %5348 = vmatpush1.msra.mxu0 0.0
      %5349 = vmatprep.subr.mxu0 0.0
      %5350 = vmatpush1.msra.mxu0 0.0
      %5351 = vmatprep.subr.mxu0 0.0
      %5352 = vmatpush1.msra.mxu0 0.0
      %5353 = vmatprep.subr.mxu0 0.0
      %5354 = vmatpush1.msra.mxu0 0.0
      %5355 = vmatprep.subr.mxu0 0.0
      %5356 = vmatpush1.msra.mxu0 0.0
      %5357 = vmatprep.subr.mxu0 0.0
      %5358 = vmatpush1.msra.mxu0 0.0
      %5359 = vmatprep.subr.mxu0 0.0
      %5360 = vmatpush1.msra.mxu0 0.0
      %5361 = vmatprep.subr.mxu0 0.0
      %5362 = vmatpush1.msra.mxu0 0.0
      %5363 = vmatprep.subr.mxu0 0.0
      %5364 = vmatpush1.msra.mxu0 0.0
      %5365 = vmatprep.subr.mxu0 0.0
      %5366 = vmatpush1.msra.mxu0 0.0
      %5367 = vmatprep.subr.mxu0 0.0
      %5368 = vmatpush1.msra.mxu0 0.0
      %5369 = vmatprep.subr.mxu0 0.0
      %5370 = vmatpush1.msra.mxu0 0.0
      %5371 = vmatprep.mubr.f32.mxu0 0.0
      %5372 = vmatmul.mubr.f32.gmra.mrb[0].mxu0 %v5116
      %v5373 = vpop.f32.mrb[0].mxu0
      %v5374 = vadd.f32 %v5113, %v5373
      %v5375 = vpop.f32.mrb[0].mxu0
      %5376 = vmatprep.mubr.f32.mxu0 0.0
      %5377 = vmatmul.mubr.f32.gmra.mrb[0].mxu0 %v5119
      %v5378 = vpop.f32.mrb[0].mxu0
      %v5379 = vadd.f32 %v5113, %v5378
      %v5380 = vpop.f32.mrb[0].mxu0
      %5381 = vmatprep.mubr.f32.mxu0 0.0
      %5382 = vmatmul.mubr.f32.gmra.mrb[0].mxu0 %v5122
      %v5383 = vpop.f32.mrb[0].mxu0
      %v5384 = vadd.f32 %v5113, %v5383
      %v5385 = vpop.f32.mrb[0].mxu0
      %5386 = vmatprep.mubr.f32.mxu0 0.0
      %5387 = vmatmul.mubr.f32.gmra.mrb[0].mxu0 %v5125
      %v5388 = vpop.f32.mrb[0].mxu0
      %v5389 = vadd.f32 %v5113, %v5388
      %v5390 = vpop.f32.mrb[0].mxu0
      %5391 = vmatprep.mubr.f32.mxu0 0.0
      %5392 = vmatmul.mubr.f32.gmra.mrb[0].mxu0 %v5128
      %v5393 = vpop.f32.mrb[0].mxu0
      %v5394 = vadd.f32 %v5113, %v5393
      %v5395 = vpop.f32.mrb[0].mxu0
      %5396 = vmatprep.mubr.f32.mxu0 0.0
      %5397 = vmatmul.mubr.f32.gmra.mrb[0].mxu0 %v5131
      %v5398 = vpop.f32.mrb[0].mxu0
      %v5399 = vadd.f32 %v5113, %v5398
      %v5400 = vpop.f32.mrb[0].mxu0
      %5401 = vmatprep.mubr.f32.mxu0 0.0
      %5402 = vmatmul.mubr.f32.gmra.mrb[0].mxu0 %v5134
      %v5403 = vpop.f32.mrb[0].mxu0
      %v5404 = vadd.f32 %v5113, %v5403
      %v5405 = vpop.f32.mrb[0].mxu0
      %5406 = vmatprep.mubr.f32.mxu0 0.0
      %5407 = vmatmul.mubr.f32.gmra.mrb[0].mxu0 %v5137
      %v5408 = vpop.f32.mrb[0].mxu0
      %v5409 = vadd.f32 %v5113, %v5408
      %v5410 = vpop.f32.mrb[0].mxu0
      %5411 = vmatprep.mubr.f32.mxu0 0.0
      %5412 = vmatmul.mubr.f32.gmra.mrb[0].mxu0 %v5140
      %v5413 = vpop.f32.mrb[0].mxu0
      %v5414 = vadd.f32 %v5113, %v5413
      %v5415 = vpop.f32.mrb[0].mxu0
      %5416 = vmatprep.mubr.f32.mxu0 0.0
      %5417 = vmatmul.mubr.f32.gmra.mrb[0].mxu0 %v5143
      %v5418 = vpop.f32.mrb[0].mxu0
      %v5419 = vadd.f32 %v5113, %v5418
      %v5420 = vpop.f32.mrb[0].mxu0
      %5421 = vmatprep.mubr.f32.mxu0 0.0
      %5422 = vmatmul.mubr.f32.gmra.mrb[0].mxu0 %v5146
      %v5423 = vpop.f32.mrb[0].mxu0
      %v5424 = vadd.f32 %v5113, %v5423
      %v5425 = vpop.f32.mrb[0].mxu0
      %5426 = vmatprep.mubr.f32.mxu0 0.0
      %5427 = vmatmul.mubr.f32.gmra.mrb[0].mxu0 %v5149
      %v5428 = vpop.f32.mrb[0].mxu0
      %v5429 = vadd.f32 %v5113, %v5428
      %v5430 = vpop.f32.mrb[0].mxu0
      %5431 = vmatprep.mubr.f32.mxu0 0.0
      %5432 = vmatmul.mubr.f32.gmra.mrb[0].mxu0 %v5152
      %v5433 = vpop.f32.mrb[0].mxu0
      %v5434 = vadd.f32 %v5113, %v5433
      %v5435 = vpop.f32.mrb[0].mxu0
      %5436 = vmatprep.mubr.f32.mxu0 0.0
      %5437 = vmatmul.mubr.f32.gmra.mrb[0].mxu0 %v5155
      %v5438 = vpop.f32.mrb[0].mxu0
      %v5439 = vadd.f32 %v5113, %v5438
      %v5440 = vpop.f32.mrb[0].mxu0
      %5441 = vmatprep.mubr.f32.mxu0 0.0
      %5442 = vmatmul.mubr.f32.gmra.mrb[0].mxu0 %v5158
      %v5443 = vpop.f32.mrb[0].mxu0
      %v5444 = vadd.f32 %v5113, %v5443
      %v5445 = vpop.f32.mrb[0].mxu0
      %5446 = vmatprep.mubr.f32.mxu0 0.0
      %5447 = vmatmul.mubr.f32.gmra.mrb[0].mxu0 %v5161
      %v5448 = vpop.f32.mrb[0].mxu0
      %v5449 = vadd.f32 %v5113, %v5448
      %v5450 = vpop.f32.mrb[0].mxu0
      %5451 = vmatprep.mubr.f32.mxu0 0.0
      %5452 = vmatmul.mubr.f32.gmra.mrb[0].mxu0 %v5164
      %v5453 = vpop.f32.mrb[0].mxu0
      %v5454 = vadd.f32 %v5113, %v5453
      %v5455 = vpop.f32.mrb[0].mxu0
      %5456 = vmatprep.mubr.f32.mxu0 0.0
      %5457 = vmatmul.mubr.f32.gmra.mrb[0].mxu0 %v5167
      %v5458 = vpop.f32.mrb[0].mxu0
      %v5459 = vadd.f32 %v5113, %v5458
      %v5460 = vpop.f32.mrb[0].mxu0
      %5461 = vmatprep.mubr.f32.mxu0 0.0
      %5462 = vmatmul.mubr.f32.gmra.mrb[0].mxu0 %v5170
      %v5463 = vpop.f32.mrb[0].mxu0
      %v5464 = vadd.f32 %v5113, %v5463
      %v5465 = vpop.f32.mrb[0].mxu0
      %5466 = vmatprep.mubr.f32.mxu0 0.0
      %5467 = vmatmul.mubr.f32.gmra.mrb[0].mxu0 %v5173
      %v5468 = vpop.f32.mrb[0].mxu0
      %v5469 = vadd.f32 %v5113, %v5468
      %v5470 = vpop.f32.mrb[0].mxu0
      %5471 = vmatprep.mubr.f32.mxu0 0.0
      %5472 = vmatmul.mubr.f32.gmra.mrb[0].mxu0 %v5176
      %v5473 = vpop.f32.mrb[0].mxu0
      %v5474 = vadd.f32 %v5113, %v5473
      %v5475 = vpop.f32.mrb[0].mxu0
      %5476 = vmatprep.mubr.f32.mxu0 0.0
      %5477 = vmatmul.mubr.f32.gmra.mrb[0].mxu0 %v5179
      %v5478 = vpop.f32.mrb[0].mxu0
      %v5479 = vadd.f32 %v5113, %v5478
      %v5480 = vpop.f32.mrb[0].mxu0
      %5481 = vmatprep.mubr.f32.mxu0 0.0
      %5482 = vmatmul.mubr.f32.gmra.mrb[0].mxu0 %v5182
      %v5483 = vpop.f32.mrb[0].mxu0
      %v5484 = vadd.f32 %v5113, %v5483
      %v5485 = vpop.f32.mrb[0].mxu0
      %5486 = vmatprep.mubr.f32.mxu0 0.0
      %5487 = vmatmul.mubr.f32.gmra.mrb[0].mxu0 %v5185
      %v5488 = vpop.f32.mrb[0].mxu0
      %v5489 = vadd.f32 %v5113, %v5488
      %v5490 = vpop.f32.mrb[0].mxu0
      %5491 = vmatprep.mubr.f32.mxu0 0.0
      %5492 = vmatmul.mubr.f32.gmra.mrb[0].mxu0 %v5188
      %v5493 = vpop.f32.mrb[0].mxu0
      %v5494 = vadd.f32 %v5113, %v5493
      %v5495 = vpop.f32.mrb[0].mxu0
      %5496 = vmatprep.mubr.f32.mxu0 0.0
      %5497 = vmatmul.mubr.f32.gmra.mrb[0].mxu0 %v5191
      %v5498 = vpop.f32.mrb[0].mxu0
      %v5499 = vadd.f32 %v5113, %v5498
      %v5500 = vpop.f32.mrb[0].mxu0
      %5501 = vmatprep.mubr.f32.mxu0 0.0
      %5502 = vmatmul.mubr.f32.gmra.mrb[0].mxu0 %v5194
      %v5503 = vpop.f32.mrb[0].mxu0
      %v5504 = vadd.f32 %v5113, %v5503
      %v5505 = vpop.f32.mrb[0].mxu0
      %5506 = vmatprep.mubr.f32.mxu0 0.0
      %5507 = vmatmul.mubr.f32.gmra.mrb[0].mxu0 %v5197
      %v5508 = vpop.f32.mrb[0].mxu0
      %v5509 = vadd.f32 %v5113, %v5508
      %v5510 = vpop.f32.mrb[0].mxu0
      %5511 = vmatprep.mubr.f32.mxu0 0.0
      %5512 = vmatmul.mubr.f32.gmra.mrb[0].mxu0 %v5200
      %v5513 = vpop.f32.mrb[0].mxu0
      %v5514 = vadd.f32 %v5113, %v5513
      %v5515 = vpop.f32.mrb[0].mxu0
      %5516 = vmatprep.mubr.f32.mxu0 0.0
      %5517 = vmatmul.mubr.f32.gmra.mrb[0].mxu0 %v5203
      %v5518 = vpop.f32.mrb[0].mxu0
      %v5519 = vadd.f32 %v5113, %v5518
      %v5520 = vpop.f32.mrb[0].mxu0
      %5521 = vmatprep.mubr.f32.mxu0 0.0
      %5522 = vmatmul.mubr.f32.gmra.mrb[0].mxu0 %v5206
      %v5523 = vpop.f32.mrb[0].mxu0
      %v5524 = vadd.f32 %v5113, %v5523
      %v5525 = vpop.f32.mrb[0].mxu0
      %5526 = vmatprep.mubr.f32.mxu0 0.0
      %5527 = vmatmul.mubr.f32.gmra.mrb[0].mxu0 %v5209
      %v5528 = vpop.f32.mrb[0].mxu0
      %v5529 = vadd.f32 %v5113, %v5528
      %v5530 = vpop.f32.mrb[0].mxu0
      %5531 = vmatprep.mubr.f32.mxu0 0.0
      %5532 = vmatmul.mubr.f32.gmra.mrb[0].mxu0 %v5212
      %v5533 = vpop.f32.mrb[0].mxu0
      %v5534 = vadd.f32 %v5113, %v5533
      %v5535 = vpop.f32.mrb[0].mxu0
      %5536 = vmatprep.mubr.f32.mxu0 0.0
      %5537 = vmatmul.mubr.f32.gmra.mrb[0].mxu0 %v5215
      %v5538 = vpop.f32.mrb[0].mxu0
      %v5539 = vadd.f32 %v5113, %v5538
      %v5540 = vpop.f32.mrb[0].mxu0
      %5541 = vmatprep.mubr.f32.mxu0 0.0
      %5542 = vmatmul.mubr.f32.gmra.mrb[0].mxu0 %v5218
      %v5543 = vpop.f32.mrb[0].mxu0
      %v5544 = vadd.f32 %v5113, %v5543
      %v5545 = vpop.f32.mrb[0].mxu0
      %5546 = vmatprep.mubr.f32.mxu0 0.0
      %5547 = vmatmul.mubr.f32.gmra.mrb[0].mxu0 %v5221
      %v5548 = vpop.f32.mrb[0].mxu0
      %v5549 = vadd.f32 %v5113, %v5548
      %v5550 = vpop.f32.mrb[0].mxu0
      %5551 = vmatprep.mubr.f32.mxu0 0.0
      %5552 = vmatmul.mubr.f32.gmra.mrb[0].mxu0 %v5224
      %v5553 = vpop.f32.mrb[0].mxu0
      %v5554 = vadd.f32 %v5113, %v5553
      %v5555 = vpop.f32.mrb[0].mxu0
      %5556 = vmatprep.mubr.f32.mxu0 0.0
      %5557 = vmatmul.mubr.f32.gmra.mrb[0].mxu0 %v5227
      %v5558 = vpop.f32.mrb[0].mxu0
      %v5559 = vadd.f32 %v5113, %v5558
      %v5560 = vpop.f32.mrb[0].mxu0
      %5561 = vmatprep.mubr.f32.mxu0 0.0
      %5562 = vmatmul.mubr.f32.gmra.mrb[0].mxu0 %v5230
      %v5563 = vpop.f32.mrb[0].mxu0
      %v5564 = vadd.f32 %v5113, %v5563
      %v5565 = vpop.f32.mrb[0].mxu0
      %5566 = vmatprep.mubr.f32.mxu0 0.0
      %5567 = vmatmul.mubr.f32.gmra.mrb[0].mxu0 %v5233
      %v5568 = vpop.f32.mrb[0].mxu0
      %v5569 = vadd.f32 %v5113, %v5568
      %v5570 = vpop.f32.mrb[0].mxu0
      %5571 = vmatprep.mubr.f32.mxu0 0.0
      %5572 = vmatmul.mubr.f32.gmra.mrb[0].mxu0 %v5236
      %v5573 = vpop.f32.mrb[0].mxu0
      %v5574 = vadd.f32 %v5113, %v5573
      %v5575 = vpop.f32.mrb[0].mxu0
      %5576 = vmatprep.mubr.f32.mxu0 0.0
      %5577 = vmatmul.mubr.f32.gmra.mrb[0].mxu0 %v5239
      %v5578 = vpop.f32.mrb[0].mxu0
      %v5579 = vadd.f32 %v5113, %v5578
      %v5580 = vpop.f32.mrb[0].mxu0
      %5581 = vmatprep.mubr.f32.mxu0 0.0
      %5582 = vmatmul.mubr.f32.gmra.mrb[0].mxu0 %v5242
      %v5583 = vpop.f32.mrb[0].mxu0
      %v5584 = vadd.f32 %v5113, %v5583
      %v5585 = vpop.f32.mrb[0].mxu0
      %5586 = vmatprep.mubr.f32.mxu0 0.0
      %5587 = vmatmul.mubr.f32.gmra.mrb[0].mxu0 %v5245
      %v5588 = vpop.f32.mrb[0].mxu0
      %v5589 = vadd.f32 %v5113, %v5588
      %v5590 = vpop.f32.mrb[0].mxu0
      %5591 = vmatprep.mubr.f32.mxu0 0.0
      %5592 = vmatmul.mubr.f32.gmra.mrb[0].mxu0 %v5248
      %v5593 = vpop.f32.mrb[0].mxu0
      %v5594 = vadd.f32 %v5113, %v5593
      %v5595 = vpop.f32.mrb[0].mxu0
      %5596 = vmatprep.mubr.f32.mxu0 0.0
      %5597 = vmatmul.mubr.f32.gmra.mrb[0].mxu0 %v5251
      %v5598 = vpop.f32.mrb[0].mxu0
      %v5599 = vadd.f32 %v5113, %v5598
      %v5600 = vpop.f32.mrb[0].mxu0
      %5601 = vmatprep.mubr.f32.mxu0 0.0
      %5602 = vmatmul.mubr.f32.gmra.mrb[0].mxu0 %v5254
      %v5603 = vpop.f32.mrb[0].mxu0
      %v5604 = vadd.f32 %v5113, %v5603
      %v5605 = vpop.f32.mrb[0].mxu0
      %5606 = vmatprep.mubr.f32.mxu0 0.0
      %5607 = vmatmul.mubr.f32.gmra.mrb[0].mxu0 %v5257
      %v5608 = vpop.f32.mrb[0].mxu0
      %v5609 = vadd.f32 %v5113, %v5608
      %v5610 = vpop.f32.mrb[0].mxu0
      %5611 = vmatprep.mubr.f32.mxu0 0.0
      %5612 = vmatmul.mubr.f32.gmra.mrb[0].mxu0 %v5260
      %v5613 = vpop.f32.mrb[0].mxu0
      %v5614 = vadd.f32 %v5113, %v5613
      %v5615 = vpop.f32.mrb[0].mxu0
      %5616 = vmatprep.mubr.f32.mxu0 0.0
      %5617 = vmatmul.mubr.f32.gmra.mrb[0].mxu0 %v5263
      %v5618 = vpop.f32.mrb[0].mxu0
      %v5619 = vadd.f32 %v5113, %v5618
      %v5620 = vpop.f32.mrb[0].mxu0
      %5621 = vmatprep.mubr.f32.mxu0 0.0
      %5622 = vmatmul.mubr.f32.gmra.mrb[0].mxu0 %v5266
      %v5623 = vpop.f32.mrb[0].mxu0
      %v5624 = vadd.f32 %v5113, %v5623
      %v5625 = vpop.f32.mrb[0].mxu0
      %5626 = vmatprep.mubr.f32.mxu0 0.0
      %5627 = vmatmul.mubr.f32.gmra.mrb[0].mxu0 %v5269
      %v5628 = vpop.f32.mrb[0].mxu0
      %v5629 = vadd.f32 %v5113, %v5628
      %v5630 = vpop.f32.mrb[0].mxu0
      %5631 = vmatprep.mubr.f32.mxu0 0.0
      %5632 = vmatmul.mubr.f32.gmra.mrb[0].mxu0 %v5272
      %v5633 = vpop.f32.mrb[0].mxu0
      %v5634 = vadd.f32 %v5113, %v5633
      %v5635 = vpop.f32.mrb[0].mxu0
      %5636 = vmatprep.mubr.f32.mxu0 0.0
      %5637 = vmatmul.mubr.f32.gmra.mrb[0].mxu0 %v5275
      %v5638 = vpop.f32.mrb[0].mxu0
      %v5639 = vadd.f32 %v5113, %v5638
      %v5640 = vpop.f32.mrb[0].mxu0
      %5641 = vmatprep.mubr.f32.mxu0 0.0
      %5642 = vmatmul.mubr.f32.gmra.mrb[0].mxu0 %v5278
      %v5643 = vpop.f32.mrb[0].mxu0
      %v5644 = vadd.f32 %v5113, %v5643
      %v5645 = vpop.f32.mrb[0].mxu0
      %5646 = vmatprep.mubr.f32.mxu0 0.0
      %5647 = vmatmul.mubr.f32.gmra.mrb[0].mxu0 %v5281
      %v5648 = vpop.f32.mrb[0].mxu0
      %v5649 = vadd.f32 %v5113, %v5648
      %v5650 = vpop.f32.mrb[0].mxu0
      %5651 = vmatprep.mubr.f32.mxu0 0.0
      %5652 = vmatmul.mubr.f32.gmra.mrb[0].mxu0 %v5284
      %v5653 = vpop.f32.mrb[0].mxu0
      %v5654 = vadd.f32 %v5113, %v5653
      %v5655 = vpop.f32.mrb[0].mxu0
      %5656 = vmatprep.mubr.f32.mxu0 0.0
      %5657 = vmatmul.mubr.f32.gmra.mrb[0].mxu0 %v5287
      %v5658 = vpop.f32.mrb[0].mxu0
      %v5659 = vadd.f32 %v5113, %v5658
      %v5660 = vpop.f32.mrb[0].mxu0
      %5661 = vmatprep.mubr.f32.mxu0 0.0
      %5662 = vmatmul.mubr.f32.gmra.mrb[0].mxu0 %v5290
      %v5663 = vpop.f32.mrb[0].mxu0
      %v5664 = vadd.f32 %v5113, %v5663
      %v5665 = vpop.f32.mrb[0].mxu0
      %5666 = vmatprep.mubr.f32.mxu0 0.0
      %5667 = vmatmul.mubr.f32.gmra.mrb[0].mxu0 %v5293
      %v5668 = vpop.f32.mrb[0].mxu0
      %v5669 = vadd.f32 %v5113, %v5668
      %v5670 = vpop.f32.mrb[0].mxu0
      %5671 = vmatprep.mubr.f32.mxu0 0.0
      %5672 = vmatmul.mubr.f32.gmra.mrb[0].mxu0 %v5296
      %v5673 = vpop.f32.mrb[0].mxu0
      %v5674 = vadd.f32 %v5113, %v5673
      %v5675 = vpop.f32.mrb[0].mxu0
      %5676 = vmatprep.mubr.f32.mxu0 0.0
      %5677 = vmatmul.mubr.f32.gmra.mrb[0].mxu0 %v5299
      %v5678 = vpop.f32.mrb[0].mxu0
      %v5679 = vadd.f32 %v5113, %v5678
      %v5680 = vpop.f32.mrb[0].mxu0
      %5681 = vmatprep.mubr.f32.mxu0 0.0
      %5682 = vmatmul.mubr.f32.gmra.mrb[0].mxu0 %v5302
      %v5683 = vpop.f32.mrb[0].mxu0
      %v5684 = vadd.f32 %v5113, %v5683
      %v5685 = vpop.f32.mrb[0].mxu0
      %5686 = vmatprep.mubr.f32.mxu0 0.0
      %5687 = vmatmul.mubr.f32.gmra.mrb[0].mxu0 %v5305
      %v5688 = vpop.f32.mrb[0].mxu0
      %v5689 = vadd.f32 %v5113, %v5688
      %v5690 = vpop.f32.mrb[0].mxu0
      %5691 = vdwg.mxu0
      %5692 = vst.msk [vmem:[%s454] sm:$0xff] %vm656, %v5374
      %5693 = vst.msk [vmem:[%s454 + $0x8] sm:$0xff] %vm656, %v5379
      %5694 = vst.msk [vmem:[%s454 + $0x10] sm:$0xff] %vm656, %v5384
      %5695 = vst.msk [vmem:[%s454 + $0x18] sm:$0xff] %vm656, %v5389
      %5696 = vst.msk [vmem:[%s454 + $0x20] sm:$0xff] %vm656, %v5394
      %5697 = vst.msk [vmem:[%s454 + $0x28] sm:$0xff] %vm656, %v5399
      %5698 = vst.msk [vmem:[%s454 + $0x30] sm:$0xff] %vm656, %v5404
      %5699 = vst.msk [vmem:[%s454 + $0x38] sm:$0xff] %vm656, %v5409
      %5700 = vst.msk [vmem:[%s454 + $0x40] sm:$0xff] %vm656, %v5414
      %5701 = vst.msk [vmem:[%s454 + $0x48] sm:$0xff] %vm656, %v5419
      %5702 = vst.msk [vmem:[%s454 + $0x50] sm:$0xff] %vm656, %v5424
      %5703 = vst.msk [vmem:[%s454 + $0x58] sm:$0xff] %vm656, %v5429
      %5704 = vst.msk [vmem:[%s454 + $0x60] sm:$0xff] %vm656, %v5434
      %5705 = vst.msk [vmem:[%s454 + $0x68] sm:$0xff] %vm656, %v5439
      %5706 = vst.msk [vmem:[%s454 + $0x70] sm:$0xff] %vm656, %v5444
      %5707 = vst.msk [vmem:[%s454 + $0x78] sm:$0xff] %vm656, %v5449
      %5708 = vst.msk [vmem:[%s454 + $0x80] sm:$0xff] %vm656, %v5454
      %5709 = vst.msk [vmem:[%s454 + $0x88] sm:$0xff] %vm656, %v5459
      %5710 = vst.msk [vmem:[%s454 + $0x90] sm:$0xff] %vm656, %v5464
      %5711 = vst.msk [vmem:[%s454 + $0x98] sm:$0xff] %vm656, %v5469
      %5712 = vst.msk [vmem:[%s454 + $0xa0] sm:$0xff] %vm656, %v5474
      %5713 = vst.msk [vmem:[%s454 + $0xa8] sm:$0xff] %vm656, %v5479
      %5714 = vst.msk [vmem:[%s454 + $0xb0] sm:$0xff] %vm656, %v5484
      %5715 = vst.msk [vmem:[%s454 + $0xb8] sm:$0xff] %vm656, %v5489
      %5716 = vst.msk [vmem:[%s454 + $0xc0] sm:$0xff] %vm656, %v5494
      %5717 = vst.msk [vmem:[%s454 + $0xc8] sm:$0xff] %vm656, %v5499
      %5718 = vst.msk [vmem:[%s454 + $0xd0] sm:$0xff] %vm656, %v5504
      %5719 = vst.msk [vmem:[%s454 + $0xd8] sm:$0xff] %vm656, %v5509
      %5720 = vst.msk [vmem:[%s454 + $0xe0] sm:$0xff] %vm656, %v5514
      %5721 = vst.msk [vmem:[%s454 + $0xe8] sm:$0xff] %vm656, %v5519
      %5722 = vst.msk [vmem:[%s454 + $0xf0] sm:$0xff] %vm656, %v5524
      %5723 = vst.msk [vmem:[%s454 + $0xf8] sm:$0xff] %vm656, %v5529
      %5724 = vst.msk [vmem:[%s454 + $0x100] sm:$0xff] %vm656, %v5534
      %5725 = vst.msk [vmem:[%s454 + $0x108] sm:$0xff] %vm656, %v5539
      %5726 = vst.msk [vmem:[%s454 + $0x110] sm:$0xff] %vm656, %v5544
      %5727 = vst.msk [vmem:[%s454 + $0x118] sm:$0xff] %vm656, %v5549
      %5728 = vst.msk [vmem:[%s454 + $0x120] sm:$0xff] %vm656, %v5554
      %5729 = vst.msk [vmem:[%s454 + $0x128] sm:$0xff] %vm656, %v5559
      %5730 = vst.msk [vmem:[%s454 + $0x130] sm:$0xff] %vm656, %v5564
      %5731 = vst.msk [vmem:[%s454 + $0x138] sm:$0xff] %vm656, %v5569
      %5732 = vst.msk [vmem:[%s454 + $0x140] sm:$0xff] %vm656, %v5574
      %5733 = vst.msk [vmem:[%s454 + $0x148] sm:$0xff] %vm656, %v5579
      %5734 = vst.msk [vmem:[%s454 + $0x150] sm:$0xff] %vm656, %v5584
      %5735 = vst.msk [vmem:[%s454 + $0x158] sm:$0xff] %vm656, %v5589
      %5736 = vst.msk [vmem:[%s454 + $0x160] sm:$0xff] %vm656, %v5594
      %5737 = vst.msk [vmem:[%s454 + $0x168] sm:$0xff] %vm656, %v5599
      %5738 = vst.msk [vmem:[%s454 + $0x170] sm:$0xff] %vm656, %v5604
      %5739 = vst.msk [vmem:[%s454 + $0x178] sm:$0xff] %vm656, %v5609
      %5740 = vst.msk [vmem:[%s454 + $0x180] sm:$0xff] %vm656, %v5614
      %5741 = vst.msk [vmem:[%s454 + $0x188] sm:$0xff] %vm656, %v5619
      %5742 = vst.msk [vmem:[%s454 + $0x190] sm:$0xff] %vm656, %v5624
      %5743 = vst.msk [vmem:[%s454 + $0x198] sm:$0xff] %vm656, %v5629
      %5744 = vst.msk [vmem:[%s454 + $0x1a0] sm:$0xff] %vm656, %v5634
      %5745 = vst.msk [vmem:[%s454 + $0x1a8] sm:$0xff] %vm656, %v5639
      %5746 = vst.msk [vmem:[%s454 + $0x1b0] sm:$0xff] %vm656, %v5644
      %5747 = vst.msk [vmem:[%s454 + $0x1b8] sm:$0xff] %vm656, %v5649
      %5748 = vst.msk [vmem:[%s454 + $0x1c0] sm:$0xff] %vm656, %v5654
      %5749 = vst.msk [vmem:[%s454 + $0x1c8] sm:$0xff] %vm656, %v5659
      %5750 = vst.msk [vmem:[%s454 + $0x1d0] sm:$0xff] %vm656, %v5664
      %5751 = vst.msk [vmem:[%s454 + $0x1d8] sm:$0xff] %vm656, %v5669
      %5752 = vst.msk [vmem:[%s454 + $0x1e0] sm:$0xff] %vm656, %v5674
      %5753 = vst.msk [vmem:[%s454 + $0x1e8] sm:$0xff] %vm656, %v5679
      %5754 = vst.msk [vmem:[%s454 + $0x1f0] sm:$0xff] %vm656, %v5684
      %5755 = vst.msk [vmem:[%s454 + $0x1f8] sm:$0xff] %vm656, %v5689
      %s5756 = smul.u32 64, %s22
      %p5757 = scmp.lt.s32.totalorder %s5756, 127
      %s5758 = scalar_select %p5757, %s5756, 127
      %s5759 = smul.addr %s5758, 8
      %s5760 = scalar_lea.vmem %s11, %s5759
      // Predicated region
      $region65: #{edge_model_pallas.1} parent=63 // pred_check
        %p5761 = pneg %p291
      $region66: #{edge_model_pallas.1} parent=63 // pred_check_branch
        %5763 = sbr.rel (%p5761) target = $region68
      $region67: #{edge_model_pallas.1} parent=63 // pred_region
        %s5764 = smul.u32 64, %s22
      $region68: #{edge_model_pallas.1} parent=63 // pred_fallthru
        _
    $region64: #{edge_model_pallas.1} parent=5 // pred_fallthru
      _
    %p5765 = scmp.le.s32.totalorder 2, %s17
    // Predicated region
    $region69: #{edge_model_pallas.1} parent=5 // pred_check
      %p5766 = pneg %p5765
    $region70: #{edge_model_pallas.1} parent=5 // pred_check_branch
      %5768 = sbr.rel (%p5766) target = $region72
    $region71: #{edge_model_pallas.1} parent=5 // pred_region
      %s5769 = ssub.s32 %s17, 2
      // Predicated region
      $region73: #{edge_model_pallas.1} parent=71 // pred_check
        %p5770 = pneg %p297
      $region74: #{edge_model_pallas.1} parent=71 // pred_check_branch
        %5772 = sbr.rel (%p5770) target = $region76
      $region75: #{edge_model_pallas.1} parent=71 // pred_region
        %s5773 = smul.u32 64, %s23
        %p5774 = scmp.lt.s32.totalorder %s5773, 127
        %s5775 = scalar_select %p5774, %s5773, 127
        %s5776 = smul.addr %s5775, 8
        %s5777 = scalar_lea.vmem %s11, %s5776
      $region76: #{edge_model_pallas.1} parent=71 // pred_fallthru
        _
    $region72: #{edge_model_pallas.1} parent=5 // pred_fallthru
      _
  $region6: #{edge_model_pallas.1} parent=0 // loop_footer
    %s21 = sadd.s32 1, %s17
  $region7: #{edge_model_pallas.1} parent=0 // loop_footer_branch
    %16 = sbr.rel target = $region3
  $region8: #{edge_model_pallas.1} parent=0 // loop_exit
    _

</llo_original>
